<compile_context>
chip_gen: v6e
topology: v6e:2x2x1
jax: 0.10.0
libtpu: 0.0.40
codegen_flags: <defaults>
</compile_context>

<pallas_src>
import jax
import jax.numpy as jnp
from jax.experimental import pallas as pl
from jax.experimental.pallas import tpu as pltpu

BN_EPS = 1e-5
_VMEM_LIMIT = 32 * 1024 * 1024


def _make_conv_kernel(H, W, Cin, Cout, fuse_bn_relu):
    """3x3 SAME conv over one image, in slab space, as 9 accumulated matmuls.

    Input slab block : (H, W*Cin)  (channels innermost on lanes).
    Weight block     : (9, W*Cin, W*Cout) block-diagonal slices (host-built).
    Outputs          : (H, W*Cout) slab + per-image (1, 2, W*Cout) sum/sumsq
                       row partials (per-channel reduce done in the wrapper).
    If fuse_bn_relu, a per-lane affine (scale, shift) + ReLU is applied to the
    input slab BEFORE zero padding (i.e. BN+ReLU of the previous stage).
    """

    def kernel(*refs):
        if fuse_bn_relu:
            x_ref, w_ref, scale_ref, shift_ref, y_ref, stats_ref = refs
        else:
            x_ref, w_ref, y_ref, stats_ref = refs

        x = x_ref[...]                                           # (H, W*Cin)
        if fuse_bn_relu:
            x = jnp.maximum(x * scale_ref[...] + shift_ref[...], 0.0)

        # Zero-pad spatially (1 px each side) in VMEM via concatenation:
        # W padding = Cin zero lanes each side, H padding = zero rows.
        zlane = jnp.zeros((H, Cin), jnp.float32)
        xp = jnp.concatenate([zlane, x, zlane], axis=1)          # (H, (W+2)*Cin)
        zrow = jnp.zeros((1, (W + 2) * Cin), jnp.float32)
        xp = jnp.concatenate([zrow, xp, zrow], axis=0)           # (H+2, (W+2)*Cin)

        # 9 shifted taps, each contracted against its block-diagonal weight.
        acc = jnp.zeros((H, W * Cout), jnp.float32)
        t = 0
        for dy in range(3):
            for dx in range(3):
                tap = xp[dy:dy + H, dx * Cin:(dx + W) * Cin]     # (H, W*Cin)
                acc = acc + jnp.dot(tap, w_ref[t],
                                    preferred_element_type=jnp.float32)
                t += 1

        # Per-image BN partial statistics (row sums; channel reduce on host).
        s = jnp.sum(acc, axis=0, keepdims=True)                  # (1, W*Cout)
        ss = jnp.sum(acc * acc, axis=0, keepdims=True)           # (1, W*Cout)
        stats_ref[...] = jnp.concatenate([s, ss], axis=0)[None]  # (1, 2, W*Cout)

        y_ref[...] = acc

    return kernel


def _block_diag_weights(w_hwio, W):
    """(3,3,Cin,Cout) conv weights -> (9, W*Cin, W*Cout) block-diag slices."""
    Cin, Cout = w_hwio.shape[2], w_hwio.shape[3]
    w_flat = w_hwio.astype(jnp.float32).reshape(9, Cin, Cout)
    eye = jnp.eye(W, dtype=jnp.float32)
    wb = jnp.einsum('tio,wv->twivo', w_flat, eye)          # (9, W, Cin, W, Cout)
    return wb.reshape(9, W * Cin, W * Cout)


def _conv_pass(x_slab, w_blk, B, H, W, Cin, Cout,
               scale_lane=None, shift_lane=None):
    """Runs one conv stage over grid=(B,). Returns (y_slab, stats)."""
    fuse = scale_lane is not None
    kernel = _make_conv_kernel(H, W, Cin, Cout, fuse)

    in_specs = [
        pl.BlockSpec((H, W * Cin), lambda b: (b, 0)),               # image slab
        pl.BlockSpec((9, W * Cin, W * Cout), lambda b: (0, 0, 0)),  # weights
    ]
    args = [x_slab, w_blk]
    if fuse:
        in_specs += [pl.BlockSpec((1, W * Cin), lambda b: (0, 0)),
                     pl.BlockSpec((1, W * Cin), lambda b: (0, 0))]
        args += [scale_lane, shift_lane]

    y, stats = pl.pallas_call(
        kernel,
        out_shape=(jax.ShapeDtypeStruct((B * H, W * Cout), jnp.float32),
                   jax.ShapeDtypeStruct((B, 2, W * Cout), jnp.float32)),
        grid=(B,),
        in_specs=in_specs,
        out_specs=(pl.BlockSpec((H, W * Cout), lambda b: (b, 0)),
                   pl.BlockSpec((1, 2, W * Cout), lambda b: (b, 0, 0))),
        compiler_params=pltpu.CompilerParams(
            dimension_semantics=("parallel",),
            vmem_limit_bytes=_VMEM_LIMIT),
    )(*args)
    return y, stats


def _bn_add_relu_kernel(y_ref, res_ref, scale_ref, shift_ref, out_ref):
    out_ref[...] = jnp.maximum(
        y_ref[...] * scale_ref[...] + shift_ref[...] + res_ref[...], 0.0)


def _bn_add_relu_pass(y_slab, res_slab, scale_lane, shift_lane, B, H, W, C):
    return pl.pallas_call(
        _bn_add_relu_kernel,
        out_shape=jax.ShapeDtypeStruct((B * H, W * C), jnp.float32),
        grid=(B,),
        in_specs=[pl.BlockSpec((H, W * C), lambda b: (b, 0)),
                  pl.BlockSpec((H, W * C), lambda b: (b, 0)),
                  pl.BlockSpec((1, W * C), lambda b: (0, 0)),
                  pl.BlockSpec((1, W * C), lambda b: (0, 0))],
        out_specs=pl.BlockSpec((H, W * C), lambda b: (b, 0)),
        compiler_params=pltpu.CompilerParams(
            dimension_semantics=("parallel",),
            vmem_limit_bytes=_VMEM_LIMIT),
    )(y_slab, res_slab, scale_lane, shift_lane)


def _bn_affine(stats, gamma, beta, count, W, Cout):
    """(B, 2, W*Cout) per-image row partials -> per-channel (scale, shift)."""
    st = stats.reshape(-1, 2, W, Cout)
    s = jnp.sum(st[:, 0], axis=(0, 1))                 # (Cout,)
    ss = jnp.sum(st[:, 1], axis=(0, 1))                # (Cout,)
    mean = s / count
    var = jnp.maximum(ss / count - mean * mean, 0.0)   # clamp: no rsqrt(<0)
    scale = gamma.astype(jnp.float32) * jax.lax.rsqrt(var + BN_EPS)
    shift = beta.astype(jnp.float32) - mean * scale
    return scale, shift


@jax.jit
def basic_block_forward(x_nchw, w1, g1, b1, w2, g2, b2):
    """BasicBlock.forward (stride=1, downsample=None). Input/output NCHW f32."""
    B, C, H, W = x_nchw.shape
    Cout = w1.shape[-1]
    count = B * H * W

    x_nhwc = jnp.transpose(x_nchw, (0, 2, 3, 1)).astype(jnp.float32)
    x_slab = x_nhwc.reshape(B * H, W * C)              # lane-dense layout

    w1b = _block_diag_weights(w1, W)                   # (9, W*C,    W*Cout)
    w2b = _block_diag_weights(w2, W)                   # (9, W*Cout, W*Cout)

    # Pass 1: conv1 + BN1 partial stats (no residual, no zero-tensor DMA).
    y1, st1 = _conv_pass(x_slab, w1b, B, H, W, C, Cout)
    sc1, sh1 = _bn_affine(st1, g1, b1, count, W, Cout)
    sc1_l = jnp.tile(sc1, W).reshape(1, W * Cout)
    sh1_l = jnp.tile(sh1, W).reshape(1, W * Cout)

    # Pass 2: fused BN1+ReLU -> conv2 + BN2 partial stats.
    y2, st2 = _conv_pass(y1, w2b, B, H, W, Cout, Cout,
                         scale_lane=sc1_l, shift_lane=sh1_l)
    sc2, sh2 = _bn_affine(st2, g2, b2, count, W, Cout)
    sc2_l = jnp.tile(sc2, W).reshape(1, W * Cout)
    sh2_l = jnp.tile(sh2, W).reshape(1, W * Cout)

    # Pass 3: BN2 + residual add + ReLU.
    out_slab = _bn_add_relu_pass(y2, x_slab, sc2_l, sh2_l, B, H, W, Cout)

    out = out_slab.reshape(B, H, W, Cout)
    return jnp.transpose(out, (0, 3, 1, 2))            # NHWC -> NCHW


# ----------------------- pure-JAX reference (for checking) ------------------
def _ref_conv_bn_relu(x, res, w_hwio, gamma, beta):
    y = jax.lax.conv_general_dilated(
        x, w_hwio, window_strides=(1, 1), padding="SAME",
        dimension_numbers=("NHWC", "HWIO", "NHWC"))
    mean = jnp.mean(y, axis=(0, 1, 2), keepdims=True)
    var = jnp.mean(jnp.square(y - mean), axis=(0, 1, 2), keepdims=True)
    y = (y - mean) * jax.lax.rsqrt(var + BN_EPS) * gamma + beta
    return jnp.maximum(y + res, 0.0)


def basic_block_reference(x_nchw, w1, g1, b1, w2, g2, b2):
    x = jnp.transpose(x_nchw, (0, 2, 3, 1)).astype(jnp.float32)
    h = _ref_conv_bn_relu(x, jnp.zeros_like(x), w1, g1, b1)
    out = _ref_conv_bn_relu(h, x, w2, g2, b2)
    return jnp.transpose(out, (0, 3, 1, 2))


if __name__ == "__main__":
    B, C, H, W = 2, 4, 16, 16  # in_channel == out_channel == 4, stride=1

    key = jax.random.PRNGKey(0)
    kx, k1, k2 = jax.random.split(key, 3)
    x = jax.random.normal(kx, (B, C, H, W), dtype=jnp.float32)

    # HWIO conv weights; BN gamma=1, beta=0 (nn.BatchNorm2d default init).
    w1 = 0.1 * jax.random.normal(k1, (3, 3, C, C), dtype=jnp.float32)
    w2 = 0.1 * jax.random.normal(k2, (3, 3, C, C), dtype=jnp.float32)
    g1 = jnp.ones((C,), jnp.float32)
    b1 = jnp.zeros((C,), jnp.float32)
    g2 = jnp.ones((C,), jnp.float32)
    b2 = jnp.zeros((C,), jnp.float32)

    out = basic_block_forward(x, w1, g1, b1, w2, g2, b2)
    out = jax.block_until_ready(out)

    ref = basic_block_reference(x, w1, g1, b1, w2, g2, b2)
    assert out.shape == (B, C, H, W)
    assert jnp.allclose(out, ref, atol=5e-4, rtol=5e-4), "mismatch vs reference"

    print("KERNEL_OK")
</pallas_src>

<mosaic_0001>
module attributes {stable_mosaic.version = 11 : i64} {
  func.func @kernel(%arg0: i32, %arg1: memref<16x64xf32, #tpu.memory_space<vmem>>, %arg2: memref<9x64x64xf32, #tpu.memory_space<vmem>>, %arg3: memref<16x64xf32, #tpu.memory_space<vmem>>, %arg4: memref<1x2x64xf32, #tpu.memory_space<vmem>>) attributes {dimension_semantics = [#tpu.dimension_semantics<parallel>], iteration_bounds = array<i64: 2>, scalar_prefetch = 0 : i64, scratch_operands = 0 : i64, tpu.core_type = #tpu.core_type<tc>, window_params = [{transform_indices = @transform_0, window_bounds = array<i64: 16, 64>}, {pipeline_mode = #tpu.pipeline_mode<synchronous>, transform_indices = @transform_1, window_bounds = array<i64: 9, 64, 64>}, {transform_indices = @transform_2, window_bounds = array<i64: 16, 64>}, {transform_indices = @transform_3, window_bounds = array<i64: 1, 2, 64>}]} {
    %c0 = arith.constant 0 : index
    %c0_0 = arith.constant 0 : index
    %0 = vector.load %arg1[%c0, %c0_0] : memref<16x64xf32, #tpu.memory_space<vmem>>, vector<16x64xf32>
    %cst = arith.constant 0.000000e+00 : f32
    %1 = vector.broadcast %cst : f32 to vector<16x4xf32>
    %2 = tpu.concatenate %1, %0, %1 in 1 : vector<16x4xf32>, vector<16x64xf32>, vector<16x4xf32> -> vector<16x72xf32>
    %cst_1 = arith.constant 0.000000e+00 : f32
    %3 = vector.broadcast %cst_1 : f32 to vector<1x72xf32>
    %4 = tpu.concatenate %3, %2, %3 in 0 : vector<1x72xf32>, vector<16x72xf32>, vector<1x72xf32> -> vector<18x72xf32>
    %cst_2 = arith.constant 0.000000e+00 : f32
    %5 = vector.broadcast %cst_2 : f32 to vector<16x64xf32>
    %6 = vector.extract_strided_slice %4 {offsets = [0, 0], sizes = [16, 64], strides = [1, 1]} : vector<18x72xf32> to vector<16x64xf32>
    %c0_3 = arith.constant 0 : index
    %c0_4 = arith.constant 0 : index
    %c0_5 = arith.constant 0 : index
    %7 = vector.load %arg2[%c0_3, %c0_4, %c0_5] : memref<9x64x64xf32, #tpu.memory_space<vmem>>, vector<1x64x64xf32>
    %8 = vector.shape_cast %7 : vector<1x64x64xf32> to vector<64x64xf32>
    %cst_6 = arith.constant dense<0.000000e+00> : vector<16x64xf32>
    %9 = tpu.matmul %6, %8, %cst_6 {dimension_numbers = #tpu.dot_dimension_numbers<[1], [0], [0], [1], [0, 0, 1, 1], [], []>} : vector<16x64xf32>, vector<64x64xf32>, vector<16x64xf32> -> vector<16x64xf32>
    %10 = arith.addf %5, %9 : vector<16x64xf32>
    %11 = vector.extract_strided_slice %4 {offsets = [0, 4], sizes = [16, 64], strides = [1, 1]} : vector<18x72xf32> to vector<16x64xf32>
    %c1 = arith.constant 1 : index
    %c0_7 = arith.constant 0 : index
    %c0_8 = arith.constant 0 : index
    %12 = vector.load %arg2[%c1, %c0_7, %c0_8] : memref<9x64x64xf32, #tpu.memory_space<vmem>>, vector<1x64x64xf32>
    %13 = vector.shape_cast %12 : vector<1x64x64xf32> to vector<64x64xf32>
    %cst_9 = arith.constant dense<0.000000e+00> : vector<16x64xf32>
    %14 = tpu.matmul %11, %13, %cst_9 {dimension_numbers = #tpu.dot_dimension_numbers<[1], [0], [0], [1], [0, 0, 1, 1], [], []>} : vector<16x64xf32>, vector<64x64xf32>, vector<16x64xf32> -> vector<16x64xf32>
    %15 = arith.addf %10, %14 : vector<16x64xf32>
    %16 = vector.extract_strided_slice %4 {offsets = [0, 8], sizes = [16, 64], strides = [1, 1]} : vector<18x72xf32> to vector<16x64xf32>
    %c2 = arith.constant 2 : index
    %c0_10 = arith.constant 0 : index
    %c0_11 = arith.constant 0 : index
    %17 = vector.load %arg2[%c2, %c0_10, %c0_11] : memref<9x64x64xf32, #tpu.memory_space<vmem>>, vector<1x64x64xf32>
    %18 = vector.shape_cast %17 : vector<1x64x64xf32> to vector<64x64xf32>
    %cst_12 = arith.constant dense<0.000000e+00> : vector<16x64xf32>
    %19 = tpu.matmul %16, %18, %cst_12 {dimension_numbers = #tpu.dot_dimension_numbers<[1], [0], [0], [1], [0, 0, 1, 1], [], []>} : vector<16x64xf32>, vector<64x64xf32>, vector<16x64xf32> -> vector<16x64xf32>
    %20 = arith.addf %15, %19 : vector<16x64xf32>
    %21 = vector.extract_strided_slice %4 {offsets = [1, 0], sizes = [16, 64], strides = [1, 1]} : vector<18x72xf32> to vector<16x64xf32>
    %c3 = arith.constant 3 : index
    %c0_13 = arith.constant 0 : index
    %c0_14 = arith.constant 0 : index
    %22 = vector.load %arg2[%c3, %c0_13, %c0_14] : memref<9x64x64xf32, #tpu.memory_space<vmem>>, vector<1x64x64xf32>
    %23 = vector.shape_cast %22 : vector<1x64x64xf32> to vector<64x64xf32>
    %cst_15 = arith.constant dense<0.000000e+00> : vector<16x64xf32>
    %24 = tpu.matmul %21, %23, %cst_15 {dimension_numbers = #tpu.dot_dimension_numbers<[1], [0], [0], [1], [0, 0, 1, 1], [], []>} : vector<16x64xf32>, vector<64x64xf32>, vector<16x64xf32> -> vector<16x64xf32>
    %25 = arith.addf %20, %24 : vector<16x64xf32>
    %26 = vector.extract_strided_slice %4 {offsets = [1, 4], sizes = [16, 64], strides = [1, 1]} : vector<18x72xf32> to vector<16x64xf32>
    %c4 = arith.constant 4 : index
    %c0_16 = arith.constant 0 : index
    %c0_17 = arith.constant 0 : index
    %27 = vector.load %arg2[%c4, %c0_16, %c0_17] : memref<9x64x64xf32, #tpu.memory_space<vmem>>, vector<1x64x64xf32>
    %28 = vector.shape_cast %27 : vector<1x64x64xf32> to vector<64x64xf32>
    %cst_18 = arith.constant dense<0.000000e+00> : vector<16x64xf32>
    %29 = tpu.matmul %26, %28, %cst_18 {dimension_numbers = #tpu.dot_dimension_numbers<[1], [0], [0], [1], [0, 0, 1, 1], [], []>} : vector<16x64xf32>, vector<64x64xf32>, vector<16x64xf32> -> vector<16x64xf32>
    %30 = arith.addf %25, %29 : vector<16x64xf32>
    %31 = vector.extract_strided_slice %4 {offsets = [1, 8], sizes = [16, 64], strides = [1, 1]} : vector<18x72xf32> to vector<16x64xf32>
    %c5 = arith.constant 5 : index
    %c0_19 = arith.constant 0 : index
    %c0_20 = arith.constant 0 : index
    %32 = vector.load %arg2[%c5, %c0_19, %c0_20] : memref<9x64x64xf32, #tpu.memory_space<vmem>>, vector<1x64x64xf32>
    %33 = vector.shape_cast %32 : vector<1x64x64xf32> to vector<64x64xf32>
    %cst_21 = arith.constant dense<0.000000e+00> : vector<16x64xf32>
    %34 = tpu.matmul %31, %33, %cst_21 {dimension_numbers = #tpu.dot_dimension_numbers<[1], [0], [0], [1], [0, 0, 1, 1], [], []>} : vector<16x64xf32>, vector<64x64xf32>, vector<16x64xf32> -> vector<16x64xf32>
    %35 = arith.addf %30, %34 : vector<16x64xf32>
    %36 = vector.extract_strided_slice %4 {offsets = [2, 0], sizes = [16, 64], strides = [1, 1]} : vector<18x72xf32> to vector<16x64xf32>
    %c6 = arith.constant 6 : index
    %c0_22 = arith.constant 0 : index
    %c0_23 = arith.constant 0 : index
    %37 = vector.load %arg2[%c6, %c0_22, %c0_23] : memref<9x64x64xf32, #tpu.memory_space<vmem>>, vector<1x64x64xf32>
    %38 = vector.shape_cast %37 : vector<1x64x64xf32> to vector<64x64xf32>
    %cst_24 = arith.constant dense<0.000000e+00> : vector<16x64xf32>
    %39 = tpu.matmul %36, %38, %cst_24 {dimension_numbers = #tpu.dot_dimension_numbers<[1], [0], [0], [1], [0, 0, 1, 1], [], []>} : vector<16x64xf32>, vector<64x64xf32>, vector<16x64xf32> -> vector<16x64xf32>
    %40 = arith.addf %35, %39 : vector<16x64xf32>
    %41 = vector.extract_strided_slice %4 {offsets = [2, 4], sizes = [16, 64], strides = [1, 1]} : vector<18x72xf32> to vector<16x64xf32>
    %c7 = arith.constant 7 : index
    %c0_25 = arith.constant 0 : index
    %c0_26 = arith.constant 0 : index
    %42 = vector.load %arg2[%c7, %c0_25, %c0_26] : memref<9x64x64xf32, #tpu.memory_space<vmem>>, vector<1x64x64xf32>
    %43 = vector.shape_cast %42 : vector<1x64x64xf32> to vector<64x64xf32>
    %cst_27 = arith.constant dense<0.000000e+00> : vector<16x64xf32>
    %44 = tpu.matmul %41, %43, %cst_27 {dimension_numbers = #tpu.dot_dimension_numbers<[1], [0], [0], [1], [0, 0, 1, 1], [], []>} : vector<16x64xf32>, vector<64x64xf32>, vector<16x64xf32> -> vector<16x64xf32>
    %45 = arith.addf %40, %44 : vector<16x64xf32>
    %46 = vector.extract_strided_slice %4 {offsets = [2, 8], sizes = [16, 64], strides = [1, 1]} : vector<18x72xf32> to vector<16x64xf32>
    %c8 = arith.constant 8 : index
    %c0_28 = arith.constant 0 : index
    %c0_29 = arith.constant 0 : index
    %47 = vector.load %arg2[%c8, %c0_28, %c0_29] : memref<9x64x64xf32, #tpu.memory_space<vmem>>, vector<1x64x64xf32>
    %48 = vector.shape_cast %47 : vector<1x64x64xf32> to vector<64x64xf32>
    %cst_30 = arith.constant dense<0.000000e+00> : vector<16x64xf32>
    %49 = tpu.matmul %46, %48, %cst_30 {dimension_numbers = #tpu.dot_dimension_numbers<[1], [0], [0], [1], [0, 0, 1, 1], [], []>} : vector<16x64xf32>, vector<64x64xf32>, vector<16x64xf32> -> vector<16x64xf32>
    %50 = arith.addf %45, %49 : vector<16x64xf32>
    %cst_31 = arith.constant dense<0.000000e+00> : vector<64xf32>
    %51 = vector.multi_reduction <add>, %50, %cst_31 [0] : vector<16x64xf32> to vector<64xf32>
    %52 = vector.shape_cast %51 : vector<64xf32> to vector<1x64xf32>
    %53 = arith.mulf %50, %50 : vector<16x64xf32>
    %cst_32 = arith.constant dense<0.000000e+00> : vector<64xf32>
    %54 = vector.multi_reduction <add>, %53, %cst_32 [0] : vector<16x64xf32> to vector<64xf32>
    %55 = vector.shape_cast %54 : vector<64xf32> to vector<1x64xf32>
    %56 = tpu.concatenate %52, %55 in 0 : vector<1x64xf32>, vector<1x64xf32> -> vector<2x64xf32>
    %57 = vector.shape_cast %56 : vector<2x64xf32> to vector<1x2x64xf32>
    %c0_33 = arith.constant 0 : index
    %c0_34 = arith.constant 0 : index
    %c0_35 = arith.constant 0 : index
    %58 = vector.load %arg4[%c0_33, %c0_34, %c0_35] : memref<1x2x64xf32, #tpu.memory_space<vmem>>, vector<1x2x64xf32>
    tpu.vector_store %arg4[%c0_33, %c0_34, %c0_35], %57 {strides = array<i32>} : memref<1x2x64xf32, #tpu.memory_space<vmem>>, vector<1x2x64xf32>,
    %c0_36 = arith.constant 0 : index
    %c0_37 = arith.constant 0 : index
    %59 = vector.load %arg3[%c0_36, %c0_37] : memref<16x64xf32, #tpu.memory_space<vmem>>, vector<16x64xf32>
    tpu.vector_store %arg3[%c0_36, %c0_37], %50 {strides = array<i32>} : memref<16x64xf32, #tpu.memory_space<vmem>>, vector<16x64xf32>,
    return
  }
  func.func @transform_0(%arg0: i32) -> (i32, i32) {
    %c0_i32 = arith.constant 0 : i32
    %c0_i32_0 = arith.constant 0 : i32
    return %arg0, %c0_i32 : i32, i32
  }
  func.func @transform_1(%arg0: i32) -> (i32, i32, i32) {
    %c0_i32 = arith.constant 0 : i32
    %c0_i32_0 = arith.constant 0 : i32
    %c0_i32_1 = arith.constant 0 : i32
    %c0_i32_2 = arith.constant 0 : i32
    return %c0_i32, %c0_i32_0, %c0_i32_1 : i32, i32, i32
  }
  func.func @transform_2(%arg0: i32) -> (i32, i32) {
    %c0_i32 = arith.constant 0 : i32
    %c0_i32_0 = arith.constant 0 : i32
    return %arg0, %c0_i32 : i32, i32
  }
  func.func @transform_3(%arg0: i32) -> (i32, i32, i32) {
    %c0_i32 = arith.constant 0 : i32
    %c0_i32_0 = arith.constant 0 : i32
    %c0_i32_1 = arith.constant 0 : i32
    return %arg0, %c0_i32, %c0_i32_0 : i32, i32, i32
  }
}

module attributes {stable_mosaic.version = 11 : i64} {
  func.func @kernel(%arg0: i32, %arg1: memref<16x64xf32, #tpu.memory_space<vmem>>, %arg2: memref<9x64x64xf32, #tpu.memory_space<vmem>>, %arg3: memref<1x64xf32, #tpu.memory_space<vmem>>, %arg4: memref<1x64xf32, #tpu.memory_space<vmem>>, %arg5: memref<16x64xf32, #tpu.memory_space<vmem>>, %arg6: memref<1x2x64xf32, #tpu.memory_space<vmem>>) attributes {dimension_semantics = [#tpu.dimension_semantics<parallel>], iteration_bounds = array<i64: 2>, scalar_prefetch = 0 : i64, scratch_operands = 0 : i64, tpu.core_type = #tpu.core_type<tc>, window_params = [{transform_indices = @transform_0, window_bounds = array<i64: 16, 64>}, {pipeline_mode = #tpu.pipeline_mode<synchronous>, transform_indices = @transform_1, window_bounds = array<i64: 9, 64, 64>}, {pipeline_mode = #tpu.pipeline_mode<synchronous>, transform_indices = @transform_2, window_bounds = array<i64: 1, 64>}, {pipeline_mode = #tpu.pipeline_mode<synchronous>, transform_indices = @transform_3, window_bounds = array<i64: 1, 64>}, {transform_indices = @transform_4, window_bounds = array<i64: 16, 64>}, {transform_indices = @transform_5, window_bounds = array<i64: 1, 2, 64>}]} {
    %c0 = arith.constant 0 : index
    %c0_0 = arith.constant 0 : index
    %0 = vector.load %arg1[%c0, %c0_0] : memref<16x64xf32, #tpu.memory_space<vmem>>, vector<16x64xf32>
    %c0_1 = arith.constant 0 : index
    %c0_2 = arith.constant 0 : index
    %1 = vector.load %arg3[%c0_1, %c0_2] : memref<1x64xf32, #tpu.memory_space<vmem>>, vector<1x64xf32>
    %2 = vector.broadcast %1 : vector<1x64xf32> to vector<16x64xf32>
    %3 = arith.mulf %0, %2 : vector<16x64xf32>
    %c0_3 = arith.constant 0 : index
    %c0_4 = arith.constant 0 : index
    %4 = vector.load %arg4[%c0_3, %c0_4] : memref<1x64xf32, #tpu.memory_space<vmem>>, vector<1x64xf32>
    %5 = vector.broadcast %4 : vector<1x64xf32> to vector<16x64xf32>
    %6 = arith.addf %3, %5 : vector<16x64xf32>
    %cst = arith.constant 0.000000e+00 : f32
    %7 = vector.broadcast %cst : f32 to vector<16x64xf32>
    %8 = arith.maximumf %6, %7 : vector<16x64xf32>
    %cst_5 = arith.constant 0.000000e+00 : f32
    %9 = vector.broadcast %cst_5 : f32 to vector<16x4xf32>
    %10 = tpu.concatenate %9, %8, %9 in 1 : vector<16x4xf32>, vector<16x64xf32>, vector<16x4xf32> -> vector<16x72xf32>
    %cst_6 = arith.constant 0.000000e+00 : f32
    %11 = vector.broadcast %cst_6 : f32 to vector<1x72xf32>
    %12 = tpu.concatenate %11, %10, %11 in 0 : vector<1x72xf32>, vector<16x72xf32>, vector<1x72xf32> -> vector<18x72xf32>
    %cst_7 = arith.constant 0.000000e+00 : f32
    %13 = vector.broadcast %cst_7 : f32 to vector<16x64xf32>
    %14 = vector.extract_strided_slice %12 {offsets = [0, 0], sizes = [16, 64], strides = [1, 1]} : vector<18x72xf32> to vector<16x64xf32>
    %c0_8 = arith.constant 0 : index
    %c0_9 = arith.constant 0 : index
    %c0_10 = arith.constant 0 : index
    %15 = vector.load %arg2[%c0_8, %c0_9, %c0_10] : memref<9x64x64xf32, #tpu.memory_space<vmem>>, vector<1x64x64xf32>
    %16 = vector.shape_cast %15 : vector<1x64x64xf32> to vector<64x64xf32>
    %cst_11 = arith.constant dense<0.000000e+00> : vector<16x64xf32>
    %17 = tpu.matmul %14, %16, %cst_11 {dimension_numbers = #tpu.dot_dimension_numbers<[1], [0], [0], [1], [0, 0, 1, 1], [], []>} : vector<16x64xf32>, vector<64x64xf32>, vector<16x64xf32> -> vector<16x64xf32>
    %18 = arith.addf %13, %17 : vector<16x64xf32>
    %19 = vector.extract_strided_slice %12 {offsets = [0, 4], sizes = [16, 64], strides = [1, 1]} : vector<18x72xf32> to vector<16x64xf32>
    %c1 = arith.constant 1 : index
    %c0_12 = arith.constant 0 : index
    %c0_13 = arith.constant 0 : index
    %20 = vector.load %arg2[%c1, %c0_12, %c0_13] : memref<9x64x64xf32, #tpu.memory_space<vmem>>, vector<1x64x64xf32>
    %21 = vector.shape_cast %20 : vector<1x64x64xf32> to vector<64x64xf32>
    %cst_14 = arith.constant dense<0.000000e+00> : vector<16x64xf32>
    %22 = tpu.matmul %19, %21, %cst_14 {dimension_numbers = #tpu.dot_dimension_numbers<[1], [0], [0], [1], [0, 0, 1, 1], [], []>} : vector<16x64xf32>, vector<64x64xf32>, vector<16x64xf32> -> vector<16x64xf32>
    %23 = arith.addf %18, %22 : vector<16x64xf32>
    %24 = vector.extract_strided_slice %12 {offsets = [0, 8], sizes = [16, 64], strides = [1, 1]} : vector<18x72xf32> to vector<16x64xf32>
    %c2 = arith.constant 2 : index
    %c0_15 = arith.constant 0 : index
    %c0_16 = arith.constant 0 : index
    %25 = vector.load %arg2[%c2, %c0_15, %c0_16] : memref<9x64x64xf32, #tpu.memory_space<vmem>>, vector<1x64x64xf32>
    %26 = vector.shape_cast %25 : vector<1x64x64xf32> to vector<64x64xf32>
    %cst_17 = arith.constant dense<0.000000e+00> : vector<16x64xf32>
    %27 = tpu.matmul %24, %26, %cst_17 {dimension_numbers = #tpu.dot_dimension_numbers<[1], [0], [0], [1], [0, 0, 1, 1], [], []>} : vector<16x64xf32>, vector<64x64xf32>, vector<16x64xf32> -> vector<16x64xf32>
    %28 = arith.addf %23, %27 : vector<16x64xf32>
    %29 = vector.extract_strided_slice %12 {offsets = [1, 0], sizes = [16, 64], strides = [1, 1]} : vector<18x72xf32> to vector<16x64xf32>
    %c3 = arith.constant 3 : index
    %c0_18 = arith.constant 0 : index
    %c0_19 = arith.constant 0 : index
    %30 = vector.load %arg2[%c3, %c0_18, %c0_19] : memref<9x64x64xf32, #tpu.memory_space<vmem>>, vector<1x64x64xf32>
    %31 = vector.shape_cast %30 : vector<1x64x64xf32> to vector<64x64xf32>
    %cst_20 = arith.constant dense<0.000000e+00> : vector<16x64xf32>
    %32 = tpu.matmul %29, %31, %cst_20 {dimension_numbers = #tpu.dot_dimension_numbers<[1], [0], [0], [1], [0, 0, 1, 1], [], []>} : vector<16x64xf32>, vector<64x64xf32>, vector<16x64xf32> -> vector<16x64xf32>
    %33 = arith.addf %28, %32 : vector<16x64xf32>
    %34 = vector.extract_strided_slice %12 {offsets = [1, 4], sizes = [16, 64], strides = [1, 1]} : vector<18x72xf32> to vector<16x64xf32>
    %c4 = arith.constant 4 : index
    %c0_21 = arith.constant 0 : index
    %c0_22 = arith.constant 0 : index
    %35 = vector.load %arg2[%c4, %c0_21, %c0_22] : memref<9x64x64xf32, #tpu.memory_space<vmem>>, vector<1x64x64xf32>
    %36 = vector.shape_cast %35 : vector<1x64x64xf32> to vector<64x64xf32>
    %cst_23 = arith.constant dense<0.000000e+00> : vector<16x64xf32>
    %37 = tpu.matmul %34, %36, %cst_23 {dimension_numbers = #tpu.dot_dimension_numbers<[1], [0], [0], [1], [0, 0, 1, 1], [], []>} : vector<16x64xf32>, vector<64x64xf32>, vector<16x64xf32> -> vector<16x64xf32>
    %38 = arith.addf %33, %37 : vector<16x64xf32>
    %39 = vector.extract_strided_slice %12 {offsets = [1, 8], sizes = [16, 64], strides = [1, 1]} : vector<18x72xf32> to vector<16x64xf32>
    %c5 = arith.constant 5 : index
    %c0_24 = arith.constant 0 : index
    %c0_25 = arith.constant 0 : index
    %40 = vector.load %arg2[%c5, %c0_24, %c0_25] : memref<9x64x64xf32, #tpu.memory_space<vmem>>, vector<1x64x64xf32>
    %41 = vector.shape_cast %40 : vector<1x64x64xf32> to vector<64x64xf32>
    %cst_26 = arith.constant dense<0.000000e+00> : vector<16x64xf32>
    %42 = tpu.matmul %39, %41, %cst_26 {dimension_numbers = #tpu.dot_dimension_numbers<[1], [0], [0], [1], [0, 0, 1, 1], [], []>} : vector<16x64xf32>, vector<64x64xf32>, vector<16x64xf32> -> vector<16x64xf32>
    %43 = arith.addf %38, %42 : vector<16x64xf32>
    %44 = vector.extract_strided_slice %12 {offsets = [2, 0], sizes = [16, 64], strides = [1, 1]} : vector<18x72xf32> to vector<16x64xf32>
    %c6 = arith.constant 6 : index
    %c0_27 = arith.constant 0 : index
    %c0_28 = arith.constant 0 : index
    %45 = vector.load %arg2[%c6, %c0_27, %c0_28] : memref<9x64x64xf32, #tpu.memory_space<vmem>>, vector<1x64x64xf32>
    %46 = vector.shape_cast %45 : vector<1x64x64xf32> to vector<64x64xf32>
    %cst_29 = arith.constant dense<0.000000e+00> : vector<16x64xf32>
    %47 = tpu.matmul %44, %46, %cst_29 {dimension_numbers = #tpu.dot_dimension_numbers<[1], [0], [0], [1], [0, 0, 1, 1], [], []>} : vector<16x64xf32>, vector<64x64xf32>, vector<16x64xf32> -> vector<16x64xf32>
    %48 = arith.addf %43, %47 : vector<16x64xf32>
    %49 = vector.extract_strided_slice %12 {offsets = [2, 4], sizes = [16, 64], strides = [1, 1]} : vector<18x72xf32> to vector<16x64xf32>
    %c7 = arith.constant 7 : index
    %c0_30 = arith.constant 0 : index
    %c0_31 = arith.constant 0 : index
    %50 = vector.load %arg2[%c7, %c0_30, %c0_31] : memref<9x64x64xf32, #tpu.memory_space<vmem>>, vector<1x64x64xf32>
    %51 = vector.shape_cast %50 : vector<1x64x64xf32> to vector<64x64xf32>
    %cst_32 = arith.constant dense<0.000000e+00> : vector<16x64xf32>
    %52 = tpu.matmul %49, %51, %cst_32 {dimension_numbers = #tpu.dot_dimension_numbers<[1], [0], [0], [1], [0, 0, 1, 1], [], []>} : vector<16x64xf32>, vector<64x64xf32>, vector<16x64xf32> -> vector<16x64xf32>
    %53 = arith.addf %48, %52 : vector<16x64xf32>
    %54 = vector.extract_strided_slice %12 {offsets = [2, 8], sizes = [16, 64], strides = [1, 1]} : vector<18x72xf32> to vector<16x64xf32>
    %c8 = arith.constant 8 : index
    %c0_33 = arith.constant 0 : index
    %c0_34 = arith.constant 0 : index
    %55 = vector.load %arg2[%c8, %c0_33, %c0_34] : memref<9x64x64xf32, #tpu.memory_space<vmem>>, vector<1x64x64xf32>
    %56 = vector.shape_cast %55 : vector<1x64x64xf32> to vector<64x64xf32>
    %cst_35 = arith.constant dense<0.000000e+00> : vector<16x64xf32>
    %57 = tpu.matmul %54, %56, %cst_35 {dimension_numbers = #tpu.dot_dimension_numbers<[1], [0], [0], [1], [0, 0, 1, 1], [], []>} : vector<16x64xf32>, vector<64x64xf32>, vector<16x64xf32> -> vector<16x64xf32>
    %58 = arith.addf %53, %57 : vector<16x64xf32>
    %cst_36 = arith.constant dense<0.000000e+00> : vector<64xf32>
    %59 = vector.multi_reduction <add>, %58, %cst_36 [0] : vector<16x64xf32> to vector<64xf32>
    %60 = vector.shape_cast %59 : vector<64xf32> to vector<1x64xf32>
    %61 = arith.mulf %58, %58 : vector<16x64xf32>
    %cst_37 = arith.constant dense<0.000000e+00> : vector<64xf32>
    %62 = vector.multi_reduction <add>, %61, %cst_37 [0] : vector<16x64xf32> to vector<64xf32>
    %63 = vector.shape_cast %62 : vector<64xf32> to vector<1x64xf32>
    %64 = tpu.concatenate %60, %63 in 0 : vector<1x64xf32>, vector<1x64xf32> -> vector<2x64xf32>
    %65 = vector.shape_cast %64 : vector<2x64xf32> to vector<1x2x64xf32>
    %c0_38 = arith.constant 0 : index
    %c0_39 = arith.constant 0 : index
    %c0_40 = arith.constant 0 : index
    %66 = vector.load %arg6[%c0_38, %c0_39, %c0_40] : memref<1x2x64xf32, #tpu.memory_space<vmem>>, vector<1x2x64xf32>
    tpu.vector_store %arg6[%c0_38, %c0_39, %c0_40], %65 {strides = array<i32>} : memref<1x2x64xf32, #tpu.memory_space<vmem>>, vector<1x2x64xf32>,
    %c0_41 = arith.constant 0 : index
    %c0_42 = arith.constant 0 : index
    %67 = vector.load %arg5[%c0_41, %c0_42] : memref<16x64xf32, #tpu.memory_space<vmem>>, vector<16x64xf32>
    tpu.vector_store %arg5[%c0_41, %c0_42], %58 {strides = array<i32>} : memref<16x64xf32, #tpu.memory_space<vmem>>, vector<16x64xf32>,
    return
  }
  func.func @transform_0(%arg0: i32) -> (i32, i32) {
    %c0_i32 = arith.constant 0 : i32
    %c0_i32_0 = arith.constant 0 : i32
    return %arg0, %c0_i32 : i32, i32
  }
  func.func @transform_1(%arg0: i32) -> (i32, i32, i32) {
    %c0_i32 = arith.constant 0 : i32
    %c0_i32_0 = arith.constant 0 : i32
    %c0_i32_1 = arith.constant 0 : i32
    %c0_i32_2 = arith.constant 0 : i32
    return %c0_i32, %c0_i32_0, %c0_i32_1 : i32, i32, i32
  }
  func.func @transform_2(%arg0: i32) -> (i32, i32) {
    %c0_i32 = arith.constant 0 : i32
    %c0_i32_0 = arith.constant 0 : i32
    %c0_i32_1 = arith.constant 0 : i32
    return %c0_i32, %c0_i32_0 : i32, i32
  }
  func.func @transform_3(%arg0: i32) -> (i32, i32) {
    %c0_i32 = arith.constant 0 : i32
    %c0_i32_0 = arith.constant 0 : i32
    %c0_i32_1 = arith.constant 0 : i32
    return %c0_i32, %c0_i32_0 : i32, i32
  }
  func.func @transform_4(%arg0: i32) -> (i32, i32) {
    %c0_i32 = arith.constant 0 : i32
    %c0_i32_0 = arith.constant 0 : i32
    return %arg0, %c0_i32 : i32, i32
  }
  func.func @transform_5(%arg0: i32) -> (i32, i32, i32) {
    %c0_i32 = arith.constant 0 : i32
    %c0_i32_0 = arith.constant 0 : i32
    %c0_i32_1 = arith.constant 0 : i32
    return %arg0, %c0_i32, %c0_i32_0 : i32, i32, i32
  }
}

module attributes {stable_mosaic.version = 11 : i64} {
  func.func @_bn_add_relu_kernel(%arg0: i32, %arg1: memref<16x64xf32, #tpu.memory_space<vmem>>, %arg2: memref<16x64xf32, #tpu.memory_space<vmem>>, %arg3: memref<1x64xf32, #tpu.memory_space<vmem>>, %arg4: memref<1x64xf32, #tpu.memory_space<vmem>>, %arg5: memref<16x64xf32, #tpu.memory_space<vmem>>) attributes {dimension_semantics = [#tpu.dimension_semantics<parallel>], iteration_bounds = array<i64: 2>, scalar_prefetch = 0 : i64, scratch_operands = 0 : i64, tpu.core_type = #tpu.core_type<tc>, window_params = [{transform_indices = @transform_0, window_bounds = array<i64: 16, 64>}, {transform_indices = @transform_1, window_bounds = array<i64: 16, 64>}, {pipeline_mode = #tpu.pipeline_mode<synchronous>, transform_indices = @transform_2, window_bounds = array<i64: 1, 64>}, {pipeline_mode = #tpu.pipeline_mode<synchronous>, transform_indices = @transform_3, window_bounds = array<i64: 1, 64>}, {transform_indices = @transform_4, window_bounds = array<i64: 16, 64>}]} {
    %c0 = arith.constant 0 : index
    %c0_0 = arith.constant 0 : index
    %0 = vector.load %arg1[%c0, %c0_0] : memref<16x64xf32, #tpu.memory_space<vmem>>, vector<16x64xf32>
    %c0_1 = arith.constant 0 : index
    %c0_2 = arith.constant 0 : index
    %1 = vector.load %arg3[%c0_1, %c0_2] : memref<1x64xf32, #tpu.memory_space<vmem>>, vector<1x64xf32>
    %2 = vector.broadcast %1 : vector<1x64xf32> to vector<16x64xf32>
    %3 = arith.mulf %0, %2 : vector<16x64xf32>
    %c0_3 = arith.constant 0 : index
    %c0_4 = arith.constant 0 : index
    %4 = vector.load %arg4[%c0_3, %c0_4] : memref<1x64xf32, #tpu.memory_space<vmem>>, vector<1x64xf32>
    %5 = vector.broadcast %4 : vector<1x64xf32> to vector<16x64xf32>
    %6 = arith.addf %3, %5 : vector<16x64xf32>
    %c0_5 = arith.constant 0 : index
    %c0_6 = arith.constant 0 : index
    %7 = vector.load %arg2[%c0_5, %c0_6] : memref<16x64xf32, #tpu.memory_space<vmem>>, vector<16x64xf32>
    %8 = arith.addf %6, %7 : vector<16x64xf32>
    %cst = arith.constant 0.000000e+00 : f32
    %9 = vector.broadcast %cst : f32 to vector<16x64xf32>
    %10 = arith.maximumf %8, %9 : vector<16x64xf32>
    %c0_7 = arith.constant 0 : index
    %c0_8 = arith.constant 0 : index
    %11 = vector.load %arg5[%c0_7, %c0_8] : memref<16x64xf32, #tpu.memory_space<vmem>>, vector<16x64xf32>
    tpu.vector_store %arg5[%c0_7, %c0_8], %10 {strides = array<i32>} : memref<16x64xf32, #tpu.memory_space<vmem>>, vector<16x64xf32>,
    return
  }
  func.func @transform_0(%arg0: i32) -> (i32, i32) {
    %c0_i32 = arith.constant 0 : i32
    %c0_i32_0 = arith.constant 0 : i32
    return %arg0, %c0_i32 : i32, i32
  }
  func.func @transform_1(%arg0: i32) -> (i32, i32) {
    %c0_i32 = arith.constant 0 : i32
    %c0_i32_0 = arith.constant 0 : i32
    return %arg0, %c0_i32 : i32, i32
  }
  func.func @transform_2(%arg0: i32) -> (i32, i32) {
    %c0_i32 = arith.constant 0 : i32
    %c0_i32_0 = arith.constant 0 : i32
    %c0_i32_1 = arith.constant 0 : i32
    return %c0_i32, %c0_i32_0 : i32, i32
  }
  func.func @transform_3(%arg0: i32) -> (i32, i32) {
    %c0_i32 = arith.constant 0 : i32
    %c0_i32_0 = arith.constant 0 : i32
    %c0_i32_1 = arith.constant 0 : i32
    return %c0_i32, %c0_i32_0 : i32, i32
  }
  func.func @transform_4(%arg0: i32) -> (i32, i32) {
    %c0_i32 = arith.constant 0 : i32
    %c0_i32_0 = arith.constant 0 : i32
    return %arg0, %c0_i32 : i32, i32
  }
}

</mosaic_0001>

<llo_original>
// kernel: tile.23
$region0: #{tile.23}
  #allocation0 [shape = 's32[1]{0}', space=sflag, size = 0x4, scoped, tag = 'scoped memory for tile.23']
  %s0 = inlined_call_operand.vmem [shape: f32[4], index: 0, kind: input, shape index: {}]
  %s1 = inlined_call_operand.vmem [shape: f32[16,4], index: 1, kind: output, shape index: {}]
  // Predicated region
  $region2: #{tile.23} parent=0 // pred_check
    _
  $region3: #{tile.23} parent=0 // pred_check_branch
    %3 = sbr.rel (0) target = $region5
  $region4: #{tile.23} parent=0 // pred_region
    _
  $region5: #{tile.23} parent=0 // pred_fallthru
    _
  %v4 = vld [vmem:[%s0] ss:$0 sm:$0xff]
  %5 = vst [vmem:[%s1] sm:$0xff] %v4
  %s6 = scalar_lea.vmem %s1, 8
  %7 = vst [vmem:[%s6] sm:$0xff] %v4

// kernel: tile.24
$region0: #{tile.24}
  %s0 = inlined_call_operand.vmem [shape: f32[16,4], index: 0, kind: input, shape index: {}]
  %s1 = inlined_call_operand.vmem [shape: f32[1,64], index: 1, kind: output, shape index: {}]
  $region1: #{tile.24} parent=0
    #allocation0 [shape = 'u8[4096]{0}', space=vmem, size = 0x1000, scoped, tag = 'scoped mem for output reshape']
    %v2 = vld [vmem:[%s0] sm:$0x1]
    %vm3 = vcmask 31744
    %4 = vst.msk [vmem:[#allocation0] sm:$0x1] %vm3, %v2
    %s5 = scalar_lea.vmem %s0, 15
    %v6 = vld [vmem:[%s5] sm:$0x1]
    %7 = vrot.lane.b32.xlu0 %v6, 60
    %v8 = vpop.permute.xlu0 %7
    %vm9 = vcmask 523744
    %10 = vst.msk [vmem:[#allocation0] sm:$0x1] %vm9, %v8
    %s11 = scalar_lea.vmem %s0, 14
    %v12 = vld [vmem:[%s11] sm:$0x1]
    %13 = vrot.lane.b32.xlu0 %v12, 56
    %v14 = vpop.permute.xlu0 %13
    %vm15 = vcmask 490944
    %16 = vst.msk [vmem:[#allocation0] sm:$0x1] %vm15, %v14
    %s17 = scalar_lea.vmem %s0, 13
    %v18 = vld [vmem:[%s17] sm:$0x1]
    %19 = vrot.lane.b32.xlu0 %v18, 52
    %v20 = vpop.permute.xlu0 %19
    %vm21 = vcmask 458144
    %22 = vst.msk [vmem:[#allocation0] sm:$0x1] %vm21, %v20
    %s23 = scalar_lea.vmem %s0, 12
    %v24 = vld [vmem:[%s23] sm:$0x1]
    %25 = vrot.lane.b32.xlu0 %v24, 48
    %v26 = vpop.permute.xlu0 %25
    %vm27 = vcmask 425344
    %28 = vst.msk [vmem:[#allocation0] sm:$0x1] %vm27, %v26
    %s29 = scalar_lea.vmem %s0, 11
    %v30 = vld [vmem:[%s29] sm:$0x1]
    %31 = vrot.lane.b32.xlu0 %v30, 44
    %v32 = vpop.permute.xlu0 %31
    %vm33 = vcmask 392544
    %34 = vst.msk [vmem:[#allocation0] sm:$0x1] %vm33, %v32
    %s35 = scalar_lea.vmem %s0, 10
    %v36 = vld [vmem:[%s35] sm:$0x1]
    %37 = vrot.lane.b32.xlu0 %v36, 40
    %v38 = vpop.permute.xlu0 %37
    %vm39 = vcmask 359744
    %40 = vst.msk [vmem:[#allocation0] sm:$0x1] %vm39, %v38
    %s41 = scalar_lea.vmem %s0, 9
    %v42 = vld [vmem:[%s41] sm:$0x1]
    %43 = vrot.lane.b32.xlu0 %v42, 36
    %v44 = vpop.permute.xlu0 %43
    %vm45 = vcmask 326944
    %46 = vst.msk [vmem:[#allocation0] sm:$0x1] %vm45, %v44
    %s47 = scalar_lea.vmem %s0, 8
    %v48 = vld [vmem:[%s47] sm:$0x1]
    %49 = vrot.lane.b32.xlu0 %v48, 32
    %v50 = vpop.permute.xlu0 %49
    %vm51 = vcmask 294144
    %52 = vst.msk [vmem:[#allocation0] sm:$0x1] %vm51, %v50
    %s53 = scalar_lea.vmem %s0, 7
    %v54 = vld [vmem:[%s53] sm:$0x1]
    %55 = vrot.lane.b32.xlu0 %v54, 28
    %v56 = vpop.permute.xlu0 %55
    %vm57 = vcmask 261344
    %58 = vst.msk [vmem:[#allocation0] sm:$0x1] %vm57, %v56
    %s59 = scalar_lea.vmem %s0, 6
    %v60 = vld [vmem:[%s59] sm:$0x1]
    %61 = vrot.lane.b32.xlu0 %v60, 24
    %v62 = vpop.permute.xlu0 %61
    %vm63 = vcmask 228544
    %64 = vst.msk [vmem:[#allocation0] sm:$0x1] %vm63, %v62
    %s65 = scalar_lea.vmem %s0, 5
    %v66 = vld [vmem:[%s65] sm:$0x1]
    %67 = vrot.lane.b32.xlu0 %v66, 20
    %v68 = vpop.permute.xlu0 %67
    %vm69 = vcmask 195744
    %70 = vst.msk [vmem:[#allocation0] sm:$0x1] %vm69, %v68
    %s71 = scalar_lea.vmem %s0, 4
    %v72 = vld [vmem:[%s71] sm:$0x1]
    %73 = vrot.lane.b32.xlu0 %v72, 16
    %v74 = vpop.permute.xlu0 %73
    %vm75 = vcmask 162944
    %76 = vst.msk [vmem:[#allocation0] sm:$0x1] %vm75, %v74
    %s77 = scalar_lea.vmem %s0, 3
    %v78 = vld [vmem:[%s77] sm:$0x1]
    %79 = vrot.lane.b32.xlu0 %v78, 12
    %v80 = vpop.permute.xlu0 %79
    %vm81 = vcmask 130144
    %82 = vst.msk [vmem:[#allocation0] sm:$0x1] %vm81, %v80
    %s83 = scalar_lea.vmem %s0, 2
    %v84 = vld [vmem:[%s83] sm:$0x1]
    %85 = vrot.lane.b32.xlu0 %v84, 8
    %v86 = vpop.permute.xlu0 %85
    %vm87 = vcmask 97344
    %88 = vst.msk [vmem:[#allocation0] sm:$0x1] %vm87, %v86
    %s89 = scalar_lea.vmem %s0, 1
    %v90 = vld [vmem:[%s89] sm:$0x1]
    %91 = vrot.lane.b32.xlu0 %v90, 4
    %v92 = vpop.permute.xlu0 %91
    %vm93 = vcmask 64544
    %94 = vst.msk [vmem:[#allocation0] sm:$0x1] %vm93, %v92
    %s96 = sshll.u32 1, 1
    %s97 = ssub.s32 %s96, 1
    %v99 = vld [vmem:[#allocation0] sm:%s97]
    %s100 = sshll.u32 1, 1
    %s101 = ssub.s32 %s100, 1
    %102 = vst [vmem:[%s1] sm:%s101] %v99

// kernel: basic_block_forward.3
$region0: #{basic_block_forward.3}
  #allocation0 [shape = 'u32[]', space=smem, size = 0x4, offset = 0x4, fixed_abs, tag = 'smem constant byte address 0x4 - core index']
  #allocation1 [shape = 'u32[144,128]{1,0:T(1,128)}', space=vmem, size = 0x12000, scoped, tag = 'internal scratch']
  %s0 = inlined_call_operand.vmem [shape: f32[32,64], index: 0, kind: input, shape index: {}]
  %s1 = inlined_call_operand.vmem [shape: f32[9,64,64], index: 1, kind: input, shape index: {}]
  %s2 = inlined_call_operand.vmem [shape: f32[32,64], index: 2, kind: output, shape index: {0}]
  %s3 = inlined_call_operand.vmem [shape: f32[2,2,64], index: 3, kind: output, shape index: {1}]
  %4 = xla_tuple %s2, %s3
  %s5 = sld [smem:[#allocation0]]
  $region49: #{basic_block_forward.3} parent=0
    _
  %s7 = ssub.s32 1, %s5
  %s8 = scalar_select 0, %s7, %s5
  loop: start=0, step=1, limit=4
  $region2: #{basic_block_forward.3} parent=0 // loop_pre_header
    _
  $region3: #{basic_block_forward.3} parent=0 // loop_header
    %s10 = sphi 0, %s14
    %p11 = scmp.ge.s32.totalorder %s10, 4
    %s20 = sphi 0, %s22
    %s23 = sphi 0, %s20
    %s24 = sphi 0, %s23
    %s40 = sphi 0, %s24
    %s44 = sphi 0, %s44
    %s46 = sphi 0, %s44
    %s47 = sphi 0, %s46
    %s61 = sphi 0, %s47
    %s67 = sphi 0, %s69
    %s70 = sphi 0, %s67
    %s71 = sphi 0, %s70
    %s87 = sphi 0, %s71
    %s93 = sphi 0, %s95
    %s96 = sphi 0, %s93
    %s97 = sphi 0, %s96
    %s113 = sphi 0, %s97
  $region4: #{basic_block_forward.3} parent=0 // loop_header_branch
    %13 = sbr.rel (%p11) target = $region8
  $region5: #{basic_block_forward.3} parent=0 // loop_body
    %s15 = ssub.s32 %s10, 1
    %s16 = ssub.s32 %s10, 2
    %s17 = sadd.s32 %s10, 1
    %s18 = ssub.s32 %s10, %s17
    %p19 = scmp.eq.s32.totalorder %s18, 0
    %s21 = sadd.s32 %s20, 1
    %s22 = scalar_select %p19, %s20, %s21
    %p25 = pneg %p19
    %p26 = scmp.eq.s32.totalorder %s10, 1
    %p27 = por %p25, %p26
    %p28 = scmp.ne.s32.totalorder %s20, %s23
    %p29 = scmp.eq.s32.totalorder %s10, 0
    %p30 = por %p28, %p29
    %p31 = scmp.ne.s32.totalorder %s20, %s23
    %p32 = scmp.eq.s32.totalorder %s15, 1
    %p33 = por %p31, %p32
    %p34 = scmp.ne.s32.totalorder %s23, %s24
    %p35 = scmp.eq.s32.totalorder %s15, 0
    %p36 = por %p34, %p35
    %p37 = scmp.ne.s32.totalorder %s23, %s24
    %p38 = scmp.eq.s32.totalorder %s16, 1
    %p39 = por %p37, %p38
    %p41 = scmp.ne.s32.totalorder %s24, %s40
    %p42 = scmp.eq.s32.totalorder %s16, 0
    %p43 = por %p41, %p42
    %s45 = sadd.s32 %s44, 1
    %p48 = scmp.eq.s32.totalorder %s10, 1
    %p49 = scmp.ne.s32.totalorder %s44, %s46
    %p50 = scmp.eq.s32.totalorder %s10, 0
    %p51 = por %p49, %p50
    %p52 = scmp.ne.s32.totalorder %s44, %s46
    %p53 = scmp.eq.s32.totalorder %s15, 1
    %p54 = por %p52, %p53
    %p55 = scmp.ne.s32.totalorder %s46, %s47
    %p56 = scmp.eq.s32.totalorder %s15, 0
    %p57 = por %p55, %p56
    %p58 = scmp.ne.s32.totalorder %s46, %s47
    %p59 = scmp.eq.s32.totalorder %s16, 1
    %p60 = por %p58, %p59
    %p62 = scmp.ne.s32.totalorder %s47, %s61
    %p63 = scmp.eq.s32.totalorder %s16, 0
    %p64 = por %p62, %p63
    %s65 = ssub.s32 %s10, %s17
    %p66 = scmp.eq.s32.totalorder %s65, 0
    %s68 = sadd.s32 %s67, 1
    %s69 = scalar_select %p66, %s67, %s68
    %p72 = pneg %p66
    %p73 = scmp.eq.s32.totalorder %s10, 1
    %p74 = por %p72, %p73
    %p75 = scmp.ne.s32.totalorder %s67, %s70
    %p76 = scmp.eq.s32.totalorder %s10, 0
    %p77 = por %p75, %p76
    %p78 = scmp.ne.s32.totalorder %s67, %s70
    %p79 = scmp.eq.s32.totalorder %s15, 1
    %p80 = por %p78, %p79
    %p81 = scmp.ne.s32.totalorder %s70, %s71
    %p82 = scmp.eq.s32.totalorder %s15, 0
    %p83 = por %p81, %p82
    %p84 = scmp.ne.s32.totalorder %s70, %s71
    %p85 = scmp.eq.s32.totalorder %s16, 1
    %p86 = por %p84, %p85
    %p88 = scmp.ne.s32.totalorder %s71, %s87
    %p89 = scmp.eq.s32.totalorder %s16, 0
    %p90 = por %p88, %p89
    %s91 = ssub.s32 %s10, %s17
    %p92 = scmp.eq.s32.totalorder %s91, 0
    %s94 = sadd.s32 %s93, 1
    %s95 = scalar_select %p92, %s93, %s94
    %p98 = pneg %p92
    %p99 = scmp.eq.s32.totalorder %s10, 1
    %p100 = por %p98, %p99
    %p101 = scmp.ne.s32.totalorder %s93, %s96
    %p102 = scmp.eq.s32.totalorder %s10, 0
    %p103 = por %p101, %p102
    %p104 = scmp.ne.s32.totalorder %s93, %s96
    %p105 = scmp.eq.s32.totalorder %s15, 1
    %p106 = por %p104, %p105
    %p107 = scmp.ne.s32.totalorder %s96, %s97
    %p108 = scmp.eq.s32.totalorder %s15, 0
    %p109 = por %p107, %p108
    %p110 = scmp.ne.s32.totalorder %s96, %s97
    %p111 = scmp.eq.s32.totalorder %s16, 1
    %p112 = por %p110, %p111
    %p114 = scmp.ne.s32.totalorder %s97, %s113
    %p115 = scmp.eq.s32.totalorder %s16, 0
    %p116 = por %p114, %p115
    %p117 = scmp.le.s32.totalorder 1, %s10
    %p118 = scmp.lt.s32.totalorder %s10, 3
    %p119 = pnand %p117, %p118
    %p120 = pneg %p119
    // Predicated region
    $region9: #{basic_block_forward.3} parent=5 // pred_check
      _
    $region10: #{basic_block_forward.3} parent=5 // pred_check_branch
      %122 = sbr.rel (%p119) target = $region12
    $region11: #{basic_block_forward.3} parent=5 // pred_region
      %s123 = ssub.s32 %s10, 1
      // Predicated region
      $region13: #{basic_block_forward.3} parent=11 // pred_check
        %p124 = pneg %p57
      $region14: #{basic_block_forward.3} parent=11 // pred_check_branch
        %126 = sbr.rel (%p124) target = $region16
      $region15: #{basic_block_forward.3} parent=11 // pred_region
        _
      $region16: #{basic_block_forward.3} parent=11 // pred_fallthru
        _
    $region12: #{basic_block_forward.3} parent=5 // pred_fallthru
      _
    %p127 = scmp.lt.s32.totalorder %s10, 2
    // Predicated region
    $region17: #{basic_block_forward.3} parent=5 // pred_check
      %p128 = pneg %p127
    $region18: #{basic_block_forward.3} parent=5 // pred_check_branch
      %130 = sbr.rel (%p128) target = $region20
    $region19: #{basic_block_forward.3} parent=5 // pred_region
      // Predicated region
      $region21: #{basic_block_forward.3} parent=19 // pred_check
        %p131 = pneg %p30
      $region22: #{basic_block_forward.3} parent=19 // pred_check_branch
        %133 = sbr.rel (%p131) target = $region24
      $region23: #{basic_block_forward.3} parent=19 // pred_region
        %s134 = smul.u32 2, %s10
        %p135 = scmp.lt.s32.totalorder %s134, 3
        %s136 = scalar_select %p135, %s134, 3
        %s137 = smul.addr %s136, 8
        %s138 = scalar_lea.vmem %s0, %s137
        %s139 = smul.u32 2, %s10
      $region24: #{basic_block_forward.3} parent=19 // pred_fallthru
        _
    $region20: #{basic_block_forward.3} parent=5 // pred_fallthru
      _
    %p140 = scmp.le.s32.totalorder 1, %s10
    %p141 = scmp.lt.s32.totalorder %s10, 3
    %p142 = pnand %p140, %p141
    %p143 = pneg %p142
    // Predicated region
    $region25: #{basic_block_forward.3} parent=5 // pred_check
      _
    $region26: #{basic_block_forward.3} parent=5 // pred_check_branch
      %145 = sbr.rel (%p142) target = $region28
    $region27: #{basic_block_forward.3} parent=5 // pred_region
      %s146 = ssub.s32 %s10, 1
      %s147 = smul.u32 2, %s15
      %p148 = scmp.lt.s32.totalorder %s147, 3
      %s149 = scalar_select %p148, %s147, 3
      %s150 = smul.addr %s149, 8
      %s151 = scalar_lea.vmem %s0, %s150
      %p152 = pneg %p36
      %p153 = pneg %p33
      %p154 = pneg %p57
      %p155 = pneg %p54
      %p156 = pneg %p83
      %p157 = pneg %p80
      %s158 = smul.u32 2, %s15
      %p159 = scmp.lt.s32.totalorder %s158, 3
      %s160 = scalar_select %p159, %s158, 3
      %s161 = smul.addr %s160, 8
      %s162 = scalar_lea.vmem %s2, %s161
      %p163 = pneg %p109
      %p164 = pneg %p106
      %p165 = scmp.lt.s32.totalorder %s15, 1
      %s166 = scalar_select %p165, %s15, 1
      %s167 = smul.addr %s166, 2
      %s168 = scalar_lea.vmem %s3, %s167
      %s169 = smul.u32 2, %s15
      %p170 = scmp.lt.s32.totalorder %s169, 3
      %s171 = scalar_select %p170, %s169, 3
      %s172 = smul.addr %s171, 8
      %s173 = scalar_lea.vmem %s0, %s172
      %s174 = smul.u32 2, %s15
      %s175 = smul.u32 2, %s15
      %p176 = scmp.lt.s32.totalorder %s175, 3
      %s177 = scalar_select %p176, %s175, 3
      %s178 = smul.addr %s177, 8
      %s179 = scalar_lea.vmem %s2, %s178
      %s180 = smul.u32 2, %s15
      %p181 = scmp.lt.s32.totalorder %s15, 1
      %s182 = scalar_select %p181, %s15, 1
      %s183 = smul.addr %s182, 2
      %s184 = scalar_lea.vmem %s3, %s183
      %v185 = vld [vmem:[%s173] sm:$0xff]
      %v186 = vld [vmem:[%s173 + $0x8] sm:$0xff]
      %189 = vrot.lane.b32.xlu0 %v185, 4
      %v190 = vpop.permute.xlu0 %189
      %191 = vrot.lane.b32.xlu0 %v186, 4
      %v192 = vpop.permute.xlu0 %191
      %vm195 = vcmask 31744
      %v196 = vsel %vm195, 0.0, %v190
      %v197 = vsel %vm195, 0.0, %v192
      %vm198 = vcmask 556032
      %v199 = vsel %vm198, %v196, 0.0
      %v200 = vsel %vm198, %v197, 0.0
      %vm203 = vcmask 1040384
      %v204 = vrot.slane %v199, 7
      %v205 = vrot.slane %v200, 7
      %v206 = vsel %vm203, %v204, %v205
      %v209 = vsel %vm203, 0.0, %v204
      %v210 = vsel %vm203, %v205, 0.0
      %v211 = vld [vmem:[%s1] sm:$0xff]
      %v212 = vld [vmem:[%s1 + $0x8] sm:$0xff]
      %v213 = vld [vmem:[%s1 + $0x10] sm:$0xff]
      %v214 = vld [vmem:[%s1 + $0x18] sm:$0xff]
      %v215 = vld [vmem:[%s1 + $0x20] sm:$0xff]
      %v216 = vld [vmem:[%s1 + $0x28] sm:$0xff]
      %v217 = vld [vmem:[%s1 + $0x30] sm:$0xff]
      %v218 = vld [vmem:[%s1 + $0x38] sm:$0xff]
      %s219 = scalar_lea.vmem %s1, 64
      %v220 = vld [vmem:[%s219] sm:$0xff]
      %v221 = vld [vmem:[%s219 + $0x8] sm:$0xff]
      %v222 = vld [vmem:[%s219 + $0x10] sm:$0xff]
      %v223 = vld [vmem:[%s219 + $0x18] sm:$0xff]
      %v224 = vld [vmem:[%s219 + $0x20] sm:$0xff]
      %v225 = vld [vmem:[%s219 + $0x28] sm:$0xff]
      %v226 = vld [vmem:[%s219 + $0x30] sm:$0xff]
      %v227 = vld [vmem:[%s219 + $0x38] sm:$0xff]
      %229 = vrot.lane.b32.xlu0 %v209, 124
      %v230 = vpop.permute.xlu0 %229
      %231 = vrot.lane.b32.xlu0 %v206, 124
      %v232 = vpop.permute.xlu0 %231
      %vm233 = vcmask 523264
      %v234 = vsel %vm233, %v230, 0
      %v236 = vsel %vm233, %v232, 0
      %238 = vmatprep.subr.mxu0 0.0
      %239 = vmatpush1.msra.mxu0 0.0
      %240 = vmatprep.subr.mxu0 0.0
      %241 = vmatpush1.msra.mxu0 0.0
      %242 = vmatprep.subr.mxu0 0.0
      %243 = vmatpush1.msra.mxu0 0.0
      %244 = vmatprep.subr.mxu0 0.0
      %245 = vmatpush1.msra.mxu0 0.0
      %246 = vmatprep.subr.mxu0 0.0
      %247 = vmatpush1.msra.mxu0 0.0
      %248 = vmatprep.subr.mxu0 0.0
      %249 = vmatpush1.msra.mxu0 0.0
      %250 = vmatprep.subr.mxu0 0.0
      %251 = vmatpush1.msra.mxu0 0.0
      %252 = vmatprep.subr.mxu0 0.0
      %253 = vmatpush1.msra.mxu0 0.0
      %254 = vmatprep.subr.mxu0 0.0
      %255 = vmatpush1.msra.mxu0 %v227
      %256 = vmatprep.subr.mxu0 0.0
      %257 = vmatpush1.msra.mxu0 %v226
      %258 = vmatprep.subr.mxu0 0.0
      %259 = vmatpush1.msra.mxu0 %v225
      %260 = vmatprep.subr.mxu0 0.0
      %261 = vmatpush1.msra.mxu0 %v224
      %262 = vmatprep.subr.mxu0 0.0
      %263 = vmatpush1.msra.mxu0 %v223
      %264 = vmatprep.subr.mxu0 0.0
      %265 = vmatpush1.msra.mxu0 %v222
      %266 = vmatprep.subr.mxu0 0.0
      %267 = vmatpush1.msra.mxu0 %v221
      %268 = vmatprep.subr.mxu0 0.0
      %269 = vmatpush1.msra.mxu0 %v220
      %270 = vmatprep.subr.mxu0 0.0
      %271 = vmatpush2.msra.mxu0 0.0
      %272 = vmatprep.subr.mxu0 0.0
      %273 = vmatpush2.msra.mxu0 0.0
      %274 = vmatprep.subr.mxu0 0.0
      %275 = vmatpush2.msra.mxu0 0.0
      %276 = vmatprep.subr.mxu0 0.0
      %277 = vmatpush2.msra.mxu0 0.0
      %278 = vmatprep.subr.mxu0 0.0
      %279 = vmatpush2.msra.mxu0 0.0
      %280 = vmatprep.subr.mxu0 0.0
      %281 = vmatpush2.msra.mxu0 0.0
      %282 = vmatprep.subr.mxu0 0.0
      %283 = vmatpush2.msra.mxu0 0.0
      %284 = vmatprep.subr.mxu0 0.0
      %285 = vmatpush2.msra.mxu0 0.0
      %286 = vmatprep.subr.mxu0 0.0
      %287 = vmatpush2.msra.mxu0 0.0
      %288 = vmatprep.subr.mxu0 0.0
      %289 = vmatpush2.msra.mxu0 0.0
      %290 = vmatprep.subr.mxu0 0.0
      %291 = vmatpush2.msra.mxu0 0.0
      %292 = vmatprep.subr.mxu0 0.0
      %293 = vmatpush2.msra.mxu0 0.0
      %294 = vmatprep.subr.mxu0 0.0
      %295 = vmatpush2.msra.mxu0 0.0
      %296 = vmatprep.subr.mxu0 0.0
      %297 = vmatpush2.msra.mxu0 0.0
      %298 = vmatprep.subr.mxu0 0.0
      %299 = vmatpush2.msra.mxu0 0.0
      %300 = vmatprep.subr.mxu0 0.0
      %301 = vmatpush2.msra.mxu0 0.0
      %302 = vmatprep.mubr.f32.mxu0 0.0
      %303 = vmatmul.mubr.f32.gmra.mxu0 %v234
      %v304 = vpop.f32.mrf.mxu0
      %v305 = vadd.f32 0.0, %v304
      %v306 = vpop.f32.mrf.mxu0
      %307 = vmatprep.mubr.f32.mxu0 0.0
      %308 = vmatmul.mubr.f32.gmra.mxu0 %v236
      %v309 = vpop.f32.mrf.mxu0
      %v310 = vadd.f32 0.0, %v309
      %v311 = vpop.f32.mrf.mxu0
      %312 = vdwg.mxu0
      %v313 = vsel %vm233, %v209, 0
      %v315 = vsel %vm233, %v206, 0
      %317 = vmatprep.subr.mxu0 0.0
      %318 = vmatpush1.msra.mxu0 0.0
      %319 = vmatprep.subr.mxu0 0.0
      %320 = vmatpush1.msra.mxu0 0.0
      %321 = vmatprep.subr.mxu0 0.0
      %322 = vmatpush1.msra.mxu0 0.0
      %323 = vmatprep.subr.mxu0 0.0
      %324 = vmatpush1.msra.mxu0 0.0
      %325 = vmatprep.subr.mxu0 0.0
      %326 = vmatpush1.msra.mxu0 0.0
      %327 = vmatprep.subr.mxu0 0.0
      %328 = vmatpush1.msra.mxu0 0.0
      %329 = vmatprep.subr.mxu0 0.0
      %330 = vmatpush1.msra.mxu0 0.0
      %331 = vmatprep.subr.mxu0 0.0
      %332 = vmatpush1.msra.mxu0 0.0
      %333 = vmatprep.subr.mxu0 0.0
      %334 = vmatpush1.msra.mxu0 %v218
      %335 = vmatprep.subr.mxu0 0.0
      %336 = vmatpush1.msra.mxu0 %v217
      %337 = vmatprep.subr.mxu0 0.0
      %338 = vmatpush1.msra.mxu0 %v216
      %339 = vmatprep.subr.mxu0 0.0
      %340 = vmatpush1.msra.mxu0 %v215
      %341 = vmatprep.subr.mxu0 0.0
      %342 = vmatpush1.msra.mxu0 %v214
      %343 = vmatprep.subr.mxu0 0.0
      %344 = vmatpush1.msra.mxu0 %v213
      %345 = vmatprep.subr.mxu0 0.0
      %346 = vmatpush1.msra.mxu0 %v212
      %347 = vmatprep.subr.mxu0 0.0
      %348 = vmatpush1.msra.mxu0 %v211
      %349 = vmatprep.subr.mxu0 0.0
      %350 = vmatpush2.msra.mxu0 0.0
      %351 = vmatprep.subr.mxu0 0.0
      %352 = vmatpush2.msra.mxu0 0.0
      %353 = vmatprep.subr.mxu0 0.0
      %354 = vmatpush2.msra.mxu0 0.0
      %355 = vmatprep.subr.mxu0 0.0
      %356 = vmatpush2.msra.mxu0 0.0
      %357 = vmatprep.subr.mxu0 0.0
      %358 = vmatpush2.msra.mxu0 0.0
      %359 = vmatprep.subr.mxu0 0.0
      %360 = vmatpush2.msra.mxu0 0.0
      %361 = vmatprep.subr.mxu0 0.0
      %362 = vmatpush2.msra.mxu0 0.0
      %363 = vmatprep.subr.mxu0 0.0
      %364 = vmatpush2.msra.mxu0 0.0
      %365 = vmatprep.subr.mxu0 0.0
      %366 = vmatpush2.msra.mxu0 0.0
      %367 = vmatprep.subr.mxu0 0.0
      %368 = vmatpush2.msra.mxu0 0.0
      %369 = vmatprep.subr.mxu0 0.0
      %370 = vmatpush2.msra.mxu0 0.0
      %371 = vmatprep.subr.mxu0 0.0
      %372 = vmatpush2.msra.mxu0 0.0
      %373 = vmatprep.subr.mxu0 0.0
      %374 = vmatpush2.msra.mxu0 0.0
      %375 = vmatprep.subr.mxu0 0.0
      %376 = vmatpush2.msra.mxu0 0.0
      %377 = vmatprep.subr.mxu0 0.0
      %378 = vmatpush2.msra.mxu0 0.0
      %379 = vmatprep.subr.mxu0 0.0
      %380 = vmatpush2.msra.mxu0 0.0
      %381 = vmatprep.mubr.f32.mxu0 0.0
      %382 = vmatmul.mubr.f32.gmra.mxu0 %v313
      %v383 = vpop.f32.mrf.mxu0
      %v384 = vadd.f32 %v305, %v383
      %v385 = vpop.f32.mrf.mxu0
      %386 = vmatprep.mubr.f32.mxu0 0.0
      %387 = vmatmul.mubr.f32.gmra.mxu0 %v315
      %v388 = vpop.f32.mrf.mxu0
      %v389 = vadd.f32 %v310, %v388
      %v390 = vpop.f32.mrf.mxu0
      %391 = vdwg.mxu0
      %s392 = scalar_lea.vmem %s1, 128
      %v393 = vld [vmem:[%s392] sm:$0xff]
      %v394 = vld [vmem:[%s392 + $0x8] sm:$0xff]
      %v395 = vld [vmem:[%s392 + $0x10] sm:$0xff]
      %v396 = vld [vmem:[%s392 + $0x18] sm:$0xff]
      %v397 = vld [vmem:[%s392 + $0x20] sm:$0xff]
      %v398 = vld [vmem:[%s392 + $0x28] sm:$0xff]
      %v399 = vld [vmem:[%s392 + $0x30] sm:$0xff]
      %v400 = vld [vmem:[%s392 + $0x38] sm:$0xff]
      %401 = vrot.lane.b32.xlu0 %v209, 120
      %v402 = vpop.permute.xlu0 %401
      %403 = vrot.lane.b32.xlu0 %v206, 120
      %v404 = vpop.permute.xlu0 %403
      %v405 = vsel %vm233, %v402, 0
      %v407 = vsel %vm233, %v404, 0
      %409 = vmatprep.subr.mxu0 0.0
      %410 = vmatpush1.msra.mxu0 0.0
      %411 = vmatprep.subr.mxu0 0.0
      %412 = vmatpush1.msra.mxu0 0.0
      %413 = vmatprep.subr.mxu0 0.0
      %414 = vmatpush1.msra.mxu0 0.0
      %415 = vmatprep.subr.mxu0 0.0
      %416 = vmatpush1.msra.mxu0 0.0
      %417 = vmatprep.subr.mxu0 0.0
      %418 = vmatpush1.msra.mxu0 0.0
      %419 = vmatprep.subr.mxu0 0.0
      %420 = vmatpush1.msra.mxu0 0.0
      %421 = vmatprep.subr.mxu0 0.0
      %422 = vmatpush1.msra.mxu0 0.0
      %423 = vmatprep.subr.mxu0 0.0
      %424 = vmatpush1.msra.mxu0 0.0
      %425 = vmatprep.subr.mxu0 0.0
      %426 = vmatpush1.msra.mxu0 %v400
      %427 = vmatprep.subr.mxu0 0.0
      %428 = vmatpush1.msra.mxu0 %v399
      %429 = vmatprep.subr.mxu0 0.0
      %430 = vmatpush1.msra.mxu0 %v398
      %431 = vmatprep.subr.mxu0 0.0
      %432 = vmatpush1.msra.mxu0 %v397
      %433 = vmatprep.subr.mxu0 0.0
      %434 = vmatpush1.msra.mxu0 %v396
      %435 = vmatprep.subr.mxu0 0.0
      %436 = vmatpush1.msra.mxu0 %v395
      %437 = vmatprep.subr.mxu0 0.0
      %438 = vmatpush1.msra.mxu0 %v394
      %439 = vmatprep.subr.mxu0 0.0
      %440 = vmatpush1.msra.mxu0 %v393
      %441 = vmatprep.subr.mxu0 0.0
      %442 = vmatpush2.msra.mxu0 0.0
      %443 = vmatprep.subr.mxu0 0.0
      %444 = vmatpush2.msra.mxu0 0.0
      %445 = vmatprep.subr.mxu0 0.0
      %446 = vmatpush2.msra.mxu0 0.0
      %447 = vmatprep.subr.mxu0 0.0
      %448 = vmatpush2.msra.mxu0 0.0
      %449 = vmatprep.subr.mxu0 0.0
      %450 = vmatpush2.msra.mxu0 0.0
      %451 = vmatprep.subr.mxu0 0.0
      %452 = vmatpush2.msra.mxu0 0.0
      %453 = vmatprep.subr.mxu0 0.0
      %454 = vmatpush2.msra.mxu0 0.0
      %455 = vmatprep.subr.mxu0 0.0
      %456 = vmatpush2.msra.mxu0 0.0
      %457 = vmatprep.subr.mxu0 0.0
      %458 = vmatpush2.msra.mxu0 0.0
      %459 = vmatprep.subr.mxu0 0.0
      %460 = vmatpush2.msra.mxu0 0.0
      %461 = vmatprep.subr.mxu0 0.0
      %462 = vmatpush2.msra.mxu0 0.0
      %463 = vmatprep.subr.mxu0 0.0
      %464 = vmatpush2.msra.mxu0 0.0
      %465 = vmatprep.subr.mxu0 0.0
      %466 = vmatpush2.msra.mxu0 0.0
      %467 = vmatprep.subr.mxu0 0.0
      %468 = vmatpush2.msra.mxu0 0.0
      %469 = vmatprep.subr.mxu0 0.0
      %470 = vmatpush2.msra.mxu0 0.0
      %471 = vmatprep.subr.mxu0 0.0
      %472 = vmatpush2.msra.mxu0 0.0
      %473 = vmatprep.mubr.f32.mxu0 0.0
      %474 = vmatmul.mubr.f32.gmra.mxu0 %v405
      %v475 = vpop.f32.mrf.mxu0
      %v476 = vadd.f32 0.0, %v475
      %v477 = vpop.f32.mrf.mxu0
      %478 = vmatprep.mubr.f32.mxu0 0.0
      %479 = vmatmul.mubr.f32.gmra.mxu0 %v407
      %v480 = vpop.f32.mrf.mxu0
      %v481 = vadd.f32 0.0, %v480
      %v482 = vpop.f32.mrf.mxu0
      %483 = vdwg.mxu0
      %v484 = vadd.f32 %v384, %v476
      %v485 = vadd.f32 %v389, %v481
      %s486 = scalar_lea.vmem %s1, 192
      %v487 = vld [vmem:[%s486] sm:$0xff]
      %v488 = vld [vmem:[%s486 + $0x8] sm:$0xff]
      %v489 = vld [vmem:[%s486 + $0x10] sm:$0xff]
      %v490 = vld [vmem:[%s486 + $0x18] sm:$0xff]
      %v491 = vld [vmem:[%s486 + $0x20] sm:$0xff]
      %v492 = vld [vmem:[%s486 + $0x28] sm:$0xff]
      %v493 = vld [vmem:[%s486 + $0x30] sm:$0xff]
      %v494 = vld [vmem:[%s486 + $0x38] sm:$0xff]
      %vm496 = vcmask 1046528
      %v497 = vrot.slane %v209, 1
      %v498 = vrot.slane %v206, 1
      %v499 = vsel %vm496, %v497, %v498
      %v500 = vrot.slane %v210, 1
      %v501 = vsel %vm496, %v498, %v500
      %v502 = vsel %vm233, %v499, 0
      %v504 = vsel %vm233, %v501, 0
      %506 = vmatprep.subr.mxu0 0.0
      %507 = vmatpush1.msra.mxu0 0.0
      %508 = vmatprep.subr.mxu0 0.0
      %509 = vmatpush1.msra.mxu0 0.0
      %510 = vmatprep.subr.mxu0 0.0
      %511 = vmatpush1.msra.mxu0 0.0
      %512 = vmatprep.subr.mxu0 0.0
      %513 = vmatpush1.msra.mxu0 0.0
      %514 = vmatprep.subr.mxu0 0.0
      %515 = vmatpush1.msra.mxu0 0.0
      %516 = vmatprep.subr.mxu0 0.0
      %517 = vmatpush1.msra.mxu0 0.0
      %518 = vmatprep.subr.mxu0 0.0
      %519 = vmatpush1.msra.mxu0 0.0
      %520 = vmatprep.subr.mxu0 0.0
      %521 = vmatpush1.msra.mxu0 0.0
      %522 = vmatprep.subr.mxu0 0.0
      %523 = vmatpush1.msra.mxu0 %v494
      %524 = vmatprep.subr.mxu0 0.0
      %525 = vmatpush1.msra.mxu0 %v493
      %526 = vmatprep.subr.mxu0 0.0
      %527 = vmatpush1.msra.mxu0 %v492
      %528 = vmatprep.subr.mxu0 0.0
      %529 = vmatpush1.msra.mxu0 %v491
      %530 = vmatprep.subr.mxu0 0.0
      %531 = vmatpush1.msra.mxu0 %v490
      %532 = vmatprep.subr.mxu0 0.0
      %533 = vmatpush1.msra.mxu0 %v489
      %534 = vmatprep.subr.mxu0 0.0
      %535 = vmatpush1.msra.mxu0 %v488
      %536 = vmatprep.subr.mxu0 0.0
      %537 = vmatpush1.msra.mxu0 %v487
      %538 = vmatprep.subr.mxu0 0.0
      %539 = vmatpush2.msra.mxu0 0.0
      %540 = vmatprep.subr.mxu0 0.0
      %541 = vmatpush2.msra.mxu0 0.0
      %542 = vmatprep.subr.mxu0 0.0
      %543 = vmatpush2.msra.mxu0 0.0
      %544 = vmatprep.subr.mxu0 0.0
      %545 = vmatpush2.msra.mxu0 0.0
      %546 = vmatprep.subr.mxu0 0.0
      %547 = vmatpush2.msra.mxu0 0.0
      %548 = vmatprep.subr.mxu0 0.0
      %549 = vmatpush2.msra.mxu0 0.0
      %550 = vmatprep.subr.mxu0 0.0
      %551 = vmatpush2.msra.mxu0 0.0
      %552 = vmatprep.subr.mxu0 0.0
      %553 = vmatpush2.msra.mxu0 0.0
      %554 = vmatprep.subr.mxu0 0.0
      %555 = vmatpush2.msra.mxu0 0.0
      %556 = vmatprep.subr.mxu0 0.0
      %557 = vmatpush2.msra.mxu0 0.0
      %558 = vmatprep.subr.mxu0 0.0
      %559 = vmatpush2.msra.mxu0 0.0
      %560 = vmatprep.subr.mxu0 0.0
      %561 = vmatpush2.msra.mxu0 0.0
      %562 = vmatprep.subr.mxu0 0.0
      %563 = vmatpush2.msra.mxu0 0.0
      %564 = vmatprep.subr.mxu0 0.0
      %565 = vmatpush2.msra.mxu0 0.0
      %566 = vmatprep.subr.mxu0 0.0
      %567 = vmatpush2.msra.mxu0 0.0
      %568 = vmatprep.subr.mxu0 0.0
      %569 = vmatpush2.msra.mxu0 0.0
      %570 = vmatprep.mubr.f32.mxu0 0.0
      %571 = vmatmul.mubr.f32.gmra.mxu0 %v502
      %v572 = vpop.f32.mrf.mxu0
      %v573 = vadd.f32 0.0, %v572
      %v574 = vpop.f32.mrf.mxu0
      %575 = vmatprep.mubr.f32.mxu0 0.0
      %576 = vmatmul.mubr.f32.gmra.mxu0 %v504
      %v577 = vpop.f32.mrf.mxu0
      %v578 = vadd.f32 0.0, %v577
      %v579 = vpop.f32.mrf.mxu0
      %580 = vdwg.mxu0
      %v581 = vadd.f32 %v484, %v573
      %v582 = vadd.f32 %v485, %v578
      %s583 = scalar_lea.vmem %s1, 256
      %v584 = vld [vmem:[%s583] sm:$0xff]
      %v585 = vld [vmem:[%s583 + $0x8] sm:$0xff]
      %v586 = vld [vmem:[%s583 + $0x10] sm:$0xff]
      %v587 = vld [vmem:[%s583 + $0x18] sm:$0xff]
      %v588 = vld [vmem:[%s583 + $0x20] sm:$0xff]
      %v589 = vld [vmem:[%s583 + $0x28] sm:$0xff]
      %v590 = vld [vmem:[%s583 + $0x30] sm:$0xff]
      %v591 = vld [vmem:[%s583 + $0x38] sm:$0xff]
      %592 = vrot.lane.b32.xlu0 %v499, 124
      %v593 = vpop.permute.xlu0 %592
      %594 = vrot.lane.b32.xlu0 %v501, 124
      %v595 = vpop.permute.xlu0 %594
      %v596 = vsel %vm233, %v593, 0
      %v598 = vsel %vm233, %v595, 0
      %600 = vmatprep.subr.mxu0 0.0
      %601 = vmatpush1.msra.mxu0 0.0
      %602 = vmatprep.subr.mxu0 0.0
      %603 = vmatpush1.msra.mxu0 0.0
      %604 = vmatprep.subr.mxu0 0.0
      %605 = vmatpush1.msra.mxu0 0.0
      %606 = vmatprep.subr.mxu0 0.0
      %607 = vmatpush1.msra.mxu0 0.0
      %608 = vmatprep.subr.mxu0 0.0
      %609 = vmatpush1.msra.mxu0 0.0
      %610 = vmatprep.subr.mxu0 0.0
      %611 = vmatpush1.msra.mxu0 0.0
      %612 = vmatprep.subr.mxu0 0.0
      %613 = vmatpush1.msra.mxu0 0.0
      %614 = vmatprep.subr.mxu0 0.0
      %615 = vmatpush1.msra.mxu0 0.0
      %616 = vmatprep.subr.mxu0 0.0
      %617 = vmatpush1.msra.mxu0 %v591
      %618 = vmatprep.subr.mxu0 0.0
      %619 = vmatpush1.msra.mxu0 %v590
      %620 = vmatprep.subr.mxu0 0.0
      %621 = vmatpush1.msra.mxu0 %v589
      %622 = vmatprep.subr.mxu0 0.0
      %623 = vmatpush1.msra.mxu0 %v588
      %624 = vmatprep.subr.mxu0 0.0
      %625 = vmatpush1.msra.mxu0 %v587
      %626 = vmatprep.subr.mxu0 0.0
      %627 = vmatpush1.msra.mxu0 %v586
      %628 = vmatprep.subr.mxu0 0.0
      %629 = vmatpush1.msra.mxu0 %v585
      %630 = vmatprep.subr.mxu0 0.0
      %631 = vmatpush1.msra.mxu0 %v584
      %632 = vmatprep.subr.mxu0 0.0
      %633 = vmatpush2.msra.mxu0 0.0
      %634 = vmatprep.subr.mxu0 0.0
      %635 = vmatpush2.msra.mxu0 0.0
      %636 = vmatprep.subr.mxu0 0.0
      %637 = vmatpush2.msra.mxu0 0.0
      %638 = vmatprep.subr.mxu0 0.0
      %639 = vmatpush2.msra.mxu0 0.0
      %640 = vmatprep.subr.mxu0 0.0
      %641 = vmatpush2.msra.mxu0 0.0
      %642 = vmatprep.subr.mxu0 0.0
      %643 = vmatpush2.msra.mxu0 0.0
      %644 = vmatprep.subr.mxu0 0.0
      %645 = vmatpush2.msra.mxu0 0.0
      %646 = vmatprep.subr.mxu0 0.0
      %647 = vmatpush2.msra.mxu0 0.0
      %648 = vmatprep.subr.mxu0 0.0
      %649 = vmatpush2.msra.mxu0 0.0
      %650 = vmatprep.subr.mxu0 0.0
      %651 = vmatpush2.msra.mxu0 0.0
      %652 = vmatprep.subr.mxu0 0.0
      %653 = vmatpush2.msra.mxu0 0.0
      %654 = vmatprep.subr.mxu0 0.0
      %655 = vmatpush2.msra.mxu0 0.0
      %656 = vmatprep.subr.mxu0 0.0
      %657 = vmatpush2.msra.mxu0 0.0
      %658 = vmatprep.subr.mxu0 0.0
      %659 = vmatpush2.msra.mxu0 0.0
      %660 = vmatprep.subr.mxu0 0.0
      %661 = vmatpush2.msra.mxu0 0.0
      %662 = vmatprep.subr.mxu0 0.0
      %663 = vmatpush2.msra.mxu0 0.0
      %664 = vmatprep.mubr.f32.mxu0 0.0
      %665 = vmatmul.mubr.f32.gmra.mxu0 %v596
      %v666 = vpop.f32.mrf.mxu0
      %v667 = vadd.f32 0.0, %v666
      %v668 = vpop.f32.mrf.mxu0
      %669 = vmatprep.mubr.f32.mxu0 0.0
      %670 = vmatmul.mubr.f32.gmra.mxu0 %v598
      %v671 = vpop.f32.mrf.mxu0
      %v672 = vadd.f32 0.0, %v671
      %v673 = vpop.f32.mrf.mxu0
      %674 = vdwg.mxu0
      %v675 = vadd.f32 %v581, %v667
      %v676 = vadd.f32 %v582, %v672
      %s677 = scalar_lea.vmem %s1, 320
      %v678 = vld [vmem:[%s677] sm:$0xff]
      %v679 = vld [vmem:[%s677 + $0x8] sm:$0xff]
      %v680 = vld [vmem:[%s677 + $0x10] sm:$0xff]
      %v681 = vld [vmem:[%s677 + $0x18] sm:$0xff]
      %v682 = vld [vmem:[%s677 + $0x20] sm:$0xff]
      %v683 = vld [vmem:[%s677 + $0x28] sm:$0xff]
      %v684 = vld [vmem:[%s677 + $0x30] sm:$0xff]
      %v685 = vld [vmem:[%s677 + $0x38] sm:$0xff]
      %686 = vrot.lane.b32.xlu0 %v499, 120
      %v687 = vpop.permute.xlu0 %686
      %688 = vrot.lane.b32.xlu0 %v501, 120
      %v689 = vpop.permute.xlu0 %688
      %v690 = vsel %vm233, %v687, 0
      %v692 = vsel %vm233, %v689, 0
      %694 = vmatprep.subr.mxu0 0.0
      %695 = vmatpush1.msra.mxu0 0.0
      %696 = vmatprep.subr.mxu0 0.0
      %697 = vmatpush1.msra.mxu0 0.0
      %698 = vmatprep.subr.mxu0 0.0
      %699 = vmatpush1.msra.mxu0 0.0
      %700 = vmatprep.subr.mxu0 0.0
      %701 = vmatpush1.msra.mxu0 0.0
      %702 = vmatprep.subr.mxu0 0.0
      %703 = vmatpush1.msra.mxu0 0.0
      %704 = vmatprep.subr.mxu0 0.0
      %705 = vmatpush1.msra.mxu0 0.0
      %706 = vmatprep.subr.mxu0 0.0
      %707 = vmatpush1.msra.mxu0 0.0
      %708 = vmatprep.subr.mxu0 0.0
      %709 = vmatpush1.msra.mxu0 0.0
      %710 = vmatprep.subr.mxu0 0.0
      %711 = vmatpush1.msra.mxu0 %v685
      %712 = vmatprep.subr.mxu0 0.0
      %713 = vmatpush1.msra.mxu0 %v684
      %714 = vmatprep.subr.mxu0 0.0
      %715 = vmatpush1.msra.mxu0 %v683
      %716 = vmatprep.subr.mxu0 0.0
      %717 = vmatpush1.msra.mxu0 %v682
      %718 = vmatprep.subr.mxu0 0.0
      %719 = vmatpush1.msra.mxu0 %v681
      %720 = vmatprep.subr.mxu0 0.0
      %721 = vmatpush1.msra.mxu0 %v680
      %722 = vmatprep.subr.mxu0 0.0
      %723 = vmatpush1.msra.mxu0 %v679
      %724 = vmatprep.subr.mxu0 0.0
      %725 = vmatpush1.msra.mxu0 %v678
      %726 = vmatprep.subr.mxu0 0.0
      %727 = vmatpush2.msra.mxu0 0.0
      %728 = vmatprep.subr.mxu0 0.0
      %729 = vmatpush2.msra.mxu0 0.0
      %730 = vmatprep.subr.mxu0 0.0
      %731 = vmatpush2.msra.mxu0 0.0
      %732 = vmatprep.subr.mxu0 0.0
      %733 = vmatpush2.msra.mxu0 0.0
      %734 = vmatprep.subr.mxu0 0.0
      %735 = vmatpush2.msra.mxu0 0.0
      %736 = vmatprep.subr.mxu0 0.0
      %737 = vmatpush2.msra.mxu0 0.0
      %738 = vmatprep.subr.mxu0 0.0
      %739 = vmatpush2.msra.mxu0 0.0
      %740 = vmatprep.subr.mxu0 0.0
      %741 = vmatpush2.msra.mxu0 0.0
      %742 = vmatprep.subr.mxu0 0.0
      %743 = vmatpush2.msra.mxu0 0.0
      %744 = vmatprep.subr.mxu0 0.0
      %745 = vmatpush2.msra.mxu0 0.0
      %746 = vmatprep.subr.mxu0 0.0
      %747 = vmatpush2.msra.mxu0 0.0
      %748 = vmatprep.subr.mxu0 0.0
      %749 = vmatpush2.msra.mxu0 0.0
      %750 = vmatprep.subr.mxu0 0.0
      %751 = vmatpush2.msra.mxu0 0.0
      %752 = vmatprep.subr.mxu0 0.0
      %753 = vmatpush2.msra.mxu0 0.0
      %754 = vmatprep.subr.mxu0 0.0
      %755 = vmatpush2.msra.mxu0 0.0
      %756 = vmatprep.subr.mxu0 0.0
      %757 = vmatpush2.msra.mxu0 0.0
      %758 = vmatprep.mubr.f32.mxu0 0.0
      %759 = vmatmul.mubr.f32.gmra.mxu0 %v690
      %v760 = vpop.f32.mrf.mxu0
      %v761 = vadd.f32 0.0, %v760
      %v762 = vpop.f32.mrf.mxu0
      %763 = vmatprep.mubr.f32.mxu0 0.0
      %764 = vmatmul.mubr.f32.gmra.mxu0 %v692
      %v765 = vpop.f32.mrf.mxu0
      %v766 = vadd.f32 0.0, %v765
      %v767 = vpop.f32.mrf.mxu0
      %768 = vdwg.mxu0
      %v769 = vadd.f32 %v675, %v761
      %v770 = vadd.f32 %v676, %v766
      %s771 = scalar_lea.vmem %s1, 384
      %v772 = vld [vmem:[%s771] sm:$0xff]
      %v773 = vld [vmem:[%s771 + $0x8] sm:$0xff]
      %v774 = vld [vmem:[%s771 + $0x10] sm:$0xff]
      %v775 = vld [vmem:[%s771 + $0x18] sm:$0xff]
      %v776 = vld [vmem:[%s771 + $0x20] sm:$0xff]
      %v777 = vld [vmem:[%s771 + $0x28] sm:$0xff]
      %v778 = vld [vmem:[%s771 + $0x30] sm:$0xff]
      %v779 = vld [vmem:[%s771 + $0x38] sm:$0xff]
      %vm780 = vcmask 1045504
      %v781 = vrot.slane %v209, 2
      %v782 = vrot.slane %v206, 2
      %v783 = vsel %vm780, %v781, %v782
      %v784 = vrot.slane %v210, 2
      %v785 = vsel %vm780, %v782, %v784
      %v786 = vsel %vm233, %v783, 0
      %v788 = vsel %vm233, %v785, 0
      %790 = vmatprep.subr.mxu0 0.0
      %791 = vmatpush1.msra.mxu0 0.0
      %792 = vmatprep.subr.mxu0 0.0
      %793 = vmatpush1.msra.mxu0 0.0
      %794 = vmatprep.subr.mxu0 0.0
      %795 = vmatpush1.msra.mxu0 0.0
      %796 = vmatprep.subr.mxu0 0.0
      %797 = vmatpush1.msra.mxu0 0.0
      %798 = vmatprep.subr.mxu0 0.0
      %799 = vmatpush1.msra.mxu0 0.0
      %800 = vmatprep.subr.mxu0 0.0
      %801 = vmatpush1.msra.mxu0 0.0
      %802 = vmatprep.subr.mxu0 0.0
      %803 = vmatpush1.msra.mxu0 0.0
      %804 = vmatprep.subr.mxu0 0.0
      %805 = vmatpush1.msra.mxu0 0.0
      %806 = vmatprep.subr.mxu0 0.0
      %807 = vmatpush1.msra.mxu0 %v779
      %808 = vmatprep.subr.mxu0 0.0
      %809 = vmatpush1.msra.mxu0 %v778
      %810 = vmatprep.subr.mxu0 0.0
      %811 = vmatpush1.msra.mxu0 %v777
      %812 = vmatprep.subr.mxu0 0.0
      %813 = vmatpush1.msra.mxu0 %v776
      %814 = vmatprep.subr.mxu0 0.0
      %815 = vmatpush1.msra.mxu0 %v775
      %816 = vmatprep.subr.mxu0 0.0
      %817 = vmatpush1.msra.mxu0 %v774
      %818 = vmatprep.subr.mxu0 0.0
      %819 = vmatpush1.msra.mxu0 %v773
      %820 = vmatprep.subr.mxu0 0.0
      %821 = vmatpush1.msra.mxu0 %v772
      %822 = vmatprep.subr.mxu0 0.0
      %823 = vmatpush2.msra.mxu0 0.0
      %824 = vmatprep.subr.mxu0 0.0
      %825 = vmatpush2.msra.mxu0 0.0
      %826 = vmatprep.subr.mxu0 0.0
      %827 = vmatpush2.msra.mxu0 0.0
      %828 = vmatprep.subr.mxu0 0.0
      %829 = vmatpush2.msra.mxu0 0.0
      %830 = vmatprep.subr.mxu0 0.0
      %831 = vmatpush2.msra.mxu0 0.0
      %832 = vmatprep.subr.mxu0 0.0
      %833 = vmatpush2.msra.mxu0 0.0
      %834 = vmatprep.subr.mxu0 0.0
      %835 = vmatpush2.msra.mxu0 0.0
      %836 = vmatprep.subr.mxu0 0.0
      %837 = vmatpush2.msra.mxu0 0.0
      %838 = vmatprep.subr.mxu0 0.0
      %839 = vmatpush2.msra.mxu0 0.0
      %840 = vmatprep.subr.mxu0 0.0
      %841 = vmatpush2.msra.mxu0 0.0
      %842 = vmatprep.subr.mxu0 0.0
      %843 = vmatpush2.msra.mxu0 0.0
      %844 = vmatprep.subr.mxu0 0.0
      %845 = vmatpush2.msra.mxu0 0.0
      %846 = vmatprep.subr.mxu0 0.0
      %847 = vmatpush2.msra.mxu0 0.0
      %848 = vmatprep.subr.mxu0 0.0
      %849 = vmatpush2.msra.mxu0 0.0
      %850 = vmatprep.subr.mxu0 0.0
      %851 = vmatpush2.msra.mxu0 0.0
      %852 = vmatprep.subr.mxu0 0.0
      %853 = vmatpush2.msra.mxu0 0.0
      %854 = vmatprep.mubr.f32.mxu0 0.0
      %855 = vmatmul.mubr.f32.gmra.mxu0 %v786
      %v856 = vpop.f32.mrf.mxu0
      %v857 = vadd.f32 0.0, %v856
      %v858 = vpop.f32.mrf.mxu0
      %859 = vmatprep.mubr.f32.mxu0 0.0
      %860 = vmatmul.mubr.f32.gmra.mxu0 %v788
      %v861 = vpop.f32.mrf.mxu0
      %v862 = vadd.f32 0.0, %v861
      %v863 = vpop.f32.mrf.mxu0
      %864 = vdwg.mxu0
      %v865 = vadd.f32 %v769, %v857
      %v866 = vadd.f32 %v770, %v862
      %s867 = scalar_lea.vmem %s1, 448
      %v868 = vld [vmem:[%s867] sm:$0xff]
      %v869 = vld [vmem:[%s867 + $0x8] sm:$0xff]
      %v870 = vld [vmem:[%s867 + $0x10] sm:$0xff]
      %v871 = vld [vmem:[%s867 + $0x18] sm:$0xff]
      %v872 = vld [vmem:[%s867 + $0x20] sm:$0xff]
      %v873 = vld [vmem:[%s867 + $0x28] sm:$0xff]
      %v874 = vld [vmem:[%s867 + $0x30] sm:$0xff]
      %v875 = vld [vmem:[%s867 + $0x38] sm:$0xff]
      %876 = vrot.lane.b32.xlu0 %v783, 124
      %v877 = vpop.permute.xlu0 %876
      %878 = vrot.lane.b32.xlu0 %v785, 124
      %v879 = vpop.permute.xlu0 %878
      %v880 = vsel %vm233, %v877, 0
      %v882 = vsel %vm233, %v879, 0
      %884 = vmatprep.subr.mxu0 0.0
      %885 = vmatpush1.msra.mxu0 0.0
      %886 = vmatprep.subr.mxu0 0.0
      %887 = vmatpush1.msra.mxu0 0.0
      %888 = vmatprep.subr.mxu0 0.0
      %889 = vmatpush1.msra.mxu0 0.0
      %890 = vmatprep.subr.mxu0 0.0
      %891 = vmatpush1.msra.mxu0 0.0
      %892 = vmatprep.subr.mxu0 0.0
      %893 = vmatpush1.msra.mxu0 0.0
      %894 = vmatprep.subr.mxu0 0.0
      %895 = vmatpush1.msra.mxu0 0.0
      %896 = vmatprep.subr.mxu0 0.0
      %897 = vmatpush1.msra.mxu0 0.0
      %898 = vmatprep.subr.mxu0 0.0
      %899 = vmatpush1.msra.mxu0 0.0
      %900 = vmatprep.subr.mxu0 0.0
      %901 = vmatpush1.msra.mxu0 %v875
      %902 = vmatprep.subr.mxu0 0.0
      %903 = vmatpush1.msra.mxu0 %v874
      %904 = vmatprep.subr.mxu0 0.0
      %905 = vmatpush1.msra.mxu0 %v873
      %906 = vmatprep.subr.mxu0 0.0
      %907 = vmatpush1.msra.mxu0 %v872
      %908 = vmatprep.subr.mxu0 0.0
      %909 = vmatpush1.msra.mxu0 %v871
      %910 = vmatprep.subr.mxu0 0.0
      %911 = vmatpush1.msra.mxu0 %v870
      %912 = vmatprep.subr.mxu0 0.0
      %913 = vmatpush1.msra.mxu0 %v869
      %914 = vmatprep.subr.mxu0 0.0
      %915 = vmatpush1.msra.mxu0 %v868
      %916 = vmatprep.subr.mxu0 0.0
      %917 = vmatpush2.msra.mxu0 0.0
      %918 = vmatprep.subr.mxu0 0.0
      %919 = vmatpush2.msra.mxu0 0.0
      %920 = vmatprep.subr.mxu0 0.0
      %921 = vmatpush2.msra.mxu0 0.0
      %922 = vmatprep.subr.mxu0 0.0
      %923 = vmatpush2.msra.mxu0 0.0
      %924 = vmatprep.subr.mxu0 0.0
      %925 = vmatpush2.msra.mxu0 0.0
      %926 = vmatprep.subr.mxu0 0.0
      %927 = vmatpush2.msra.mxu0 0.0
      %928 = vmatprep.subr.mxu0 0.0
      %929 = vmatpush2.msra.mxu0 0.0
      %930 = vmatprep.subr.mxu0 0.0
      %931 = vmatpush2.msra.mxu0 0.0
      %932 = vmatprep.subr.mxu0 0.0
      %933 = vmatpush2.msra.mxu0 0.0
      %934 = vmatprep.subr.mxu0 0.0
      %935 = vmatpush2.msra.mxu0 0.0
      %936 = vmatprep.subr.mxu0 0.0
      %937 = vmatpush2.msra.mxu0 0.0
      %938 = vmatprep.subr.mxu0 0.0
      %939 = vmatpush2.msra.mxu0 0.0
      %940 = vmatprep.subr.mxu0 0.0
      %941 = vmatpush2.msra.mxu0 0.0
      %942 = vmatprep.subr.mxu0 0.0
      %943 = vmatpush2.msra.mxu0 0.0
      %944 = vmatprep.subr.mxu0 0.0
      %945 = vmatpush2.msra.mxu0 0.0
      %946 = vmatprep.subr.mxu0 0.0
      %947 = vmatpush2.msra.mxu0 0.0
      %948 = vmatprep.mubr.f32.mxu0 0.0
      %949 = vmatmul.mubr.f32.gmra.mxu0 %v880
      %v950 = vpop.f32.mrf.mxu0
      %v951 = vadd.f32 0.0, %v950
      %v952 = vpop.f32.mrf.mxu0
      %953 = vmatprep.mubr.f32.mxu0 0.0
      %954 = vmatmul.mubr.f32.gmra.mxu0 %v882
      %v955 = vpop.f32.mrf.mxu0
      %v956 = vadd.f32 0.0, %v955
      %v957 = vpop.f32.mrf.mxu0
      %958 = vdwg.mxu0
      %v959 = vadd.f32 %v865, %v951
      %v960 = vadd.f32 %v866, %v956
      %s961 = scalar_lea.vmem %s1, 512
      %v962 = vld [vmem:[%s961] sm:$0xff]
      %v963 = vld [vmem:[%s961 + $0x8] sm:$0xff]
      %v964 = vld [vmem:[%s961 + $0x10] sm:$0xff]
      %v965 = vld [vmem:[%s961 + $0x18] sm:$0xff]
      %v966 = vld [vmem:[%s961 + $0x20] sm:$0xff]
      %v967 = vld [vmem:[%s961 + $0x28] sm:$0xff]
      %v968 = vld [vmem:[%s961 + $0x30] sm:$0xff]
      %v969 = vld [vmem:[%s961 + $0x38] sm:$0xff]
      %970 = vrot.lane.b32.xlu0 %v783, 120
      %v971 = vpop.permute.xlu0 %970
      %972 = vrot.lane.b32.xlu0 %v785, 120
      %v973 = vpop.permute.xlu0 %972
      %v974 = vsel %vm233, %v971, 0
      %v976 = vsel %vm233, %v973, 0
      %978 = vmatprep.subr.mxu0 0.0
      %979 = vmatpush1.msra.mxu0 0.0
      %980 = vmatprep.subr.mxu0 0.0
      %981 = vmatpush1.msra.mxu0 0.0
      %982 = vmatprep.subr.mxu0 0.0
      %983 = vmatpush1.msra.mxu0 0.0
      %984 = vmatprep.subr.mxu0 0.0
      %985 = vmatpush1.msra.mxu0 0.0
      %986 = vmatprep.subr.mxu0 0.0
      %987 = vmatpush1.msra.mxu0 0.0
      %988 = vmatprep.subr.mxu0 0.0
      %989 = vmatpush1.msra.mxu0 0.0
      %990 = vmatprep.subr.mxu0 0.0
      %991 = vmatpush1.msra.mxu0 0.0
      %992 = vmatprep.subr.mxu0 0.0
      %993 = vmatpush1.msra.mxu0 0.0
      %994 = vmatprep.subr.mxu0 0.0
      %995 = vmatpush1.msra.mxu0 %v969
      %996 = vmatprep.subr.mxu0 0.0
      %997 = vmatpush1.msra.mxu0 %v968
      %998 = vmatprep.subr.mxu0 0.0
      %999 = vmatpush1.msra.mxu0 %v967
      %1000 = vmatprep.subr.mxu0 0.0
      %1001 = vmatpush1.msra.mxu0 %v966
      %1002 = vmatprep.subr.mxu0 0.0
      %1003 = vmatpush1.msra.mxu0 %v965
      %1004 = vmatprep.subr.mxu0 0.0
      %1005 = vmatpush1.msra.mxu0 %v964
      %1006 = vmatprep.subr.mxu0 0.0
      %1007 = vmatpush1.msra.mxu0 %v963
      %1008 = vmatprep.subr.mxu0 0.0
      %1009 = vmatpush1.msra.mxu0 %v962
      %1010 = vmatprep.subr.mxu0 0.0
      %1011 = vmatpush2.msra.mxu0 0.0
      %1012 = vmatprep.subr.mxu0 0.0
      %1013 = vmatpush2.msra.mxu0 0.0
      %1014 = vmatprep.subr.mxu0 0.0
      %1015 = vmatpush2.msra.mxu0 0.0
      %1016 = vmatprep.subr.mxu0 0.0
      %1017 = vmatpush2.msra.mxu0 0.0
      %1018 = vmatprep.subr.mxu0 0.0
      %1019 = vmatpush2.msra.mxu0 0.0
      %1020 = vmatprep.subr.mxu0 0.0
      %1021 = vmatpush2.msra.mxu0 0.0
      %1022 = vmatprep.subr.mxu0 0.0
      %1023 = vmatpush2.msra.mxu0 0.0
      %1024 = vmatprep.subr.mxu0 0.0
      %1025 = vmatpush2.msra.mxu0 0.0
      %1026 = vmatprep.subr.mxu0 0.0
      %1027 = vmatpush2.msra.mxu0 0.0
      %1028 = vmatprep.subr.mxu0 0.0
      %1029 = vmatpush2.msra.mxu0 0.0
      %1030 = vmatprep.subr.mxu0 0.0
      %1031 = vmatpush2.msra.mxu0 0.0
      %1032 = vmatprep.subr.mxu0 0.0
      %1033 = vmatpush2.msra.mxu0 0.0
      %1034 = vmatprep.subr.mxu0 0.0
      %1035 = vmatpush2.msra.mxu0 0.0
      %1036 = vmatprep.subr.mxu0 0.0
      %1037 = vmatpush2.msra.mxu0 0.0
      %1038 = vmatprep.subr.mxu0 0.0
      %1039 = vmatpush2.msra.mxu0 0.0
      %1040 = vmatprep.subr.mxu0 0.0
      %1041 = vmatpush2.msra.mxu0 0.0
      %1042 = vmatprep.mubr.f32.mxu0 0.0
      %1043 = vmatmul.mubr.f32.gmra.mxu0 %v974
      %v1044 = vpop.f32.mrf.mxu0
      %v1045 = vadd.f32 0.0, %v1044
      %v1046 = vpop.f32.mrf.mxu0
      %1047 = vmatprep.mubr.f32.mxu0 0.0
      %1048 = vmatmul.mubr.f32.gmra.mxu0 %v976
      %v1049 = vpop.f32.mrf.mxu0
      %v1050 = vadd.f32 0.0, %v1049
      %v1051 = vpop.f32.mrf.mxu0
      %1052 = vdwg.mxu0
      %v1053 = vadd.f32 %v959, %v1045
      %v1054 = vadd.f32 %v960, %v1050
      %v1055 = vsel %vm233, %v1053, 0.0
      %v1056 = vsel %vm233, %v1054, 0.0
      %v1057 = vadd.f32 %v1055, %v1056
      %v1058 = vrot.slane %v1057, 4
      %v1059 = vadd.f32 %v1057, %v1058
      %v1060 = vrot.slane %v1059, 2
      %v1061 = vadd.f32 %v1059, %v1060
      %v1062 = vrot.slane %v1061, 1
      %v1063 = vadd.f32 %v1061, %v1062
      %v1064 = vmul.f32 %v1053, %v1053
      %v1065 = vmul.f32 %v1054, %v1054
      %v1066 = vsel %vm233, %v1064, 0.0
      %v1067 = vsel %vm233, %v1065, 0.0
      %v1068 = vadd.f32 %v1066, %v1067
      %v1069 = vrot.slane %v1068, 4
      %v1070 = vadd.f32 %v1068, %v1069
      %v1071 = vrot.slane %v1070, 2
      %v1072 = vadd.f32 %v1070, %v1071
      %v1073 = vrot.slane %v1072, 1
      %v1074 = vadd.f32 %v1072, %v1073
      %v1075 = vsel %vm203, %v1063, %v1074
      %vm1076 = vcmask 517120
      %1077 = vst.msk [vmem:[%s184] sm:$0x3] %vm1076, %v1075
      %1078 = vst.msk [vmem:[%s179] sm:$0xff] %vm233, %v1053
      %1079 = vst.msk [vmem:[%s179 + $0x8] sm:$0xff] %vm233, %v1054
      %s1080 = smul.u32 2, %s15
      %p1081 = scmp.lt.s32.totalorder %s1080, 3
      %s1082 = scalar_select %p1081, %s1080, 3
      %s1083 = smul.addr %s1082, 8
      %s1084 = scalar_lea.vmem %s2, %s1083
      %p1085 = scmp.lt.s32.totalorder %s15, 1
      %s1086 = scalar_select %p1085, %s15, 1
      %s1087 = smul.addr %s1086, 2
      %s1088 = scalar_lea.vmem %s3, %s1087
      // Predicated region
      $region29: #{basic_block_forward.3} parent=27 // pred_check
        %p1089 = pneg %p80
      $region30: #{basic_block_forward.3} parent=27 // pred_check_branch
        %1091 = sbr.rel (%p1089) target = $region32
      $region31: #{basic_block_forward.3} parent=27 // pred_region
        %s1092 = smul.u32 2, %s15
      $region32: #{basic_block_forward.3} parent=27 // pred_fallthru
        _
      // Predicated region
      $region33: #{basic_block_forward.3} parent=27 // pred_check
        %p1093 = pneg %p106
      $region34: #{basic_block_forward.3} parent=27 // pred_check_branch
        %1095 = sbr.rel (%p1093) target = $region36
      $region35: #{basic_block_forward.3} parent=27 // pred_region
        _
      $region36: #{basic_block_forward.3} parent=27 // pred_fallthru
        _
    $region28: #{basic_block_forward.3} parent=5 // pred_fallthru
      _
    %p1096 = scmp.le.s32.totalorder 2, %s10
    // Predicated region
    $region37: #{basic_block_forward.3} parent=5 // pred_check
      %p1097 = pneg %p1096
    $region38: #{basic_block_forward.3} parent=5 // pred_check_branch
      %1099 = sbr.rel (%p1097) target = $region40
    $region39: #{basic_block_forward.3} parent=5 // pred_region
      %s1100 = ssub.s32 %s10, 2
      // Predicated region
      $region41: #{basic_block_forward.3} parent=39 // pred_check
        %p1101 = pneg %p86
      $region42: #{basic_block_forward.3} parent=39 // pred_check_branch
        %1103 = sbr.rel (%p1101) target = $region44
      $region43: #{basic_block_forward.3} parent=39 // pred_region
        %s1104 = smul.u32 2, %s16
        %p1105 = scmp.lt.s32.totalorder %s1104, 3
        %s1106 = scalar_select %p1105, %s1104, 3
        %s1107 = smul.addr %s1106, 8
        %s1108 = scalar_lea.vmem %s2, %s1107
      $region44: #{basic_block_forward.3} parent=39 // pred_fallthru
        _
      // Predicated region
      $region45: #{basic_block_forward.3} parent=39 // pred_check
        %p1109 = pneg %p112
      $region46: #{basic_block_forward.3} parent=39 // pred_check_branch
        %1111 = sbr.rel (%p1109) target = $region48
      $region47: #{basic_block_forward.3} parent=39 // pred_region
        %p1112 = scmp.lt.s32.totalorder %s16, 1
        %s1113 = scalar_select %p1112, %s16, 1
        %s1114 = smul.addr %s1113, 2
        %s1115 = scalar_lea.vmem %s3, %s1114
      $region48: #{basic_block_forward.3} parent=39 // pred_fallthru
        _
    $region40: #{basic_block_forward.3} parent=5 // pred_fallthru
      _
  $region6: #{basic_block_forward.3} parent=0 // loop_footer
    %s14 = sadd.s32 1, %s10
  $region7: #{basic_block_forward.3} parent=0 // loop_footer_branch
    %9 = sbr.rel target = $region3
  $region8: #{basic_block_forward.3} parent=0 // loop_exit
    _

// kernel: basic_block_forward.4
$region0: #{basic_block_forward.4}
  #allocation0 [shape = 'u32[]', space=smem, size = 0x4, offset = 0x4, fixed_abs, tag = 'smem constant byte address 0x4 - core index']
  #allocation1 [shape = 'u32[144,128]{1,0:T(1,128)}', space=vmem, size = 0x12000, scoped, tag = 'internal scratch']
  %s0 = inlined_call_operand.vmem [shape: f32[32,64], index: 0, kind: input, shape index: {}]
  %s1 = inlined_call_operand.vmem [shape: f32[9,64,64], index: 1, kind: input, shape index: {}]
  %s2 = inlined_call_operand.vmem [shape: f32[1,64], index: 2, kind: input, shape index: {}]
  %s3 = inlined_call_operand.vmem [shape: f32[1,64], index: 3, kind: input, shape index: {}]
  %s4 = inlined_call_operand.vmem [shape: f32[32,64], index: 4, kind: output, shape index: {0}]
  %s5 = inlined_call_operand.vmem [shape: f32[2,2,64], index: 5, kind: output, shape index: {1}]
  %6 = xla_tuple %s4, %s5
  %s7 = sld [smem:[#allocation0]]
  $region57: #{basic_block_forward.4} parent=0
    _
  %s9 = ssub.s32 1, %s7
  %s10 = scalar_select 0, %s9, %s7
  loop: start=0, step=1, limit=4
  $region2: #{basic_block_forward.4} parent=0 // loop_pre_header
    _
  $region3: #{basic_block_forward.4} parent=0 // loop_header
    %s12 = sphi 0, %s16
    %p13 = scmp.ge.s32.totalorder %s12, 4
    %s22 = sphi 0, %s24
    %s25 = sphi 0, %s22
    %s26 = sphi 0, %s25
    %s42 = sphi 0, %s26
    %s46 = sphi 0, %s46
    %s48 = sphi 0, %s46
    %s49 = sphi 0, %s48
    %s63 = sphi 0, %s49
    %s67 = sphi 0, %s67
    %s69 = sphi 0, %s67
    %s70 = sphi 0, %s69
    %s84 = sphi 0, %s70
    %s88 = sphi 0, %s88
    %s90 = sphi 0, %s88
    %s91 = sphi 0, %s90
    %s105 = sphi 0, %s91
    %s111 = sphi 0, %s113
    %s114 = sphi 0, %s111
    %s115 = sphi 0, %s114
    %s131 = sphi 0, %s115
    %s137 = sphi 0, %s139
    %s140 = sphi 0, %s137
    %s141 = sphi 0, %s140
    %s157 = sphi 0, %s141
  $region4: #{basic_block_forward.4} parent=0 // loop_header_branch
    %15 = sbr.rel (%p13) target = $region8
  $region5: #{basic_block_forward.4} parent=0 // loop_body
    %s17 = ssub.s32 %s12, 1
    %s18 = ssub.s32 %s12, 2
    %s19 = sadd.s32 %s12, 1
    %s20 = ssub.s32 %s12, %s19
    %p21 = scmp.eq.s32.totalorder %s20, 0
    %s23 = sadd.s32 %s22, 1
    %s24 = scalar_select %p21, %s22, %s23
    %p27 = pneg %p21
    %p28 = scmp.eq.s32.totalorder %s12, 1
    %p29 = por %p27, %p28
    %p30 = scmp.ne.s32.totalorder %s22, %s25
    %p31 = scmp.eq.s32.totalorder %s12, 0
    %p32 = por %p30, %p31
    %p33 = scmp.ne.s32.totalorder %s22, %s25
    %p34 = scmp.eq.s32.totalorder %s17, 1
    %p35 = por %p33, %p34
    %p36 = scmp.ne.s32.totalorder %s25, %s26
    %p37 = scmp.eq.s32.totalorder %s17, 0
    %p38 = por %p36, %p37
    %p39 = scmp.ne.s32.totalorder %s25, %s26
    %p40 = scmp.eq.s32.totalorder %s18, 1
    %p41 = por %p39, %p40
    %p43 = scmp.ne.s32.totalorder %s26, %s42
    %p44 = scmp.eq.s32.totalorder %s18, 0
    %p45 = por %p43, %p44
    %s47 = sadd.s32 %s46, 1
    %p50 = scmp.eq.s32.totalorder %s12, 1
    %p51 = scmp.ne.s32.totalorder %s46, %s48
    %p52 = scmp.eq.s32.totalorder %s12, 0
    %p53 = por %p51, %p52
    %p54 = scmp.ne.s32.totalorder %s46, %s48
    %p55 = scmp.eq.s32.totalorder %s17, 1
    %p56 = por %p54, %p55
    %p57 = scmp.ne.s32.totalorder %s48, %s49
    %p58 = scmp.eq.s32.totalorder %s17, 0
    %p59 = por %p57, %p58
    %p60 = scmp.ne.s32.totalorder %s48, %s49
    %p61 = scmp.eq.s32.totalorder %s18, 1
    %p62 = por %p60, %p61
    %p64 = scmp.ne.s32.totalorder %s49, %s63
    %p65 = scmp.eq.s32.totalorder %s18, 0
    %p66 = por %p64, %p65
    %s68 = sadd.s32 %s67, 1
    %p71 = scmp.eq.s32.totalorder %s12, 1
    %p72 = scmp.ne.s32.totalorder %s67, %s69
    %p73 = scmp.eq.s32.totalorder %s12, 0
    %p74 = por %p72, %p73
    %p75 = scmp.ne.s32.totalorder %s67, %s69
    %p76 = scmp.eq.s32.totalorder %s17, 1
    %p77 = por %p75, %p76
    %p78 = scmp.ne.s32.totalorder %s69, %s70
    %p79 = scmp.eq.s32.totalorder %s17, 0
    %p80 = por %p78, %p79
    %p81 = scmp.ne.s32.totalorder %s69, %s70
    %p82 = scmp.eq.s32.totalorder %s18, 1
    %p83 = por %p81, %p82
    %p85 = scmp.ne.s32.totalorder %s70, %s84
    %p86 = scmp.eq.s32.totalorder %s18, 0
    %p87 = por %p85, %p86
    %s89 = sadd.s32 %s88, 1
    %p92 = scmp.eq.s32.totalorder %s12, 1
    %p93 = scmp.ne.s32.totalorder %s88, %s90
    %p94 = scmp.eq.s32.totalorder %s12, 0
    %p95 = por %p93, %p94
    %p96 = scmp.ne.s32.totalorder %s88, %s90
    %p97 = scmp.eq.s32.totalorder %s17, 1
    %p98 = por %p96, %p97
    %p99 = scmp.ne.s32.totalorder %s90, %s91
    %p100 = scmp.eq.s32.totalorder %s17, 0
    %p101 = por %p99, %p100
    %p102 = scmp.ne.s32.totalorder %s90, %s91
    %p103 = scmp.eq.s32.totalorder %s18, 1
    %p104 = por %p102, %p103
    %p106 = scmp.ne.s32.totalorder %s91, %s105
    %p107 = scmp.eq.s32.totalorder %s18, 0
    %p108 = por %p106, %p107
    %s109 = ssub.s32 %s12, %s19
    %p110 = scmp.eq.s32.totalorder %s109, 0
    %s112 = sadd.s32 %s111, 1
    %s113 = scalar_select %p110, %s111, %s112
    %p116 = pneg %p110
    %p117 = scmp.eq.s32.totalorder %s12, 1
    %p118 = por %p116, %p117
    %p119 = scmp.ne.s32.totalorder %s111, %s114
    %p120 = scmp.eq.s32.totalorder %s12, 0
    %p121 = por %p119, %p120
    %p122 = scmp.ne.s32.totalorder %s111, %s114
    %p123 = scmp.eq.s32.totalorder %s17, 1
    %p124 = por %p122, %p123
    %p125 = scmp.ne.s32.totalorder %s114, %s115
    %p126 = scmp.eq.s32.totalorder %s17, 0
    %p127 = por %p125, %p126
    %p128 = scmp.ne.s32.totalorder %s114, %s115
    %p129 = scmp.eq.s32.totalorder %s18, 1
    %p130 = por %p128, %p129
    %p132 = scmp.ne.s32.totalorder %s115, %s131
    %p133 = scmp.eq.s32.totalorder %s18, 0
    %p134 = por %p132, %p133
    %s135 = ssub.s32 %s12, %s19
    %p136 = scmp.eq.s32.totalorder %s135, 0
    %s138 = sadd.s32 %s137, 1
    %s139 = scalar_select %p136, %s137, %s138
    %p142 = pneg %p136
    %p143 = scmp.eq.s32.totalorder %s12, 1
    %p144 = por %p142, %p143
    %p145 = scmp.ne.s32.totalorder %s137, %s140
    %p146 = scmp.eq.s32.totalorder %s12, 0
    %p147 = por %p145, %p146
    %p148 = scmp.ne.s32.totalorder %s137, %s140
    %p149 = scmp.eq.s32.totalorder %s17, 1
    %p150 = por %p148, %p149
    %p151 = scmp.ne.s32.totalorder %s140, %s141
    %p152 = scmp.eq.s32.totalorder %s17, 0
    %p153 = por %p151, %p152
    %p154 = scmp.ne.s32.totalorder %s140, %s141
    %p155 = scmp.eq.s32.totalorder %s18, 1
    %p156 = por %p154, %p155
    %p158 = scmp.ne.s32.totalorder %s141, %s157
    %p159 = scmp.eq.s32.totalorder %s18, 0
    %p160 = por %p158, %p159
    %p161 = scmp.le.s32.totalorder 1, %s12
    %p162 = scmp.lt.s32.totalorder %s12, 3
    %p163 = pnand %p161, %p162
    %p164 = pneg %p163
    // Predicated region
    $region9: #{basic_block_forward.4} parent=5 // pred_check
      _
    $region10: #{basic_block_forward.4} parent=5 // pred_check_branch
      %166 = sbr.rel (%p163) target = $region12
    $region11: #{basic_block_forward.4} parent=5 // pred_region
      %s167 = ssub.s32 %s12, 1
      // Predicated region
      $region13: #{basic_block_forward.4} parent=11 // pred_check
        %p168 = pneg %p59
      $region14: #{basic_block_forward.4} parent=11 // pred_check_branch
        %170 = sbr.rel (%p168) target = $region16
      $region15: #{basic_block_forward.4} parent=11 // pred_region
        _
      $region16: #{basic_block_forward.4} parent=11 // pred_fallthru
        _
      // Predicated region
      $region17: #{basic_block_forward.4} parent=11 // pred_check
        %p171 = pneg %p80
      $region18: #{basic_block_forward.4} parent=11 // pred_check_branch
        %173 = sbr.rel (%p171) target = $region20
      $region19: #{basic_block_forward.4} parent=11 // pred_region
        _
      $region20: #{basic_block_forward.4} parent=11 // pred_fallthru
        _
      // Predicated region
      $region21: #{basic_block_forward.4} parent=11 // pred_check
        %p174 = pneg %p101
      $region22: #{basic_block_forward.4} parent=11 // pred_check_branch
        %176 = sbr.rel (%p174) target = $region24
      $region23: #{basic_block_forward.4} parent=11 // pred_region
        _
      $region24: #{basic_block_forward.4} parent=11 // pred_fallthru
        _
    $region12: #{basic_block_forward.4} parent=5 // pred_fallthru
      _
    %p177 = scmp.lt.s32.totalorder %s12, 2
    // Predicated region
    $region25: #{basic_block_forward.4} parent=5 // pred_check
      %p178 = pneg %p177
    $region26: #{basic_block_forward.4} parent=5 // pred_check_branch
      %180 = sbr.rel (%p178) target = $region28
    $region27: #{basic_block_forward.4} parent=5 // pred_region
      // Predicated region
      $region29: #{basic_block_forward.4} parent=27 // pred_check
        %p181 = pneg %p32
      $region30: #{basic_block_forward.4} parent=27 // pred_check_branch
        %183 = sbr.rel (%p181) target = $region32
      $region31: #{basic_block_forward.4} parent=27 // pred_region
        %s184 = smul.u32 2, %s12
        %p185 = scmp.lt.s32.totalorder %s184, 3
        %s186 = scalar_select %p185, %s184, 3
        %s187 = smul.addr %s186, 8
        %s188 = scalar_lea.vmem %s0, %s187
        %s189 = smul.u32 2, %s12
      $region32: #{basic_block_forward.4} parent=27 // pred_fallthru
        _
    $region28: #{basic_block_forward.4} parent=5 // pred_fallthru
      _
    %p190 = scmp.le.s32.totalorder 1, %s12
    %p191 = scmp.lt.s32.totalorder %s12, 3
    %p192 = pnand %p190, %p191
    %p193 = pneg %p192
    // Predicated region
    $region33: #{basic_block_forward.4} parent=5 // pred_check
      _
    $region34: #{basic_block_forward.4} parent=5 // pred_check_branch
      %195 = sbr.rel (%p192) target = $region36
    $region35: #{basic_block_forward.4} parent=5 // pred_region
      %s196 = ssub.s32 %s12, 1
      %s197 = smul.u32 2, %s17
      %p198 = scmp.lt.s32.totalorder %s197, 3
      %s199 = scalar_select %p198, %s197, 3
      %s200 = smul.addr %s199, 8
      %s201 = scalar_lea.vmem %s0, %s200
      %p202 = pneg %p38
      %p203 = pneg %p35
      %p204 = pneg %p59
      %p205 = pneg %p56
      %p206 = pneg %p80
      %p207 = pneg %p77
      %p208 = pneg %p101
      %p209 = pneg %p98
      %p210 = pneg %p127
      %p211 = pneg %p124
      %s212 = smul.u32 2, %s17
      %p213 = scmp.lt.s32.totalorder %s212, 3
      %s214 = scalar_select %p213, %s212, 3
      %s215 = smul.addr %s214, 8
      %s216 = scalar_lea.vmem %s4, %s215
      %p217 = pneg %p153
      %p218 = pneg %p150
      %p219 = scmp.lt.s32.totalorder %s17, 1
      %s220 = scalar_select %p219, %s17, 1
      %s221 = smul.addr %s220, 2
      %s222 = scalar_lea.vmem %s5, %s221
      %s223 = smul.u32 2, %s17
      %p224 = scmp.lt.s32.totalorder %s223, 3
      %s225 = scalar_select %p224, %s223, 3
      %s226 = smul.addr %s225, 8
      %s227 = scalar_lea.vmem %s0, %s226
      %s228 = smul.u32 2, %s17
      %s229 = smul.u32 2, %s17
      %p230 = scmp.lt.s32.totalorder %s229, 3
      %s231 = scalar_select %p230, %s229, 3
      %s232 = smul.addr %s231, 8
      %s233 = scalar_lea.vmem %s4, %s232
      %s234 = smul.u32 2, %s17
      %p235 = scmp.lt.s32.totalorder %s17, 1
      %s236 = scalar_select %p235, %s17, 1
      %s237 = smul.addr %s236, 2
      %s238 = scalar_lea.vmem %s5, %s237
      %v239 = vld [vmem:[%s227] sm:$0xff]
      %v240 = vld [vmem:[%s227 + $0x8] sm:$0xff]
      %v241 = vld [vmem:[%s2] sm:$0x1]
      %v243 = vlaneseq
      %v244 = vshrl.u32 %v243, 7
      %v245 = vsub.s32 0, %v244
      %v246 = vrot.slane %v241, %v245
      %v248 = vmul.f32 %v239, %v246
      %v249 = vmul.f32 %v240, %v246
      %v250 = vld [vmem:[%s3] sm:$0x1]
      %v252 = vlaneseq
      %v253 = vshrl.u32 %v252, 7
      %v254 = vsub.s32 0, %v253
      %v255 = vrot.slane %v250, %v254
      %v257 = vadd.f32 %v248, %v255
      %v258 = vadd.f32 %v249, %v255
      %v259 = vmax.f32 %v257, 0.0
      %v260 = vmax.f32 %v258, 0.0
      %263 = vrot.lane.b32.xlu0 %v259, 4
      %v264 = vpop.permute.xlu0 %263
      %265 = vrot.lane.b32.xlu0 %v260, 4
      %v266 = vpop.permute.xlu0 %265
      %vm269 = vcmask 31744
      %v270 = vsel %vm269, 0.0, %v264
      %v271 = vsel %vm269, 0.0, %v266
      %vm272 = vcmask 556032
      %v273 = vsel %vm272, %v270, 0.0
      %v274 = vsel %vm272, %v271, 0.0
      %vm277 = vcmask 1040384
      %v278 = vrot.slane %v273, 7
      %v279 = vrot.slane %v274, 7
      %v280 = vsel %vm277, %v278, %v279
      %v283 = vsel %vm277, 0.0, %v278
      %v284 = vsel %vm277, %v279, 0.0
      %v285 = vld [vmem:[%s1] sm:$0xff]
      %v286 = vld [vmem:[%s1 + $0x8] sm:$0xff]
      %v287 = vld [vmem:[%s1 + $0x10] sm:$0xff]
      %v288 = vld [vmem:[%s1 + $0x18] sm:$0xff]
      %v289 = vld [vmem:[%s1 + $0x20] sm:$0xff]
      %v290 = vld [vmem:[%s1 + $0x28] sm:$0xff]
      %v291 = vld [vmem:[%s1 + $0x30] sm:$0xff]
      %v292 = vld [vmem:[%s1 + $0x38] sm:$0xff]
      %s293 = scalar_lea.vmem %s1, 64
      %v294 = vld [vmem:[%s293] sm:$0xff]
      %v295 = vld [vmem:[%s293 + $0x8] sm:$0xff]
      %v296 = vld [vmem:[%s293 + $0x10] sm:$0xff]
      %v297 = vld [vmem:[%s293 + $0x18] sm:$0xff]
      %v298 = vld [vmem:[%s293 + $0x20] sm:$0xff]
      %v299 = vld [vmem:[%s293 + $0x28] sm:$0xff]
      %v300 = vld [vmem:[%s293 + $0x30] sm:$0xff]
      %v301 = vld [vmem:[%s293 + $0x38] sm:$0xff]
      %303 = vrot.lane.b32.xlu0 %v283, 124
      %v304 = vpop.permute.xlu0 %303
      %305 = vrot.lane.b32.xlu0 %v280, 124
      %v306 = vpop.permute.xlu0 %305
      %vm307 = vcmask 523264
      %v308 = vsel %vm307, %v304, 0
      %v310 = vsel %vm307, %v306, 0
      %312 = vmatprep.subr.mxu0 0.0
      %313 = vmatpush1.msra.mxu0 0.0
      %314 = vmatprep.subr.mxu0 0.0
      %315 = vmatpush1.msra.mxu0 0.0
      %316 = vmatprep.subr.mxu0 0.0
      %317 = vmatpush1.msra.mxu0 0.0
      %318 = vmatprep.subr.mxu0 0.0
      %319 = vmatpush1.msra.mxu0 0.0
      %320 = vmatprep.subr.mxu0 0.0
      %321 = vmatpush1.msra.mxu0 0.0
      %322 = vmatprep.subr.mxu0 0.0
      %323 = vmatpush1.msra.mxu0 0.0
      %324 = vmatprep.subr.mxu0 0.0
      %325 = vmatpush1.msra.mxu0 0.0
      %326 = vmatprep.subr.mxu0 0.0
      %327 = vmatpush1.msra.mxu0 0.0
      %328 = vmatprep.subr.mxu0 0.0
      %329 = vmatpush1.msra.mxu0 %v301
      %330 = vmatprep.subr.mxu0 0.0
      %331 = vmatpush1.msra.mxu0 %v300
      %332 = vmatprep.subr.mxu0 0.0
      %333 = vmatpush1.msra.mxu0 %v299
      %334 = vmatprep.subr.mxu0 0.0
      %335 = vmatpush1.msra.mxu0 %v298
      %336 = vmatprep.subr.mxu0 0.0
      %337 = vmatpush1.msra.mxu0 %v297
      %338 = vmatprep.subr.mxu0 0.0
      %339 = vmatpush1.msra.mxu0 %v296
      %340 = vmatprep.subr.mxu0 0.0
      %341 = vmatpush1.msra.mxu0 %v295
      %342 = vmatprep.subr.mxu0 0.0
      %343 = vmatpush1.msra.mxu0 %v294
      %344 = vmatprep.subr.mxu0 0.0
      %345 = vmatpush2.msra.mxu0 0.0
      %346 = vmatprep.subr.mxu0 0.0
      %347 = vmatpush2.msra.mxu0 0.0
      %348 = vmatprep.subr.mxu0 0.0
      %349 = vmatpush2.msra.mxu0 0.0
      %350 = vmatprep.subr.mxu0 0.0
      %351 = vmatpush2.msra.mxu0 0.0
      %352 = vmatprep.subr.mxu0 0.0
      %353 = vmatpush2.msra.mxu0 0.0
      %354 = vmatprep.subr.mxu0 0.0
      %355 = vmatpush2.msra.mxu0 0.0
      %356 = vmatprep.subr.mxu0 0.0
      %357 = vmatpush2.msra.mxu0 0.0
      %358 = vmatprep.subr.mxu0 0.0
      %359 = vmatpush2.msra.mxu0 0.0
      %360 = vmatprep.subr.mxu0 0.0
      %361 = vmatpush2.msra.mxu0 0.0
      %362 = vmatprep.subr.mxu0 0.0
      %363 = vmatpush2.msra.mxu0 0.0
      %364 = vmatprep.subr.mxu0 0.0
      %365 = vmatpush2.msra.mxu0 0.0
      %366 = vmatprep.subr.mxu0 0.0
      %367 = vmatpush2.msra.mxu0 0.0
      %368 = vmatprep.subr.mxu0 0.0
      %369 = vmatpush2.msra.mxu0 0.0
      %370 = vmatprep.subr.mxu0 0.0
      %371 = vmatpush2.msra.mxu0 0.0
      %372 = vmatprep.subr.mxu0 0.0
      %373 = vmatpush2.msra.mxu0 0.0
      %374 = vmatprep.subr.mxu0 0.0
      %375 = vmatpush2.msra.mxu0 0.0
      %376 = vmatprep.mubr.f32.mxu0 0.0
      %377 = vmatmul.mubr.f32.gmra.mxu0 %v308
      %v378 = vpop.f32.mrf.mxu0
      %v379 = vadd.f32 0.0, %v378
      %v380 = vpop.f32.mrf.mxu0
      %381 = vmatprep.mubr.f32.mxu0 0.0
      %382 = vmatmul.mubr.f32.gmra.mxu0 %v310
      %v383 = vpop.f32.mrf.mxu0
      %v384 = vadd.f32 0.0, %v383
      %v385 = vpop.f32.mrf.mxu0
      %386 = vdwg.mxu0
      %v387 = vsel %vm307, %v283, 0
      %v389 = vsel %vm307, %v280, 0
      %391 = vmatprep.subr.mxu0 0.0
      %392 = vmatpush1.msra.mxu0 0.0
      %393 = vmatprep.subr.mxu0 0.0
      %394 = vmatpush1.msra.mxu0 0.0
      %395 = vmatprep.subr.mxu0 0.0
      %396 = vmatpush1.msra.mxu0 0.0
      %397 = vmatprep.subr.mxu0 0.0
      %398 = vmatpush1.msra.mxu0 0.0
      %399 = vmatprep.subr.mxu0 0.0
      %400 = vmatpush1.msra.mxu0 0.0
      %401 = vmatprep.subr.mxu0 0.0
      %402 = vmatpush1.msra.mxu0 0.0
      %403 = vmatprep.subr.mxu0 0.0
      %404 = vmatpush1.msra.mxu0 0.0
      %405 = vmatprep.subr.mxu0 0.0
      %406 = vmatpush1.msra.mxu0 0.0
      %407 = vmatprep.subr.mxu0 0.0
      %408 = vmatpush1.msra.mxu0 %v292
      %409 = vmatprep.subr.mxu0 0.0
      %410 = vmatpush1.msra.mxu0 %v291
      %411 = vmatprep.subr.mxu0 0.0
      %412 = vmatpush1.msra.mxu0 %v290
      %413 = vmatprep.subr.mxu0 0.0
      %414 = vmatpush1.msra.mxu0 %v289
      %415 = vmatprep.subr.mxu0 0.0
      %416 = vmatpush1.msra.mxu0 %v288
      %417 = vmatprep.subr.mxu0 0.0
      %418 = vmatpush1.msra.mxu0 %v287
      %419 = vmatprep.subr.mxu0 0.0
      %420 = vmatpush1.msra.mxu0 %v286
      %421 = vmatprep.subr.mxu0 0.0
      %422 = vmatpush1.msra.mxu0 %v285
      %423 = vmatprep.subr.mxu0 0.0
      %424 = vmatpush2.msra.mxu0 0.0
      %425 = vmatprep.subr.mxu0 0.0
      %426 = vmatpush2.msra.mxu0 0.0
      %427 = vmatprep.subr.mxu0 0.0
      %428 = vmatpush2.msra.mxu0 0.0
      %429 = vmatprep.subr.mxu0 0.0
      %430 = vmatpush2.msra.mxu0 0.0
      %431 = vmatprep.subr.mxu0 0.0
      %432 = vmatpush2.msra.mxu0 0.0
      %433 = vmatprep.subr.mxu0 0.0
      %434 = vmatpush2.msra.mxu0 0.0
      %435 = vmatprep.subr.mxu0 0.0
      %436 = vmatpush2.msra.mxu0 0.0
      %437 = vmatprep.subr.mxu0 0.0
      %438 = vmatpush2.msra.mxu0 0.0
      %439 = vmatprep.subr.mxu0 0.0
      %440 = vmatpush2.msra.mxu0 0.0
      %441 = vmatprep.subr.mxu0 0.0
      %442 = vmatpush2.msra.mxu0 0.0
      %443 = vmatprep.subr.mxu0 0.0
      %444 = vmatpush2.msra.mxu0 0.0
      %445 = vmatprep.subr.mxu0 0.0
      %446 = vmatpush2.msra.mxu0 0.0
      %447 = vmatprep.subr.mxu0 0.0
      %448 = vmatpush2.msra.mxu0 0.0
      %449 = vmatprep.subr.mxu0 0.0
      %450 = vmatpush2.msra.mxu0 0.0
      %451 = vmatprep.subr.mxu0 0.0
      %452 = vmatpush2.msra.mxu0 0.0
      %453 = vmatprep.subr.mxu0 0.0
      %454 = vmatpush2.msra.mxu0 0.0
      %455 = vmatprep.mubr.f32.mxu0 0.0
      %456 = vmatmul.mubr.f32.gmra.mxu0 %v387
      %v457 = vpop.f32.mrf.mxu0
      %v458 = vadd.f32 %v379, %v457
      %v459 = vpop.f32.mrf.mxu0
      %460 = vmatprep.mubr.f32.mxu0 0.0
      %461 = vmatmul.mubr.f32.gmra.mxu0 %v389
      %v462 = vpop.f32.mrf.mxu0
      %v463 = vadd.f32 %v384, %v462
      %v464 = vpop.f32.mrf.mxu0
      %465 = vdwg.mxu0
      %s466 = scalar_lea.vmem %s1, 128
      %v467 = vld [vmem:[%s466] sm:$0xff]
      %v468 = vld [vmem:[%s466 + $0x8] sm:$0xff]
      %v469 = vld [vmem:[%s466 + $0x10] sm:$0xff]
      %v470 = vld [vmem:[%s466 + $0x18] sm:$0xff]
      %v471 = vld [vmem:[%s466 + $0x20] sm:$0xff]
      %v472 = vld [vmem:[%s466 + $0x28] sm:$0xff]
      %v473 = vld [vmem:[%s466 + $0x30] sm:$0xff]
      %v474 = vld [vmem:[%s466 + $0x38] sm:$0xff]
      %475 = vrot.lane.b32.xlu0 %v283, 120
      %v476 = vpop.permute.xlu0 %475
      %477 = vrot.lane.b32.xlu0 %v280, 120
      %v478 = vpop.permute.xlu0 %477
      %v479 = vsel %vm307, %v476, 0
      %v481 = vsel %vm307, %v478, 0
      %483 = vmatprep.subr.mxu0 0.0
      %484 = vmatpush1.msra.mxu0 0.0
      %485 = vmatprep.subr.mxu0 0.0
      %486 = vmatpush1.msra.mxu0 0.0
      %487 = vmatprep.subr.mxu0 0.0
      %488 = vmatpush1.msra.mxu0 0.0
      %489 = vmatprep.subr.mxu0 0.0
      %490 = vmatpush1.msra.mxu0 0.0
      %491 = vmatprep.subr.mxu0 0.0
      %492 = vmatpush1.msra.mxu0 0.0
      %493 = vmatprep.subr.mxu0 0.0
      %494 = vmatpush1.msra.mxu0 0.0
      %495 = vmatprep.subr.mxu0 0.0
      %496 = vmatpush1.msra.mxu0 0.0
      %497 = vmatprep.subr.mxu0 0.0
      %498 = vmatpush1.msra.mxu0 0.0
      %499 = vmatprep.subr.mxu0 0.0
      %500 = vmatpush1.msra.mxu0 %v474
      %501 = vmatprep.subr.mxu0 0.0
      %502 = vmatpush1.msra.mxu0 %v473
      %503 = vmatprep.subr.mxu0 0.0
      %504 = vmatpush1.msra.mxu0 %v472
      %505 = vmatprep.subr.mxu0 0.0
      %506 = vmatpush1.msra.mxu0 %v471
      %507 = vmatprep.subr.mxu0 0.0
      %508 = vmatpush1.msra.mxu0 %v470
      %509 = vmatprep.subr.mxu0 0.0
      %510 = vmatpush1.msra.mxu0 %v469
      %511 = vmatprep.subr.mxu0 0.0
      %512 = vmatpush1.msra.mxu0 %v468
      %513 = vmatprep.subr.mxu0 0.0
      %514 = vmatpush1.msra.mxu0 %v467
      %515 = vmatprep.subr.mxu0 0.0
      %516 = vmatpush2.msra.mxu0 0.0
      %517 = vmatprep.subr.mxu0 0.0
      %518 = vmatpush2.msra.mxu0 0.0
      %519 = vmatprep.subr.mxu0 0.0
      %520 = vmatpush2.msra.mxu0 0.0
      %521 = vmatprep.subr.mxu0 0.0
      %522 = vmatpush2.msra.mxu0 0.0
      %523 = vmatprep.subr.mxu0 0.0
      %524 = vmatpush2.msra.mxu0 0.0
      %525 = vmatprep.subr.mxu0 0.0
      %526 = vmatpush2.msra.mxu0 0.0
      %527 = vmatprep.subr.mxu0 0.0
      %528 = vmatpush2.msra.mxu0 0.0
      %529 = vmatprep.subr.mxu0 0.0
      %530 = vmatpush2.msra.mxu0 0.0
      %531 = vmatprep.subr.mxu0 0.0
      %532 = vmatpush2.msra.mxu0 0.0
      %533 = vmatprep.subr.mxu0 0.0
      %534 = vmatpush2.msra.mxu0 0.0
      %535 = vmatprep.subr.mxu0 0.0
      %536 = vmatpush2.msra.mxu0 0.0
      %537 = vmatprep.subr.mxu0 0.0
      %538 = vmatpush2.msra.mxu0 0.0
      %539 = vmatprep.subr.mxu0 0.0
      %540 = vmatpush2.msra.mxu0 0.0
      %541 = vmatprep.subr.mxu0 0.0
      %542 = vmatpush2.msra.mxu0 0.0
      %543 = vmatprep.subr.mxu0 0.0
      %544 = vmatpush2.msra.mxu0 0.0
      %545 = vmatprep.subr.mxu0 0.0
      %546 = vmatpush2.msra.mxu0 0.0
      %547 = vmatprep.mubr.f32.mxu0 0.0
      %548 = vmatmul.mubr.f32.gmra.mxu0 %v479
      %v549 = vpop.f32.mrf.mxu0
      %v550 = vadd.f32 0.0, %v549
      %v551 = vpop.f32.mrf.mxu0
      %552 = vmatprep.mubr.f32.mxu0 0.0
      %553 = vmatmul.mubr.f32.gmra.mxu0 %v481
      %v554 = vpop.f32.mrf.mxu0
      %v555 = vadd.f32 0.0, %v554
      %v556 = vpop.f32.mrf.mxu0
      %557 = vdwg.mxu0
      %v558 = vadd.f32 %v458, %v550
      %v559 = vadd.f32 %v463, %v555
      %s560 = scalar_lea.vmem %s1, 192
      %v561 = vld [vmem:[%s560] sm:$0xff]
      %v562 = vld [vmem:[%s560 + $0x8] sm:$0xff]
      %v563 = vld [vmem:[%s560 + $0x10] sm:$0xff]
      %v564 = vld [vmem:[%s560 + $0x18] sm:$0xff]
      %v565 = vld [vmem:[%s560 + $0x20] sm:$0xff]
      %v566 = vld [vmem:[%s560 + $0x28] sm:$0xff]
      %v567 = vld [vmem:[%s560 + $0x30] sm:$0xff]
      %v568 = vld [vmem:[%s560 + $0x38] sm:$0xff]
      %vm570 = vcmask 1046528
      %v571 = vrot.slane %v283, 1
      %v572 = vrot.slane %v280, 1
      %v573 = vsel %vm570, %v571, %v572
      %v574 = vrot.slane %v284, 1
      %v575 = vsel %vm570, %v572, %v574
      %v576 = vsel %vm307, %v573, 0
      %v578 = vsel %vm307, %v575, 0
      %580 = vmatprep.subr.mxu0 0.0
      %581 = vmatpush1.msra.mxu0 0.0
      %582 = vmatprep.subr.mxu0 0.0
      %583 = vmatpush1.msra.mxu0 0.0
      %584 = vmatprep.subr.mxu0 0.0
      %585 = vmatpush1.msra.mxu0 0.0
      %586 = vmatprep.subr.mxu0 0.0
      %587 = vmatpush1.msra.mxu0 0.0
      %588 = vmatprep.subr.mxu0 0.0
      %589 = vmatpush1.msra.mxu0 0.0
      %590 = vmatprep.subr.mxu0 0.0
      %591 = vmatpush1.msra.mxu0 0.0
      %592 = vmatprep.subr.mxu0 0.0
      %593 = vmatpush1.msra.mxu0 0.0
      %594 = vmatprep.subr.mxu0 0.0
      %595 = vmatpush1.msra.mxu0 0.0
      %596 = vmatprep.subr.mxu0 0.0
      %597 = vmatpush1.msra.mxu0 %v568
      %598 = vmatprep.subr.mxu0 0.0
      %599 = vmatpush1.msra.mxu0 %v567
      %600 = vmatprep.subr.mxu0 0.0
      %601 = vmatpush1.msra.mxu0 %v566
      %602 = vmatprep.subr.mxu0 0.0
      %603 = vmatpush1.msra.mxu0 %v565
      %604 = vmatprep.subr.mxu0 0.0
      %605 = vmatpush1.msra.mxu0 %v564
      %606 = vmatprep.subr.mxu0 0.0
      %607 = vmatpush1.msra.mxu0 %v563
      %608 = vmatprep.subr.mxu0 0.0
      %609 = vmatpush1.msra.mxu0 %v562
      %610 = vmatprep.subr.mxu0 0.0
      %611 = vmatpush1.msra.mxu0 %v561
      %612 = vmatprep.subr.mxu0 0.0
      %613 = vmatpush2.msra.mxu0 0.0
      %614 = vmatprep.subr.mxu0 0.0
      %615 = vmatpush2.msra.mxu0 0.0
      %616 = vmatprep.subr.mxu0 0.0
      %617 = vmatpush2.msra.mxu0 0.0
      %618 = vmatprep.subr.mxu0 0.0
      %619 = vmatpush2.msra.mxu0 0.0
      %620 = vmatprep.subr.mxu0 0.0
      %621 = vmatpush2.msra.mxu0 0.0
      %622 = vmatprep.subr.mxu0 0.0
      %623 = vmatpush2.msra.mxu0 0.0
      %624 = vmatprep.subr.mxu0 0.0
      %625 = vmatpush2.msra.mxu0 0.0
      %626 = vmatprep.subr.mxu0 0.0
      %627 = vmatpush2.msra.mxu0 0.0
      %628 = vmatprep.subr.mxu0 0.0
      %629 = vmatpush2.msra.mxu0 0.0
      %630 = vmatprep.subr.mxu0 0.0
      %631 = vmatpush2.msra.mxu0 0.0
      %632 = vmatprep.subr.mxu0 0.0
      %633 = vmatpush2.msra.mxu0 0.0
      %634 = vmatprep.subr.mxu0 0.0
      %635 = vmatpush2.msra.mxu0 0.0
      %636 = vmatprep.subr.mxu0 0.0
      %637 = vmatpush2.msra.mxu0 0.0
      %638 = vmatprep.subr.mxu0 0.0
      %639 = vmatpush2.msra.mxu0 0.0
      %640 = vmatprep.subr.mxu0 0.0
      %641 = vmatpush2.msra.mxu0 0.0
      %642 = vmatprep.subr.mxu0 0.0
      %643 = vmatpush2.msra.mxu0 0.0
      %644 = vmatprep.mubr.f32.mxu0 0.0
      %645 = vmatmul.mubr.f32.gmra.mxu0 %v576
      %v646 = vpop.f32.mrf.mxu0
      %v647 = vadd.f32 0.0, %v646
      %v648 = vpop.f32.mrf.mxu0
      %649 = vmatprep.mubr.f32.mxu0 0.0
      %650 = vmatmul.mubr.f32.gmra.mxu0 %v578
      %v651 = vpop.f32.mrf.mxu0
      %v652 = vadd.f32 0.0, %v651
      %v653 = vpop.f32.mrf.mxu0
      %654 = vdwg.mxu0
      %v655 = vadd.f32 %v558, %v647
      %v656 = vadd.f32 %v559, %v652
      %s657 = scalar_lea.vmem %s1, 256
      %v658 = vld [vmem:[%s657] sm:$0xff]
      %v659 = vld [vmem:[%s657 + $0x8] sm:$0xff]
      %v660 = vld [vmem:[%s657 + $0x10] sm:$0xff]
      %v661 = vld [vmem:[%s657 + $0x18] sm:$0xff]
      %v662 = vld [vmem:[%s657 + $0x20] sm:$0xff]
      %v663 = vld [vmem:[%s657 + $0x28] sm:$0xff]
      %v664 = vld [vmem:[%s657 + $0x30] sm:$0xff]
      %v665 = vld [vmem:[%s657 + $0x38] sm:$0xff]
      %666 = vrot.lane.b32.xlu0 %v573, 124
      %v667 = vpop.permute.xlu0 %666
      %668 = vrot.lane.b32.xlu0 %v575, 124
      %v669 = vpop.permute.xlu0 %668
      %v670 = vsel %vm307, %v667, 0
      %v672 = vsel %vm307, %v669, 0
      %674 = vmatprep.subr.mxu0 0.0
      %675 = vmatpush1.msra.mxu0 0.0
      %676 = vmatprep.subr.mxu0 0.0
      %677 = vmatpush1.msra.mxu0 0.0
      %678 = vmatprep.subr.mxu0 0.0
      %679 = vmatpush1.msra.mxu0 0.0
      %680 = vmatprep.subr.mxu0 0.0
      %681 = vmatpush1.msra.mxu0 0.0
      %682 = vmatprep.subr.mxu0 0.0
      %683 = vmatpush1.msra.mxu0 0.0
      %684 = vmatprep.subr.mxu0 0.0
      %685 = vmatpush1.msra.mxu0 0.0
      %686 = vmatprep.subr.mxu0 0.0
      %687 = vmatpush1.msra.mxu0 0.0
      %688 = vmatprep.subr.mxu0 0.0
      %689 = vmatpush1.msra.mxu0 0.0
      %690 = vmatprep.subr.mxu0 0.0
      %691 = vmatpush1.msra.mxu0 %v665
      %692 = vmatprep.subr.mxu0 0.0
      %693 = vmatpush1.msra.mxu0 %v664
      %694 = vmatprep.subr.mxu0 0.0
      %695 = vmatpush1.msra.mxu0 %v663
      %696 = vmatprep.subr.mxu0 0.0
      %697 = vmatpush1.msra.mxu0 %v662
      %698 = vmatprep.subr.mxu0 0.0
      %699 = vmatpush1.msra.mxu0 %v661
      %700 = vmatprep.subr.mxu0 0.0
      %701 = vmatpush1.msra.mxu0 %v660
      %702 = vmatprep.subr.mxu0 0.0
      %703 = vmatpush1.msra.mxu0 %v659
      %704 = vmatprep.subr.mxu0 0.0
      %705 = vmatpush1.msra.mxu0 %v658
      %706 = vmatprep.subr.mxu0 0.0
      %707 = vmatpush2.msra.mxu0 0.0
      %708 = vmatprep.subr.mxu0 0.0
      %709 = vmatpush2.msra.mxu0 0.0
      %710 = vmatprep.subr.mxu0 0.0
      %711 = vmatpush2.msra.mxu0 0.0
      %712 = vmatprep.subr.mxu0 0.0
      %713 = vmatpush2.msra.mxu0 0.0
      %714 = vmatprep.subr.mxu0 0.0
      %715 = vmatpush2.msra.mxu0 0.0
      %716 = vmatprep.subr.mxu0 0.0
      %717 = vmatpush2.msra.mxu0 0.0
      %718 = vmatprep.subr.mxu0 0.0
      %719 = vmatpush2.msra.mxu0 0.0
      %720 = vmatprep.subr.mxu0 0.0
      %721 = vmatpush2.msra.mxu0 0.0
      %722 = vmatprep.subr.mxu0 0.0
      %723 = vmatpush2.msra.mxu0 0.0
      %724 = vmatprep.subr.mxu0 0.0
      %725 = vmatpush2.msra.mxu0 0.0
      %726 = vmatprep.subr.mxu0 0.0
      %727 = vmatpush2.msra.mxu0 0.0
      %728 = vmatprep.subr.mxu0 0.0
      %729 = vmatpush2.msra.mxu0 0.0
      %730 = vmatprep.subr.mxu0 0.0
      %731 = vmatpush2.msra.mxu0 0.0
      %732 = vmatprep.subr.mxu0 0.0
      %733 = vmatpush2.msra.mxu0 0.0
      %734 = vmatprep.subr.mxu0 0.0
      %735 = vmatpush2.msra.mxu0 0.0
      %736 = vmatprep.subr.mxu0 0.0
      %737 = vmatpush2.msra.mxu0 0.0
      %738 = vmatprep.mubr.f32.mxu0 0.0
      %739 = vmatmul.mubr.f32.gmra.mxu0 %v670
      %v740 = vpop.f32.mrf.mxu0
      %v741 = vadd.f32 0.0, %v740
      %v742 = vpop.f32.mrf.mxu0
      %743 = vmatprep.mubr.f32.mxu0 0.0
      %744 = vmatmul.mubr.f32.gmra.mxu0 %v672
      %v745 = vpop.f32.mrf.mxu0
      %v746 = vadd.f32 0.0, %v745
      %v747 = vpop.f32.mrf.mxu0
      %748 = vdwg.mxu0
      %v749 = vadd.f32 %v655, %v741
      %v750 = vadd.f32 %v656, %v746
      %s751 = scalar_lea.vmem %s1, 320
      %v752 = vld [vmem:[%s751] sm:$0xff]
      %v753 = vld [vmem:[%s751 + $0x8] sm:$0xff]
      %v754 = vld [vmem:[%s751 + $0x10] sm:$0xff]
      %v755 = vld [vmem:[%s751 + $0x18] sm:$0xff]
      %v756 = vld [vmem:[%s751 + $0x20] sm:$0xff]
      %v757 = vld [vmem:[%s751 + $0x28] sm:$0xff]
      %v758 = vld [vmem:[%s751 + $0x30] sm:$0xff]
      %v759 = vld [vmem:[%s751 + $0x38] sm:$0xff]
      %760 = vrot.lane.b32.xlu0 %v573, 120
      %v761 = vpop.permute.xlu0 %760
      %762 = vrot.lane.b32.xlu0 %v575, 120
      %v763 = vpop.permute.xlu0 %762
      %v764 = vsel %vm307, %v761, 0
      %v766 = vsel %vm307, %v763, 0
      %768 = vmatprep.subr.mxu0 0.0
      %769 = vmatpush1.msra.mxu0 0.0
      %770 = vmatprep.subr.mxu0 0.0
      %771 = vmatpush1.msra.mxu0 0.0
      %772 = vmatprep.subr.mxu0 0.0
      %773 = vmatpush1.msra.mxu0 0.0
      %774 = vmatprep.subr.mxu0 0.0
      %775 = vmatpush1.msra.mxu0 0.0
      %776 = vmatprep.subr.mxu0 0.0
      %777 = vmatpush1.msra.mxu0 0.0
      %778 = vmatprep.subr.mxu0 0.0
      %779 = vmatpush1.msra.mxu0 0.0
      %780 = vmatprep.subr.mxu0 0.0
      %781 = vmatpush1.msra.mxu0 0.0
      %782 = vmatprep.subr.mxu0 0.0
      %783 = vmatpush1.msra.mxu0 0.0
      %784 = vmatprep.subr.mxu0 0.0
      %785 = vmatpush1.msra.mxu0 %v759
      %786 = vmatprep.subr.mxu0 0.0
      %787 = vmatpush1.msra.mxu0 %v758
      %788 = vmatprep.subr.mxu0 0.0
      %789 = vmatpush1.msra.mxu0 %v757
      %790 = vmatprep.subr.mxu0 0.0
      %791 = vmatpush1.msra.mxu0 %v756
      %792 = vmatprep.subr.mxu0 0.0
      %793 = vmatpush1.msra.mxu0 %v755
      %794 = vmatprep.subr.mxu0 0.0
      %795 = vmatpush1.msra.mxu0 %v754
      %796 = vmatprep.subr.mxu0 0.0
      %797 = vmatpush1.msra.mxu0 %v753
      %798 = vmatprep.subr.mxu0 0.0
      %799 = vmatpush1.msra.mxu0 %v752
      %800 = vmatprep.subr.mxu0 0.0
      %801 = vmatpush2.msra.mxu0 0.0
      %802 = vmatprep.subr.mxu0 0.0
      %803 = vmatpush2.msra.mxu0 0.0
      %804 = vmatprep.subr.mxu0 0.0
      %805 = vmatpush2.msra.mxu0 0.0
      %806 = vmatprep.subr.mxu0 0.0
      %807 = vmatpush2.msra.mxu0 0.0
      %808 = vmatprep.subr.mxu0 0.0
      %809 = vmatpush2.msra.mxu0 0.0
      %810 = vmatprep.subr.mxu0 0.0
      %811 = vmatpush2.msra.mxu0 0.0
      %812 = vmatprep.subr.mxu0 0.0
      %813 = vmatpush2.msra.mxu0 0.0
      %814 = vmatprep.subr.mxu0 0.0
      %815 = vmatpush2.msra.mxu0 0.0
      %816 = vmatprep.subr.mxu0 0.0
      %817 = vmatpush2.msra.mxu0 0.0
      %818 = vmatprep.subr.mxu0 0.0
      %819 = vmatpush2.msra.mxu0 0.0
      %820 = vmatprep.subr.mxu0 0.0
      %821 = vmatpush2.msra.mxu0 0.0
      %822 = vmatprep.subr.mxu0 0.0
      %823 = vmatpush2.msra.mxu0 0.0
      %824 = vmatprep.subr.mxu0 0.0
      %825 = vmatpush2.msra.mxu0 0.0
      %826 = vmatprep.subr.mxu0 0.0
      %827 = vmatpush2.msra.mxu0 0.0
      %828 = vmatprep.subr.mxu0 0.0
      %829 = vmatpush2.msra.mxu0 0.0
      %830 = vmatprep.subr.mxu0 0.0
      %831 = vmatpush2.msra.mxu0 0.0
      %832 = vmatprep.mubr.f32.mxu0 0.0
      %833 = vmatmul.mubr.f32.gmra.mxu0 %v764
      %v834 = vpop.f32.mrf.mxu0
      %v835 = vadd.f32 0.0, %v834
      %v836 = vpop.f32.mrf.mxu0
      %837 = vmatprep.mubr.f32.mxu0 0.0
      %838 = vmatmul.mubr.f32.gmra.mxu0 %v766
      %v839 = vpop.f32.mrf.mxu0
      %v840 = vadd.f32 0.0, %v839
      %v841 = vpop.f32.mrf.mxu0
      %842 = vdwg.mxu0
      %v843 = vadd.f32 %v749, %v835
      %v844 = vadd.f32 %v750, %v840
      %s845 = scalar_lea.vmem %s1, 384
      %v846 = vld [vmem:[%s845] sm:$0xff]
      %v847 = vld [vmem:[%s845 + $0x8] sm:$0xff]
      %v848 = vld [vmem:[%s845 + $0x10] sm:$0xff]
      %v849 = vld [vmem:[%s845 + $0x18] sm:$0xff]
      %v850 = vld [vmem:[%s845 + $0x20] sm:$0xff]
      %v851 = vld [vmem:[%s845 + $0x28] sm:$0xff]
      %v852 = vld [vmem:[%s845 + $0x30] sm:$0xff]
      %v853 = vld [vmem:[%s845 + $0x38] sm:$0xff]
      %vm854 = vcmask 1045504
      %v855 = vrot.slane %v283, 2
      %v856 = vrot.slane %v280, 2
      %v857 = vsel %vm854, %v855, %v856
      %v858 = vrot.slane %v284, 2
      %v859 = vsel %vm854, %v856, %v858
      %v860 = vsel %vm307, %v857, 0
      %v862 = vsel %vm307, %v859, 0
      %864 = vmatprep.subr.mxu0 0.0
      %865 = vmatpush1.msra.mxu0 0.0
      %866 = vmatprep.subr.mxu0 0.0
      %867 = vmatpush1.msra.mxu0 0.0
      %868 = vmatprep.subr.mxu0 0.0
      %869 = vmatpush1.msra.mxu0 0.0
      %870 = vmatprep.subr.mxu0 0.0
      %871 = vmatpush1.msra.mxu0 0.0
      %872 = vmatprep.subr.mxu0 0.0
      %873 = vmatpush1.msra.mxu0 0.0
      %874 = vmatprep.subr.mxu0 0.0
      %875 = vmatpush1.msra.mxu0 0.0
      %876 = vmatprep.subr.mxu0 0.0
      %877 = vmatpush1.msra.mxu0 0.0
      %878 = vmatprep.subr.mxu0 0.0
      %879 = vmatpush1.msra.mxu0 0.0
      %880 = vmatprep.subr.mxu0 0.0
      %881 = vmatpush1.msra.mxu0 %v853
      %882 = vmatprep.subr.mxu0 0.0
      %883 = vmatpush1.msra.mxu0 %v852
      %884 = vmatprep.subr.mxu0 0.0
      %885 = vmatpush1.msra.mxu0 %v851
      %886 = vmatprep.subr.mxu0 0.0
      %887 = vmatpush1.msra.mxu0 %v850
      %888 = vmatprep.subr.mxu0 0.0
      %889 = vmatpush1.msra.mxu0 %v849
      %890 = vmatprep.subr.mxu0 0.0
      %891 = vmatpush1.msra.mxu0 %v848
      %892 = vmatprep.subr.mxu0 0.0
      %893 = vmatpush1.msra.mxu0 %v847
      %894 = vmatprep.subr.mxu0 0.0
      %895 = vmatpush1.msra.mxu0 %v846
      %896 = vmatprep.subr.mxu0 0.0
      %897 = vmatpush2.msra.mxu0 0.0
      %898 = vmatprep.subr.mxu0 0.0
      %899 = vmatpush2.msra.mxu0 0.0
      %900 = vmatprep.subr.mxu0 0.0
      %901 = vmatpush2.msra.mxu0 0.0
      %902 = vmatprep.subr.mxu0 0.0
      %903 = vmatpush2.msra.mxu0 0.0
      %904 = vmatprep.subr.mxu0 0.0
      %905 = vmatpush2.msra.mxu0 0.0
      %906 = vmatprep.subr.mxu0 0.0
      %907 = vmatpush2.msra.mxu0 0.0
      %908 = vmatprep.subr.mxu0 0.0
      %909 = vmatpush2.msra.mxu0 0.0
      %910 = vmatprep.subr.mxu0 0.0
      %911 = vmatpush2.msra.mxu0 0.0
      %912 = vmatprep.subr.mxu0 0.0
      %913 = vmatpush2.msra.mxu0 0.0
      %914 = vmatprep.subr.mxu0 0.0
      %915 = vmatpush2.msra.mxu0 0.0
      %916 = vmatprep.subr.mxu0 0.0
      %917 = vmatpush2.msra.mxu0 0.0
      %918 = vmatprep.subr.mxu0 0.0
      %919 = vmatpush2.msra.mxu0 0.0
      %920 = vmatprep.subr.mxu0 0.0
      %921 = vmatpush2.msra.mxu0 0.0
      %922 = vmatprep.subr.mxu0 0.0
      %923 = vmatpush2.msra.mxu0 0.0
      %924 = vmatprep.subr.mxu0 0.0
      %925 = vmatpush2.msra.mxu0 0.0
      %926 = vmatprep.subr.mxu0 0.0
      %927 = vmatpush2.msra.mxu0 0.0
      %928 = vmatprep.mubr.f32.mxu0 0.0
      %929 = vmatmul.mubr.f32.gmra.mxu0 %v860
      %v930 = vpop.f32.mrf.mxu0
      %v931 = vadd.f32 0.0, %v930
      %v932 = vpop.f32.mrf.mxu0
      %933 = vmatprep.mubr.f32.mxu0 0.0
      %934 = vmatmul.mubr.f32.gmra.mxu0 %v862
      %v935 = vpop.f32.mrf.mxu0
      %v936 = vadd.f32 0.0, %v935
      %v937 = vpop.f32.mrf.mxu0
      %938 = vdwg.mxu0
      %v939 = vadd.f32 %v843, %v931
      %v940 = vadd.f32 %v844, %v936
      %s941 = scalar_lea.vmem %s1, 448
      %v942 = vld [vmem:[%s941] sm:$0xff]
      %v943 = vld [vmem:[%s941 + $0x8] sm:$0xff]
      %v944 = vld [vmem:[%s941 + $0x10] sm:$0xff]
      %v945 = vld [vmem:[%s941 + $0x18] sm:$0xff]
      %v946 = vld [vmem:[%s941 + $0x20] sm:$0xff]
      %v947 = vld [vmem:[%s941 + $0x28] sm:$0xff]
      %v948 = vld [vmem:[%s941 + $0x30] sm:$0xff]
      %v949 = vld [vmem:[%s941 + $0x38] sm:$0xff]
      %950 = vrot.lane.b32.xlu0 %v857, 124
      %v951 = vpop.permute.xlu0 %950
      %952 = vrot.lane.b32.xlu0 %v859, 124
      %v953 = vpop.permute.xlu0 %952
      %v954 = vsel %vm307, %v951, 0
      %v956 = vsel %vm307, %v953, 0
      %958 = vmatprep.subr.mxu0 0.0
      %959 = vmatpush1.msra.mxu0 0.0
      %960 = vmatprep.subr.mxu0 0.0
      %961 = vmatpush1.msra.mxu0 0.0
      %962 = vmatprep.subr.mxu0 0.0
      %963 = vmatpush1.msra.mxu0 0.0
      %964 = vmatprep.subr.mxu0 0.0
      %965 = vmatpush1.msra.mxu0 0.0
      %966 = vmatprep.subr.mxu0 0.0
      %967 = vmatpush1.msra.mxu0 0.0
      %968 = vmatprep.subr.mxu0 0.0
      %969 = vmatpush1.msra.mxu0 0.0
      %970 = vmatprep.subr.mxu0 0.0
      %971 = vmatpush1.msra.mxu0 0.0
      %972 = vmatprep.subr.mxu0 0.0
      %973 = vmatpush1.msra.mxu0 0.0
      %974 = vmatprep.subr.mxu0 0.0
      %975 = vmatpush1.msra.mxu0 %v949
      %976 = vmatprep.subr.mxu0 0.0
      %977 = vmatpush1.msra.mxu0 %v948
      %978 = vmatprep.subr.mxu0 0.0
      %979 = vmatpush1.msra.mxu0 %v947
      %980 = vmatprep.subr.mxu0 0.0
      %981 = vmatpush1.msra.mxu0 %v946
      %982 = vmatprep.subr.mxu0 0.0
      %983 = vmatpush1.msra.mxu0 %v945
      %984 = vmatprep.subr.mxu0 0.0
      %985 = vmatpush1.msra.mxu0 %v944
      %986 = vmatprep.subr.mxu0 0.0
      %987 = vmatpush1.msra.mxu0 %v943
      %988 = vmatprep.subr.mxu0 0.0
      %989 = vmatpush1.msra.mxu0 %v942
      %990 = vmatprep.subr.mxu0 0.0
      %991 = vmatpush2.msra.mxu0 0.0
      %992 = vmatprep.subr.mxu0 0.0
      %993 = vmatpush2.msra.mxu0 0.0
      %994 = vmatprep.subr.mxu0 0.0
      %995 = vmatpush2.msra.mxu0 0.0
      %996 = vmatprep.subr.mxu0 0.0
      %997 = vmatpush2.msra.mxu0 0.0
      %998 = vmatprep.subr.mxu0 0.0
      %999 = vmatpush2.msra.mxu0 0.0
      %1000 = vmatprep.subr.mxu0 0.0
      %1001 = vmatpush2.msra.mxu0 0.0
      %1002 = vmatprep.subr.mxu0 0.0
      %1003 = vmatpush2.msra.mxu0 0.0
      %1004 = vmatprep.subr.mxu0 0.0
      %1005 = vmatpush2.msra.mxu0 0.0
      %1006 = vmatprep.subr.mxu0 0.0
      %1007 = vmatpush2.msra.mxu0 0.0
      %1008 = vmatprep.subr.mxu0 0.0
      %1009 = vmatpush2.msra.mxu0 0.0
      %1010 = vmatprep.subr.mxu0 0.0
      %1011 = vmatpush2.msra.mxu0 0.0
      %1012 = vmatprep.subr.mxu0 0.0
      %1013 = vmatpush2.msra.mxu0 0.0
      %1014 = vmatprep.subr.mxu0 0.0
      %1015 = vmatpush2.msra.mxu0 0.0
      %1016 = vmatprep.subr.mxu0 0.0
      %1017 = vmatpush2.msra.mxu0 0.0
      %1018 = vmatprep.subr.mxu0 0.0
      %1019 = vmatpush2.msra.mxu0 0.0
      %1020 = vmatprep.subr.mxu0 0.0
      %1021 = vmatpush2.msra.mxu0 0.0
      %1022 = vmatprep.mubr.f32.mxu0 0.0
      %1023 = vmatmul.mubr.f32.gmra.mxu0 %v954
      %v1024 = vpop.f32.mrf.mxu0
      %v1025 = vadd.f32 0.0, %v1024
      %v1026 = vpop.f32.mrf.mxu0
      %1027 = vmatprep.mubr.f32.mxu0 0.0
      %1028 = vmatmul.mubr.f32.gmra.mxu0 %v956
      %v1029 = vpop.f32.mrf.mxu0
      %v1030 = vadd.f32 0.0, %v1029
      %v1031 = vpop.f32.mrf.mxu0
      %1032 = vdwg.mxu0
      %v1033 = vadd.f32 %v939, %v1025
      %v1034 = vadd.f32 %v940, %v1030
      %s1035 = scalar_lea.vmem %s1, 512
      %v1036 = vld [vmem:[%s1035] sm:$0xff]
      %v1037 = vld [vmem:[%s1035 + $0x8] sm:$0xff]
      %v1038 = vld [vmem:[%s1035 + $0x10] sm:$0xff]
      %v1039 = vld [vmem:[%s1035 + $0x18] sm:$0xff]
      %v1040 = vld [vmem:[%s1035 + $0x20] sm:$0xff]
      %v1041 = vld [vmem:[%s1035 + $0x28] sm:$0xff]
      %v1042 = vld [vmem:[%s1035 + $0x30] sm:$0xff]
      %v1043 = vld [vmem:[%s1035 + $0x38] sm:$0xff]
      %1044 = vrot.lane.b32.xlu0 %v857, 120
      %v1045 = vpop.permute.xlu0 %1044
      %1046 = vrot.lane.b32.xlu0 %v859, 120
      %v1047 = vpop.permute.xlu0 %1046
      %v1048 = vsel %vm307, %v1045, 0
      %v1050 = vsel %vm307, %v1047, 0
      %1052 = vmatprep.subr.mxu0 0.0
      %1053 = vmatpush1.msra.mxu0 0.0
      %1054 = vmatprep.subr.mxu0 0.0
      %1055 = vmatpush1.msra.mxu0 0.0
      %1056 = vmatprep.subr.mxu0 0.0
      %1057 = vmatpush1.msra.mxu0 0.0
      %1058 = vmatprep.subr.mxu0 0.0
      %1059 = vmatpush1.msra.mxu0 0.0
      %1060 = vmatprep.subr.mxu0 0.0
      %1061 = vmatpush1.msra.mxu0 0.0
      %1062 = vmatprep.subr.mxu0 0.0
      %1063 = vmatpush1.msra.mxu0 0.0
      %1064 = vmatprep.subr.mxu0 0.0
      %1065 = vmatpush1.msra.mxu0 0.0
      %1066 = vmatprep.subr.mxu0 0.0
      %1067 = vmatpush1.msra.mxu0 0.0
      %1068 = vmatprep.subr.mxu0 0.0
      %1069 = vmatpush1.msra.mxu0 %v1043
      %1070 = vmatprep.subr.mxu0 0.0
      %1071 = vmatpush1.msra.mxu0 %v1042
      %1072 = vmatprep.subr.mxu0 0.0
      %1073 = vmatpush1.msra.mxu0 %v1041
      %1074 = vmatprep.subr.mxu0 0.0
      %1075 = vmatpush1.msra.mxu0 %v1040
      %1076 = vmatprep.subr.mxu0 0.0
      %1077 = vmatpush1.msra.mxu0 %v1039
      %1078 = vmatprep.subr.mxu0 0.0
      %1079 = vmatpush1.msra.mxu0 %v1038
      %1080 = vmatprep.subr.mxu0 0.0
      %1081 = vmatpush1.msra.mxu0 %v1037
      %1082 = vmatprep.subr.mxu0 0.0
      %1083 = vmatpush1.msra.mxu0 %v1036
      %1084 = vmatprep.subr.mxu0 0.0
      %1085 = vmatpush2.msra.mxu0 0.0
      %1086 = vmatprep.subr.mxu0 0.0
      %1087 = vmatpush2.msra.mxu0 0.0
      %1088 = vmatprep.subr.mxu0 0.0
      %1089 = vmatpush2.msra.mxu0 0.0
      %1090 = vmatprep.subr.mxu0 0.0
      %1091 = vmatpush2.msra.mxu0 0.0
      %1092 = vmatprep.subr.mxu0 0.0
      %1093 = vmatpush2.msra.mxu0 0.0
      %1094 = vmatprep.subr.mxu0 0.0
      %1095 = vmatpush2.msra.mxu0 0.0
      %1096 = vmatprep.subr.mxu0 0.0
      %1097 = vmatpush2.msra.mxu0 0.0
      %1098 = vmatprep.subr.mxu0 0.0
      %1099 = vmatpush2.msra.mxu0 0.0
      %1100 = vmatprep.subr.mxu0 0.0
      %1101 = vmatpush2.msra.mxu0 0.0
      %1102 = vmatprep.subr.mxu0 0.0
      %1103 = vmatpush2.msra.mxu0 0.0
      %1104 = vmatprep.subr.mxu0 0.0
      %1105 = vmatpush2.msra.mxu0 0.0
      %1106 = vmatprep.subr.mxu0 0.0
      %1107 = vmatpush2.msra.mxu0 0.0
      %1108 = vmatprep.subr.mxu0 0.0
      %1109 = vmatpush2.msra.mxu0 0.0
      %1110 = vmatprep.subr.mxu0 0.0
      %1111 = vmatpush2.msra.mxu0 0.0
      %1112 = vmatprep.subr.mxu0 0.0
      %1113 = vmatpush2.msra.mxu0 0.0
      %1114 = vmatprep.subr.mxu0 0.0
      %1115 = vmatpush2.msra.mxu0 0.0
      %1116 = vmatprep.mubr.f32.mxu0 0.0
      %1117 = vmatmul.mubr.f32.gmra.mxu0 %v1048
      %v1118 = vpop.f32.mrf.mxu0
      %v1119 = vadd.f32 0.0, %v1118
      %v1120 = vpop.f32.mrf.mxu0
      %1121 = vmatprep.mubr.f32.mxu0 0.0
      %1122 = vmatmul.mubr.f32.gmra.mxu0 %v1050
      %v1123 = vpop.f32.mrf.mxu0
      %v1124 = vadd.f32 0.0, %v1123
      %v1125 = vpop.f32.mrf.mxu0
      %1126 = vdwg.mxu0
      %v1127 = vadd.f32 %v1033, %v1119
      %v1128 = vadd.f32 %v1034, %v1124
      %v1129 = vsel %vm307, %v1127, 0.0
      %v1130 = vsel %vm307, %v1128, 0.0
      %v1131 = vadd.f32 %v1129, %v1130
      %v1132 = vrot.slane %v1131, 4
      %v1133 = vadd.f32 %v1131, %v1132
      %v1134 = vrot.slane %v1133, 2
      %v1135 = vadd.f32 %v1133, %v1134
      %v1136 = vrot.slane %v1135, 1
      %v1137 = vadd.f32 %v1135, %v1136
      %v1138 = vmul.f32 %v1127, %v1127
      %v1139 = vmul.f32 %v1128, %v1128
      %v1140 = vsel %vm307, %v1138, 0.0
      %v1141 = vsel %vm307, %v1139, 0.0
      %v1142 = vadd.f32 %v1140, %v1141
      %v1143 = vrot.slane %v1142, 4
      %v1144 = vadd.f32 %v1142, %v1143
      %v1145 = vrot.slane %v1144, 2
      %v1146 = vadd.f32 %v1144, %v1145
      %v1147 = vrot.slane %v1146, 1
      %v1148 = vadd.f32 %v1146, %v1147
      %v1149 = vsel %vm277, %v1137, %v1148
      %vm1150 = vcmask 517120
      %1151 = vst.msk [vmem:[%s238] sm:$0x3] %vm1150, %v1149
      %1152 = vst.msk [vmem:[%s233] sm:$0xff] %vm307, %v1127
      %1153 = vst.msk [vmem:[%s233 + $0x8] sm:$0xff] %vm307, %v1128
      %s1154 = smul.u32 2, %s17
      %p1155 = scmp.lt.s32.totalorder %s1154, 3
      %s1156 = scalar_select %p1155, %s1154, 3
      %s1157 = smul.addr %s1156, 8
      %s1158 = scalar_lea.vmem %s4, %s1157
      %p1159 = scmp.lt.s32.totalorder %s17, 1
      %s1160 = scalar_select %p1159, %s17, 1
      %s1161 = smul.addr %s1160, 2
      %s1162 = scalar_lea.vmem %s5, %s1161
      // Predicated region
      $region37: #{basic_block_forward.4} parent=35 // pred_check
        %p1163 = pneg %p124
      $region38: #{basic_block_forward.4} parent=35 // pred_check_branch
        %1165 = sbr.rel (%p1163) target = $region40
      $region39: #{basic_block_forward.4} parent=35 // pred_region
        %s1166 = smul.u32 2, %s17
      $region40: #{basic_block_forward.4} parent=35 // pred_fallthru
        _
      // Predicated region
      $region41: #{basic_block_forward.4} parent=35 // pred_check
        %p1167 = pneg %p150
      $region42: #{basic_block_forward.4} parent=35 // pred_check_branch
        %1169 = sbr.rel (%p1167) target = $region44
      $region43: #{basic_block_forward.4} parent=35 // pred_region
        _
      $region44: #{basic_block_forward.4} parent=35 // pred_fallthru
        _
    $region36: #{basic_block_forward.4} parent=5 // pred_fallthru
      _
    %p1170 = scmp.le.s32.totalorder 2, %s12
    // Predicated region
    $region45: #{basic_block_forward.4} parent=5 // pred_check
      %p1171 = pneg %p1170
    $region46: #{basic_block_forward.4} parent=5 // pred_check_branch
      %1173 = sbr.rel (%p1171) target = $region48
    $region47: #{basic_block_forward.4} parent=5 // pred_region
      %s1174 = ssub.s32 %s12, 2
      // Predicated region
      $region49: #{basic_block_forward.4} parent=47 // pred_check
        %p1175 = pneg %p130
      $region50: #{basic_block_forward.4} parent=47 // pred_check_branch
        %1177 = sbr.rel (%p1175) target = $region52
      $region51: #{basic_block_forward.4} parent=47 // pred_region
        %s1178 = smul.u32 2, %s18
        %p1179 = scmp.lt.s32.totalorder %s1178, 3
        %s1180 = scalar_select %p1179, %s1178, 3
        %s1181 = smul.addr %s1180, 8
        %s1182 = scalar_lea.vmem %s4, %s1181
      $region52: #{basic_block_forward.4} parent=47 // pred_fallthru
        _
      // Predicated region
      $region53: #{basic_block_forward.4} parent=47 // pred_check
        %p1183 = pneg %p156
      $region54: #{basic_block_forward.4} parent=47 // pred_check_branch
        %1185 = sbr.rel (%p1183) target = $region56
      $region55: #{basic_block_forward.4} parent=47 // pred_region
        %p1186 = scmp.lt.s32.totalorder %s18, 1
        %s1187 = scalar_select %p1186, %s18, 1
        %s1188 = smul.addr %s1187, 2
        %s1189 = scalar_lea.vmem %s5, %s1188
      $region56: #{basic_block_forward.4} parent=47 // pred_fallthru
        _
    $region48: #{basic_block_forward.4} parent=5 // pred_fallthru
      _
  $region6: #{basic_block_forward.4} parent=0 // loop_footer
    %s16 = sadd.s32 1, %s12
  $region7: #{basic_block_forward.4} parent=0 // loop_footer_branch
    %11 = sbr.rel target = $region3
  $region8: #{basic_block_forward.4} parent=0 // loop_exit
    _

// kernel: basic_block_forward.5
$region0: #{basic_block_forward.5}
  #allocation0 [shape = 'u32[]', space=smem, size = 0x4, offset = 0x4, fixed_abs, tag = 'smem constant byte address 0x4 - core index']
  #allocation1 [shape = 'u32[144,128]{1,0:T(1,128)}', space=vmem, size = 0x12000, scoped, tag = 'internal scratch']
  %s0 = inlined_call_operand.vmem [shape: f32[32,64], index: 0, kind: input, shape index: {}]
  %s1 = inlined_call_operand.vmem [shape: f32[32,64], index: 1, kind: input, shape index: {}]
  %s2 = inlined_call_operand.vmem [shape: f32[1,64], index: 2, kind: input, shape index: {}]
  %s3 = inlined_call_operand.vmem [shape: f32[1,64], index: 3, kind: input, shape index: {}]
  %s4 = inlined_call_operand.vmem [shape: f32[32,64], index: 4, kind: output, shape index: {}]
  %s5 = sld [smem:[#allocation0]]
  $region49: #{basic_block_forward.5} parent=0
    _
  %s7 = ssub.s32 1, %s5
  %s8 = scalar_select 0, %s7, %s5
  loop: start=0, step=1, limit=4
  $region2: #{basic_block_forward.5} parent=0 // loop_pre_header
    _
  $region3: #{basic_block_forward.5} parent=0 // loop_header
    %s10 = sphi 0, %s14
    %p11 = scmp.ge.s32.totalorder %s10, 4
    %s20 = sphi 0, %s22
    %s23 = sphi 0, %s20
    %s24 = sphi 0, %s23
    %s40 = sphi 0, %s24
    %s46 = sphi 0, %s48
    %s49 = sphi 0, %s46
    %s50 = sphi 0, %s49
    %s66 = sphi 0, %s50
    %s70 = sphi 0, %s70
    %s72 = sphi 0, %s70
    %s73 = sphi 0, %s72
    %s87 = sphi 0, %s73
    %s91 = sphi 0, %s91
    %s93 = sphi 0, %s91
    %s94 = sphi 0, %s93
    %s108 = sphi 0, %s94
    %s114 = sphi 0, %s116
    %s117 = sphi 0, %s114
    %s118 = sphi 0, %s117
    %s134 = sphi 0, %s118
  $region4: #{basic_block_forward.5} parent=0 // loop_header_branch
    %13 = sbr.rel (%p11) target = $region8
  $region5: #{basic_block_forward.5} parent=0 // loop_body
    %s15 = ssub.s32 %s10, 1
    %s16 = ssub.s32 %s10, 2
    %s17 = sadd.s32 %s10, 1
    %s18 = ssub.s32 %s10, %s17
    %p19 = scmp.eq.s32.totalorder %s18, 0
    %s21 = sadd.s32 %s20, 1
    %s22 = scalar_select %p19, %s20, %s21
    %p25 = pneg %p19
    %p26 = scmp.eq.s32.totalorder %s10, 1
    %p27 = por %p25, %p26
    %p28 = scmp.ne.s32.totalorder %s20, %s23
    %p29 = scmp.eq.s32.totalorder %s10, 0
    %p30 = por %p28, %p29
    %p31 = scmp.ne.s32.totalorder %s20, %s23
    %p32 = scmp.eq.s32.totalorder %s15, 1
    %p33 = por %p31, %p32
    %p34 = scmp.ne.s32.totalorder %s23, %s24
    %p35 = scmp.eq.s32.totalorder %s15, 0
    %p36 = por %p34, %p35
    %p37 = scmp.ne.s32.totalorder %s23, %s24
    %p38 = scmp.eq.s32.totalorder %s16, 1
    %p39 = por %p37, %p38
    %p41 = scmp.ne.s32.totalorder %s24, %s40
    %p42 = scmp.eq.s32.totalorder %s16, 0
    %p43 = por %p41, %p42
    %s44 = ssub.s32 %s10, %s17
    %p45 = scmp.eq.s32.totalorder %s44, 0
    %s47 = sadd.s32 %s46, 1
    %s48 = scalar_select %p45, %s46, %s47
    %p51 = pneg %p45
    %p52 = scmp.eq.s32.totalorder %s10, 1
    %p53 = por %p51, %p52
    %p54 = scmp.ne.s32.totalorder %s46, %s49
    %p55 = scmp.eq.s32.totalorder %s10, 0
    %p56 = por %p54, %p55
    %p57 = scmp.ne.s32.totalorder %s46, %s49
    %p58 = scmp.eq.s32.totalorder %s15, 1
    %p59 = por %p57, %p58
    %p60 = scmp.ne.s32.totalorder %s49, %s50
    %p61 = scmp.eq.s32.totalorder %s15, 0
    %p62 = por %p60, %p61
    %p63 = scmp.ne.s32.totalorder %s49, %s50
    %p64 = scmp.eq.s32.totalorder %s16, 1
    %p65 = por %p63, %p64
    %p67 = scmp.ne.s32.totalorder %s50, %s66
    %p68 = scmp.eq.s32.totalorder %s16, 0
    %p69 = por %p67, %p68
    %s71 = sadd.s32 %s70, 1
    %p74 = scmp.eq.s32.totalorder %s10, 1
    %p75 = scmp.ne.s32.totalorder %s70, %s72
    %p76 = scmp.eq.s32.totalorder %s10, 0
    %p77 = por %p75, %p76
    %p78 = scmp.ne.s32.totalorder %s70, %s72
    %p79 = scmp.eq.s32.totalorder %s15, 1
    %p80 = por %p78, %p79
    %p81 = scmp.ne.s32.totalorder %s72, %s73
    %p82 = scmp.eq.s32.totalorder %s15, 0
    %p83 = por %p81, %p82
    %p84 = scmp.ne.s32.totalorder %s72, %s73
    %p85 = scmp.eq.s32.totalorder %s16, 1
    %p86 = por %p84, %p85
    %p88 = scmp.ne.s32.totalorder %s73, %s87
    %p89 = scmp.eq.s32.totalorder %s16, 0
    %p90 = por %p88, %p89
    %s92 = sadd.s32 %s91, 1
    %p95 = scmp.eq.s32.totalorder %s10, 1
    %p96 = scmp.ne.s32.totalorder %s91, %s93
    %p97 = scmp.eq.s32.totalorder %s10, 0
    %p98 = por %p96, %p97
    %p99 = scmp.ne.s32.totalorder %s91, %s93
    %p100 = scmp.eq.s32.totalorder %s15, 1
    %p101 = por %p99, %p100
    %p102 = scmp.ne.s32.totalorder %s93, %s94
    %p103 = scmp.eq.s32.totalorder %s15, 0
    %p104 = por %p102, %p103
    %p105 = scmp.ne.s32.totalorder %s93, %s94
    %p106 = scmp.eq.s32.totalorder %s16, 1
    %p107 = por %p105, %p106
    %p109 = scmp.ne.s32.totalorder %s94, %s108
    %p110 = scmp.eq.s32.totalorder %s16, 0
    %p111 = por %p109, %p110
    %s112 = ssub.s32 %s10, %s17
    %p113 = scmp.eq.s32.totalorder %s112, 0
    %s115 = sadd.s32 %s114, 1
    %s116 = scalar_select %p113, %s114, %s115
    %p119 = pneg %p113
    %p120 = scmp.eq.s32.totalorder %s10, 1
    %p121 = por %p119, %p120
    %p122 = scmp.ne.s32.totalorder %s114, %s117
    %p123 = scmp.eq.s32.totalorder %s10, 0
    %p124 = por %p122, %p123
    %p125 = scmp.ne.s32.totalorder %s114, %s117
    %p126 = scmp.eq.s32.totalorder %s15, 1
    %p127 = por %p125, %p126
    %p128 = scmp.ne.s32.totalorder %s117, %s118
    %p129 = scmp.eq.s32.totalorder %s15, 0
    %p130 = por %p128, %p129
    %p131 = scmp.ne.s32.totalorder %s117, %s118
    %p132 = scmp.eq.s32.totalorder %s16, 1
    %p133 = por %p131, %p132
    %p135 = scmp.ne.s32.totalorder %s118, %s134
    %p136 = scmp.eq.s32.totalorder %s16, 0
    %p137 = por %p135, %p136
    %p138 = scmp.le.s32.totalorder 1, %s10
    %p139 = scmp.lt.s32.totalorder %s10, 3
    %p140 = pnand %p138, %p139
    %p141 = pneg %p140
    // Predicated region
    $region9: #{basic_block_forward.5} parent=5 // pred_check
      _
    $region10: #{basic_block_forward.5} parent=5 // pred_check_branch
      %143 = sbr.rel (%p140) target = $region12
    $region11: #{basic_block_forward.5} parent=5 // pred_region
      %s144 = ssub.s32 %s10, 1
      // Predicated region
      $region13: #{basic_block_forward.5} parent=11 // pred_check
        %p145 = pneg %p83
      $region14: #{basic_block_forward.5} parent=11 // pred_check_branch
        %147 = sbr.rel (%p145) target = $region16
      $region15: #{basic_block_forward.5} parent=11 // pred_region
        _
      $region16: #{basic_block_forward.5} parent=11 // pred_fallthru
        _
      // Predicated region
      $region17: #{basic_block_forward.5} parent=11 // pred_check
        %p148 = pneg %p104
      $region18: #{basic_block_forward.5} parent=11 // pred_check_branch
        %150 = sbr.rel (%p148) target = $region20
      $region19: #{basic_block_forward.5} parent=11 // pred_region
        _
      $region20: #{basic_block_forward.5} parent=11 // pred_fallthru
        _
    $region12: #{basic_block_forward.5} parent=5 // pred_fallthru
      _
    %p151 = scmp.lt.s32.totalorder %s10, 2
    // Predicated region
    $region21: #{basic_block_forward.5} parent=5 // pred_check
      %p152 = pneg %p151
    $region22: #{basic_block_forward.5} parent=5 // pred_check_branch
      %154 = sbr.rel (%p152) target = $region24
    $region23: #{basic_block_forward.5} parent=5 // pred_region
      // Predicated region
      $region25: #{basic_block_forward.5} parent=23 // pred_check
        %p155 = pneg %p30
      $region26: #{basic_block_forward.5} parent=23 // pred_check_branch
        %157 = sbr.rel (%p155) target = $region28
      $region27: #{basic_block_forward.5} parent=23 // pred_region
        %s158 = smul.u32 2, %s10
        %p159 = scmp.lt.s32.totalorder %s158, 3
        %s160 = scalar_select %p159, %s158, 3
        %s161 = smul.addr %s160, 8
        %s162 = scalar_lea.vmem %s0, %s161
        %s163 = smul.u32 2, %s10
      $region28: #{basic_block_forward.5} parent=23 // pred_fallthru
        _
      // Predicated region
      $region29: #{basic_block_forward.5} parent=23 // pred_check
        %p164 = pneg %p56
      $region30: #{basic_block_forward.5} parent=23 // pred_check_branch
        %166 = sbr.rel (%p164) target = $region32
      $region31: #{basic_block_forward.5} parent=23 // pred_region
        %s167 = smul.u32 2, %s10
        %p168 = scmp.lt.s32.totalorder %s167, 3
        %s169 = scalar_select %p168, %s167, 3
        %s170 = smul.addr %s169, 8
        %s171 = scalar_lea.vmem %s1, %s170
        %s172 = smul.u32 2, %s10
      $region32: #{basic_block_forward.5} parent=23 // pred_fallthru
        _
    $region24: #{basic_block_forward.5} parent=5 // pred_fallthru
      _
    %p173 = scmp.le.s32.totalorder 1, %s10
    %p174 = scmp.lt.s32.totalorder %s10, 3
    %p175 = pnand %p173, %p174
    %p176 = pneg %p175
    // Predicated region
    $region33: #{basic_block_forward.5} parent=5 // pred_check
      _
    $region34: #{basic_block_forward.5} parent=5 // pred_check_branch
      %178 = sbr.rel (%p175) target = $region36
    $region35: #{basic_block_forward.5} parent=5 // pred_region
      %s179 = ssub.s32 %s10, 1
      %s180 = smul.u32 2, %s15
      %p181 = scmp.lt.s32.totalorder %s180, 3
      %s182 = scalar_select %p181, %s180, 3
      %s183 = smul.addr %s182, 8
      %s184 = scalar_lea.vmem %s0, %s183
      %p185 = pneg %p36
      %p186 = pneg %p33
      %s187 = smul.u32 2, %s15
      %p188 = scmp.lt.s32.totalorder %s187, 3
      %s189 = scalar_select %p188, %s187, 3
      %s190 = smul.addr %s189, 8
      %s191 = scalar_lea.vmem %s1, %s190
      %p192 = pneg %p62
      %p193 = pneg %p59
      %p194 = pneg %p83
      %p195 = pneg %p80
      %p196 = pneg %p104
      %p197 = pneg %p101
      %p198 = pneg %p130
      %p199 = pneg %p127
      %s200 = smul.u32 2, %s15
      %p201 = scmp.lt.s32.totalorder %s200, 3
      %s202 = scalar_select %p201, %s200, 3
      %s203 = smul.addr %s202, 8
      %s204 = scalar_lea.vmem %s4, %s203
      %s205 = smul.u32 2, %s15
      %p206 = scmp.lt.s32.totalorder %s205, 3
      %s207 = scalar_select %p206, %s205, 3
      %s208 = smul.addr %s207, 8
      %s209 = scalar_lea.vmem %s0, %s208
      %s210 = smul.u32 2, %s15
      %s211 = smul.u32 2, %s15
      %p212 = scmp.lt.s32.totalorder %s211, 3
      %s213 = scalar_select %p212, %s211, 3
      %s214 = smul.addr %s213, 8
      %s215 = scalar_lea.vmem %s1, %s214
      %s216 = smul.u32 2, %s15
      %s217 = smul.u32 2, %s15
      %p218 = scmp.lt.s32.totalorder %s217, 3
      %s219 = scalar_select %p218, %s217, 3
      %s220 = smul.addr %s219, 8
      %s221 = scalar_lea.vmem %s4, %s220
      %s222 = smul.u32 2, %s15
      %v223 = vld [vmem:[%s209] sm:$0xff]
      %v224 = vld [vmem:[%s209 + $0x8] sm:$0xff]
      %v225 = vld [vmem:[%s2] sm:$0x1]
      %v227 = vlaneseq
      %v228 = vshrl.u32 %v227, 7
      %v229 = vsub.s32 0, %v228
      %v230 = vrot.slane %v225, %v229
      %v232 = vmul.f32 %v223, %v230
      %v233 = vmul.f32 %v224, %v230
      %v234 = vld [vmem:[%s3] sm:$0x1]
      %v236 = vlaneseq
      %v237 = vshrl.u32 %v236, 7
      %v238 = vsub.s32 0, %v237
      %v239 = vrot.slane %v234, %v238
      %v241 = vadd.f32 %v232, %v239
      %v242 = vadd.f32 %v233, %v239
      %v243 = vld [vmem:[%s215] sm:$0xff]
      %v244 = vld [vmem:[%s215 + $0x8] sm:$0xff]
      %v245 = vadd.f32 %v241, %v243
      %v246 = vadd.f32 %v242, %v244
      %v247 = vmax.f32 %v245, 0.0
      %v248 = vmax.f32 %v246, 0.0
      %vm249 = vcmask 523264
      %250 = vst.msk [vmem:[%s221] sm:$0xff] %vm249, %v247
      %251 = vst.msk [vmem:[%s221 + $0x8] sm:$0xff] %vm249, %v248
      %s252 = smul.u32 2, %s15
      %p253 = scmp.lt.s32.totalorder %s252, 3
      %s254 = scalar_select %p253, %s252, 3
      %s255 = smul.addr %s254, 8
      %s256 = scalar_lea.vmem %s4, %s255
      // Predicated region
      $region37: #{basic_block_forward.5} parent=35 // pred_check
        %p257 = pneg %p127
      $region38: #{basic_block_forward.5} parent=35 // pred_check_branch
        %259 = sbr.rel (%p257) target = $region40
      $region39: #{basic_block_forward.5} parent=35 // pred_region
        %s260 = smul.u32 2, %s15
      $region40: #{basic_block_forward.5} parent=35 // pred_fallthru
        _
    $region36: #{basic_block_forward.5} parent=5 // pred_fallthru
      _
    %p261 = scmp.le.s32.totalorder 2, %s10
    // Predicated region
    $region41: #{basic_block_forward.5} parent=5 // pred_check
      %p262 = pneg %p261
    $region42: #{basic_block_forward.5} parent=5 // pred_check_branch
      %264 = sbr.rel (%p262) target = $region44
    $region43: #{basic_block_forward.5} parent=5 // pred_region
      %s265 = ssub.s32 %s10, 2
      // Predicated region
      $region45: #{basic_block_forward.5} parent=43 // pred_check
        %p266 = pneg %p133
      $region46: #{basic_block_forward.5} parent=43 // pred_check_branch
        %268 = sbr.rel (%p266) target = $region48
      $region47: #{basic_block_forward.5} parent=43 // pred_region
        %s269 = smul.u32 2, %s16
        %p270 = scmp.lt.s32.totalorder %s269, 3
        %s271 = scalar_select %p270, %s269, 3
        %s272 = smul.addr %s271, 8
        %s273 = scalar_lea.vmem %s4, %s272
      $region48: #{basic_block_forward.5} parent=43 // pred_fallthru
        _
    $region44: #{basic_block_forward.5} parent=5 // pred_fallthru
      _
  $region6: #{basic_block_forward.5} parent=0 // loop_footer
    %s14 = sadd.s32 1, %s10
  $region7: #{basic_block_forward.5} parent=0 // loop_footer_branch
    %9 = sbr.rel target = $region3
  $region8: #{basic_block_forward.5} parent=0 // loop_exit
    _

</llo_original>
